<compile_context>
chip_gen: v7x
topology: tpu7x:2x2x1
jax: 0.10.0
libtpu: 0.0.40
codegen_flags: <defaults>
</compile_context>

<pallas_src>
import functools

import jax
import jax.numpy as jnp
from jax.experimental import pallas as pl
from jax.experimental.pallas import tpu as pltpu


def _round_up(x, m):
    return (x + m - 1) // m * m


def _rows_per_chunk(H, W, target_rows=512):
    """Largest whole-image-row chunk (divides H) with <= target_rows rows."""
    ch = 1
    for c in range(1, H + 1):
        if H % c == 0 and c * W <= target_rows:
            ch = c
    return ch


def _vmem_limit_bytes(default=64 * 1024 * 1024):
    """7/8 of physical per-core VMEM (v5e/v6e: ~112 MiB, v7x: ~56 MiB)."""
    try:
        info_fn = getattr(pltpu, "get_tpu_info", None)
        cap = getattr(info_fn(), "vmem_capacity_bytes", None) if info_fn else None
    except Exception:
        cap = None
    if not cap:
        return default
    return int(cap) * 7 // 8


def _conv3x3x3_bias_elu_kernel(xm_ref, xc_ref, xp_ref, w_ref, b_ref, o_ref,
                               *, H, W, CH):
    """One output depth-plane: fused 3x3x3 conv + bias + ELU.

    xm/xc/xp_ref : (R, Cin) bf16   flattened zero-padded planes at depth
                   d, d+1, d+2 with R = (H+4)*W (H padded by 2 each side; the
                   W boundary is handled by masks applied to the left/right
                   accumulators after the matmuls).
    w_ref        : (27, Cin, Cout_pad) bf16   tap-major flattened weights
    b_ref        : (1, Cout_pad) f32
    o_ref        : (HW, Cout_pad) f32
    """
    TM = CH * W                      # rows per chunk (CH whole image rows)
    cout = o_ref.shape[-1]

    # Column masks — chunk-invariant because every chunk is whole image rows.
    col = jax.lax.broadcasted_iota(jnp.int32, (TM, 1), 0) % W
    mask_l = (col != 0).astype(jnp.float32)        # kill the w==0 wrap rows
    mask_r = (col != (W - 1)).astype(jnp.float32)  # kill the w==W-1 wrap rows

    # Bias broadcast hoisted out of the chunk loop; folded into acc init.
    bias_b = jnp.broadcast_to(b_ref[...], (TM, cout))

    planes = (xm_ref, xc_ref, xp_ref)
    for m in range(H // CH):
        row0 = m * TM
        acc_c = bias_b                               # kw == 1 taps (+ bias)
        acc_l = jnp.zeros((TM, cout), jnp.float32)   # kw == 0 taps
        acc_r = jnp.zeros((TM, cout), jnp.float32)   # kw == 2 taps
        for kd in range(3):
            x_ref = planes[kd]
            for kh in range(3):
                base = row0 + (kh + 1) * W - 1       # static; kw=1 is W-aligned
                for kw in range(3):
                    patch = x_ref[base + kw:base + kw + TM, :]   # (TM, Cin) bf16
                    d = jnp.dot(patch, w_ref[kd * 9 + kh * 3 + kw],
                                preferred_element_type=jnp.float32)
                    if kw == 0:
                        acc_l = acc_l + d
                    elif kw == 2:
                        acc_r = acc_r + d
                    else:
                        acc_c = acc_c + d
        # Row-masking commutes with the matmul: mask*(x@W) == (mask*x)@W, so
        # the W-boundary masks are applied once per chunk, not per tap.
        acc = acc_c + mask_l * acc_l + mask_r * acc_r
        # ELU with a single transcendental; the positive branch is selected by
        # the where(), and min() keeps exp() from overflowing.
        neg = jnp.minimum(acc, 0.0)
        out = jnp.where(acc > 0, acc, jnp.exp(neg) - 1.0)
        o_ref[row0:row0 + TM, :] = out.astype(o_ref.dtype)


def conv_block_forward_ndhwc(x_ndhwc, weight, bias, *, keep_padded_cout=False):
    """ConvBlock.forward on a channels-last volume (preferred entry point so a
    chain of ConvBlocks never pays NCDHW<->NDHWC transposes per block).

    x_ndhwc : (N, D, H, W, Cin) float32
    weight  : (Cout, Cin, 3, 3, 3)   (PyTorch Conv3d layout)
    bias    : (Cout,)
    returns : (N, D, H, W, Cout) float32  (or Cout padded to 128 multiple when
              keep_padded_cout=True, for chaining into another ConvBlock).
    """
    N, D, H, W, Cin = x_ndhwc.shape
    Cout = weight.shape[0]
    Cout_pad = _round_up(Cout, 128)
    HW = H * W
    R = (H + 4) * W

    # ---- glue: ONE padding pass, no 27x im2col blow-up --------------------
    # depth halo of 1 plane, height halo of 2 rows (the extra row absorbs the
    # flat-plane w±1 wrap so no separate flat-row pad is needed).
    xf = jnp.pad(x_ndhwc, ((0, 0), (1, 1), (2, 2), (0, 0), (0, 0)))
    xf = xf.reshape(N, D + 2, R, Cin).astype(jnp.bfloat16)

    # (Cout, Cin, kd, kh, kw) -> (27, Cin, Cout_pad): lane-dense output cols,
    # bf16 for the MXU (accumulation stays f32).
    w_r = jnp.transpose(weight, (2, 3, 4, 1, 0)).reshape(27, Cin, Cout)
    w_r = jnp.pad(w_r, ((0, 0), (0, 0), (0, Cout_pad - Cout))).astype(jnp.bfloat16)
    b_r = jnp.pad(bias.reshape(1, Cout).astype(jnp.float32),
                  ((0, 0), (0, Cout_pad - Cout)))

    CH = _rows_per_chunk(H, W)

    flops = 2 * N * D * HW * 27 * Cin * Cout_pad
    bytes_accessed = (2 * 3 * xf.size + 2 * w_r.size + 4 * b_r.size
                      + 4 * N * D * HW * Cout_pad)
    cost = pl.CostEstimate(flops=flops,
                           transcendentals=N * D * HW * Cout_pad,
                           bytes_accessed=bytes_accessed)

    kernel = functools.partial(_conv3x3x3_bias_elu_kernel, H=H, W=W, CH=CH)

    out = pl.pallas_call(
        kernel,
        out_shape=jax.ShapeDtypeStruct((N, D, HW, Cout_pad), jnp.float32),
        grid_spec=pltpu.PrefetchScalarGridSpec(
            num_scalar_prefetch=0,
            grid=(N, D),
            in_specs=[
                # three overlapping depth-plane views of the same padded input
                pl.BlockSpec((None, None, R, Cin), lambda n, d: (n, d, 0, 0)),
                pl.BlockSpec((None, None, R, Cin), lambda n, d: (n, d + 1, 0, 0)),
                pl.BlockSpec((None, None, R, Cin), lambda n, d: (n, d + 2, 0, 0)),
                pl.BlockSpec((27, Cin, Cout_pad), lambda n, d: (0, 0, 0)),
                pl.BlockSpec((1, Cout_pad), lambda n, d: (0, 0)),
            ],
            out_specs=pl.BlockSpec((None, None, HW, Cout_pad),
                                   lambda n, d: (n, d, 0, 0)),
        ),
        compiler_params=pltpu.CompilerParams(
            dimension_semantics=("parallel", "parallel"),
            vmem_limit_bytes=_vmem_limit_bytes()),
        cost_estimate=cost,
    )(xf, xf, xf, w_r, b_r)

    out = out.reshape(N, D, H, W, Cout_pad)
    if keep_padded_cout:
        return out
    return out[..., :Cout]


def conv_block_forward(x_ncdhw, weight, bias):
    """PyTorch-convention entry point: NCDHW in, NCDHW out.

    A full ResUnetModel should chain blocks through conv_block_forward_ndhwc
    (with keep_padded_cout=True between blocks) so layout transposes and the
    Cout un-pad slice are paid only once at the model boundary.
    """
    x_ndhwc = jnp.transpose(x_ncdhw, (0, 2, 3, 4, 1))
    y = conv_block_forward_ndhwc(x_ndhwc, weight, bias)
    return jnp.transpose(y, (0, 4, 1, 2, 3))


def _reference(x_ncdhw, weight, bias):
    """Pure-JAX reference: lax conv + ELU (matches PyTorch semantics)."""
    y = jax.lax.conv_general_dilated(
        x_ncdhw, weight,
        window_strides=(1, 1, 1),
        padding=[(1, 1), (1, 1), (1, 1)],
        dimension_numbers=("NCDHW", "OIDHW", "NCDHW"),
    )
    y = y + bias[None, :, None, None, None]
    return jax.nn.elu(y)


if __name__ == "__main__":
    key = jax.random.PRNGKey(0)
    k_x, k_w, k_b = jax.random.split(key, 3)

    # small shapes consistent with ConvBlock(in_channels=4, out_channels=8)
    N, Cin, Cout, D, H, W = 2, 4, 8, 8, 8, 8
    x = jax.random.normal(k_x, (N, Cin, D, H, W), jnp.float32)
    weight = jax.random.normal(k_w, (Cout, Cin, 3, 3, 3), jnp.float32) * 0.1
    bias = jax.random.normal(k_b, (Cout,), jnp.float32) * 0.1

    out = jax.block_until_ready(conv_block_forward(x, weight, bias))
    assert out.shape == (N, Cout, D, H, W)

    # tight check against a reference fed the same bf16-rounded inputs that
    # the kernel's MXU path sees (both accumulate in f32)
    x_bf = x.astype(jnp.bfloat16).astype(jnp.float32)
    w_bf = weight.astype(jnp.bfloat16).astype(jnp.float32)
    ref_bf = jax.block_until_ready(_reference(x_bf, w_bf, bias))
    assert jnp.allclose(out, ref_bf, rtol=1e-3, atol=1e-3), "mismatch vs bf16 reference"

    # loose sanity check against the pure-f32 reference (bf16 rounding noise)
    ref_f32 = jax.block_until_ready(_reference(x, weight, bias))
    assert jnp.allclose(out, ref_f32, rtol=5e-2, atol=5e-2), "mismatch vs f32 reference"

    print("KERNEL_OK")
</pallas_src>

<mosaic_0001>
module attributes {stable_mosaic.version = 11 : i64} {
  func.func @_conv3x3x3_bias_elu_kernel(%arg0: i32, %arg1: i32, %arg2: memref<1x1x96x4xbf16, #tpu.memory_space<vmem>>, %arg3: memref<1x1x96x4xbf16, #tpu.memory_space<vmem>>, %arg4: memref<1x1x96x4xbf16, #tpu.memory_space<vmem>>, %arg5: memref<27x4x128xbf16, #tpu.memory_space<vmem>>, %arg6: memref<1x128xf32, #tpu.memory_space<vmem>>, %arg7: memref<1x1x64x128xf32, #tpu.memory_space<vmem>>) attributes {dimension_semantics = [#tpu.dimension_semantics<parallel>, #tpu.dimension_semantics<parallel>], iteration_bounds = array<i64: 2, 8>, scalar_prefetch = 0 : i64, scratch_operands = 0 : i64, tpu.core_type = #tpu.core_type<tc>, window_params = [{transform_indices = @transform_0, window_bounds = array<i64: 1, 1, 96, 4>}, {transform_indices = @transform_1, window_bounds = array<i64: 1, 1, 96, 4>}, {transform_indices = @transform_2, window_bounds = array<i64: 1, 1, 96, 4>}, {pipeline_mode = #tpu.pipeline_mode<synchronous>, transform_indices = @transform_3, window_bounds = array<i64: 27, 4, 128>}, {pipeline_mode = #tpu.pipeline_mode<synchronous>, transform_indices = @transform_4, window_bounds = array<i64: 1, 128>}, {transform_indices = @transform_5, window_bounds = array<i64: 1, 1, 64, 128>}]} {
    %0 = tpu.iota {dimensions = array<i32: 0>} : vector<64x1xi32>
    %c8_i32 = arith.constant 8 : i32
    %c0_i32 = arith.constant 0 : i32
    %1 = arith.cmpi eq, %c8_i32, %c0_i32 : i32
    %c1_i32 = arith.constant 1 : i32
    %2 = arith.select %1, %c1_i32, %c8_i32 : i32
    %3 = vector.broadcast %2 : i32 to vector<64x1xi32>
    %4 = arith.remsi %0, %3 : vector<64x1xi32>
    %c0_i32_0 = arith.constant 0 : i32
    %5 = vector.broadcast %c0_i32_0 : i32 to vector<64x1xi32>
    %6 = arith.cmpi ne, %4, %5 : vector<64x1xi32>
    %c0_i32_1 = arith.constant 0 : i32
    %7 = vector.broadcast %c0_i32_1 : i32 to vector<64x1xi32>
    %8 = arith.cmpi slt, %4, %7 : vector<64x1xi32>
    %c0_i32_2 = arith.constant 0 : i32
    %9 = arith.cmpi slt, %2, %c0_i32_2 : i32
    %10 = vector.broadcast %9 : i1 to vector<64x1xi1>
    %11 = vector.broadcast %10 : vector<64x1xi1> to vector<64x1xi1>
    %12 = arith.xori %8, %11 : vector<64x1xi1>
    %13 = arith.andi %12, %6 : vector<64x1xi1>
    %14 = vector.broadcast %2 : i32 to vector<64x1xi32>
    %15 = arith.addi %4, %14 : vector<64x1xi32>
    %16 = arith.select %13, %15, %4 : vector<64x1xi1>, vector<64x1xi32>
    %c0_i32_3 = arith.constant 0 : i32
    %17 = vector.broadcast %c0_i32_3 : i32 to vector<64x1xi32>
    %18 = arith.cmpi ne, %16, %17 : vector<64x1xi32>
    %19 = arith.extui %18 : vector<64x1xi1> to vector<64x1xi32>
    %20 = arith.sitofp %19 : vector<64x1xi32> to vector<64x1xf32>
    %c7_i32 = arith.constant 7 : i32
    %21 = vector.broadcast %c7_i32 : i32 to vector<64x1xi32>
    %22 = arith.cmpi ne, %16, %21 : vector<64x1xi32>
    %23 = arith.extui %22 : vector<64x1xi1> to vector<64x1xi32>
    %24 = arith.sitofp %23 : vector<64x1xi32> to vector<64x1xf32>
    %c0 = arith.constant 0 : index
    %c0_4 = arith.constant 0 : index
    %25 = vector.load %arg6[%c0, %c0_4] : memref<1x128xf32, #tpu.memory_space<vmem>>, vector<1x128xf32>
    %26 = vector.shape_cast %25 : vector<1x128xf32> to vector<1x128xf32>
    %27 = vector.broadcast %26 : vector<1x128xf32> to vector<64x128xf32>
    %cst = arith.constant 0.000000e+00 : f32
    %28 = vector.broadcast %cst : f32 to vector<64x128xf32>
    %cst_5 = arith.constant 0.000000e+00 : f32
    %29 = vector.broadcast %cst_5 : f32 to vector<64x128xf32>
    %c0_6 = arith.constant 0 : index
    %c0_7 = arith.constant 0 : index
    %c7 = arith.constant 7 : index
    %c0_8 = arith.constant 0 : index
    %30 = vector.load %arg2[%c0_6, %c0_7, %c7, %c0_8] : memref<1x1x96x4xbf16, #tpu.memory_space<vmem>>, vector<1x1x64x4xbf16>
    %31 = vector.shape_cast %30 : vector<1x1x64x4xbf16> to vector<64x4xbf16>
    %c0_9 = arith.constant 0 : index
    %c0_10 = arith.constant 0 : index
    %c0_11 = arith.constant 0 : index
    %32 = vector.load %arg5[%c0_9, %c0_10, %c0_11] : memref<27x4x128xbf16, #tpu.memory_space<vmem>>, vector<1x4x128xbf16>
    %33 = vector.shape_cast %32 : vector<1x4x128xbf16> to vector<4x128xbf16>
    %cst_12 = arith.constant dense<0.000000e+00> : vector<64x128xf32>
    %34 = tpu.matmul %31, %33, %cst_12 {dimension_numbers = #tpu.dot_dimension_numbers<[1], [0], [0], [1], [0, 0, 1, 1], [], []>} : vector<64x4xbf16>, vector<4x128xbf16>, vector<64x128xf32> -> vector<64x128xf32>
    %35 = arith.addf %28, %34 : vector<64x128xf32>
    %c0_13 = arith.constant 0 : index
    %c0_14 = arith.constant 0 : index
    %c8 = arith.constant 8 : index
    %c0_15 = arith.constant 0 : index
    %36 = vector.load %arg2[%c0_13, %c0_14, %c8, %c0_15] : memref<1x1x96x4xbf16, #tpu.memory_space<vmem>>, vector<1x1x64x4xbf16>
    %37 = vector.shape_cast %36 : vector<1x1x64x4xbf16> to vector<64x4xbf16>
    %c1 = arith.constant 1 : index
    %c0_16 = arith.constant 0 : index
    %c0_17 = arith.constant 0 : index
    %38 = vector.load %arg5[%c1, %c0_16, %c0_17] : memref<27x4x128xbf16, #tpu.memory_space<vmem>>, vector<1x4x128xbf16>
    %39 = vector.shape_cast %38 : vector<1x4x128xbf16> to vector<4x128xbf16>
    %cst_18 = arith.constant dense<0.000000e+00> : vector<64x128xf32>
    %40 = tpu.matmul %37, %39, %cst_18 {dimension_numbers = #tpu.dot_dimension_numbers<[1], [0], [0], [1], [0, 0, 1, 1], [], []>} : vector<64x4xbf16>, vector<4x128xbf16>, vector<64x128xf32> -> vector<64x128xf32>
    %41 = arith.addf %27, %40 : vector<64x128xf32>
    %c0_19 = arith.constant 0 : index
    %c0_20 = arith.constant 0 : index
    %c9 = arith.constant 9 : index
    %c0_21 = arith.constant 0 : index
    %42 = vector.load %arg2[%c0_19, %c0_20, %c9, %c0_21] : memref<1x1x96x4xbf16, #tpu.memory_space<vmem>>, vector<1x1x64x4xbf16>
    %43 = vector.shape_cast %42 : vector<1x1x64x4xbf16> to vector<64x4xbf16>
    %c2 = arith.constant 2 : index
    %c0_22 = arith.constant 0 : index
    %c0_23 = arith.constant 0 : index
    %44 = vector.load %arg5[%c2, %c0_22, %c0_23] : memref<27x4x128xbf16, #tpu.memory_space<vmem>>, vector<1x4x128xbf16>
    %45 = vector.shape_cast %44 : vector<1x4x128xbf16> to vector<4x128xbf16>
    %cst_24 = arith.constant dense<0.000000e+00> : vector<64x128xf32>
    %46 = tpu.matmul %43, %45, %cst_24 {dimension_numbers = #tpu.dot_dimension_numbers<[1], [0], [0], [1], [0, 0, 1, 1], [], []>} : vector<64x4xbf16>, vector<4x128xbf16>, vector<64x128xf32> -> vector<64x128xf32>
    %47 = arith.addf %29, %46 : vector<64x128xf32>
    %c0_25 = arith.constant 0 : index
    %c0_26 = arith.constant 0 : index
    %c15 = arith.constant 15 : index
    %c0_27 = arith.constant 0 : index
    %48 = vector.load %arg2[%c0_25, %c0_26, %c15, %c0_27] : memref<1x1x96x4xbf16, #tpu.memory_space<vmem>>, vector<1x1x64x4xbf16>
    %49 = vector.shape_cast %48 : vector<1x1x64x4xbf16> to vector<64x4xbf16>
    %c3 = arith.constant 3 : index
    %c0_28 = arith.constant 0 : index
    %c0_29 = arith.constant 0 : index
    %50 = vector.load %arg5[%c3, %c0_28, %c0_29] : memref<27x4x128xbf16, #tpu.memory_space<vmem>>, vector<1x4x128xbf16>
    %51 = vector.shape_cast %50 : vector<1x4x128xbf16> to vector<4x128xbf16>
    %cst_30 = arith.constant dense<0.000000e+00> : vector<64x128xf32>
    %52 = tpu.matmul %49, %51, %cst_30 {dimension_numbers = #tpu.dot_dimension_numbers<[1], [0], [0], [1], [0, 0, 1, 1], [], []>} : vector<64x4xbf16>, vector<4x128xbf16>, vector<64x128xf32> -> vector<64x128xf32>
    %53 = arith.addf %35, %52 : vector<64x128xf32>
    %c0_31 = arith.constant 0 : index
    %c0_32 = arith.constant 0 : index
    %c16 = arith.constant 16 : index
    %c0_33 = arith.constant 0 : index
    %54 = vector.load %arg2[%c0_31, %c0_32, %c16, %c0_33] : memref<1x1x96x4xbf16, #tpu.memory_space<vmem>>, vector<1x1x64x4xbf16>
    %55 = vector.shape_cast %54 : vector<1x1x64x4xbf16> to vector<64x4xbf16>
    %c4 = arith.constant 4 : index
    %c0_34 = arith.constant 0 : index
    %c0_35 = arith.constant 0 : index
    %56 = vector.load %arg5[%c4, %c0_34, %c0_35] : memref<27x4x128xbf16, #tpu.memory_space<vmem>>, vector<1x4x128xbf16>
    %57 = vector.shape_cast %56 : vector<1x4x128xbf16> to vector<4x128xbf16>
    %cst_36 = arith.constant dense<0.000000e+00> : vector<64x128xf32>
    %58 = tpu.matmul %55, %57, %cst_36 {dimension_numbers = #tpu.dot_dimension_numbers<[1], [0], [0], [1], [0, 0, 1, 1], [], []>} : vector<64x4xbf16>, vector<4x128xbf16>, vector<64x128xf32> -> vector<64x128xf32>
    %59 = arith.addf %41, %58 : vector<64x128xf32>
    %c0_37 = arith.constant 0 : index
    %c0_38 = arith.constant 0 : index
    %c17 = arith.constant 17 : index
    %c0_39 = arith.constant 0 : index
    %60 = vector.load %arg2[%c0_37, %c0_38, %c17, %c0_39] : memref<1x1x96x4xbf16, #tpu.memory_space<vmem>>, vector<1x1x64x4xbf16>
    %61 = vector.shape_cast %60 : vector<1x1x64x4xbf16> to vector<64x4xbf16>
    %c5 = arith.constant 5 : index
    %c0_40 = arith.constant 0 : index
    %c0_41 = arith.constant 0 : index
    %62 = vector.load %arg5[%c5, %c0_40, %c0_41] : memref<27x4x128xbf16, #tpu.memory_space<vmem>>, vector<1x4x128xbf16>
    %63 = vector.shape_cast %62 : vector<1x4x128xbf16> to vector<4x128xbf16>
    %cst_42 = arith.constant dense<0.000000e+00> : vector<64x128xf32>
    %64 = tpu.matmul %61, %63, %cst_42 {dimension_numbers = #tpu.dot_dimension_numbers<[1], [0], [0], [1], [0, 0, 1, 1], [], []>} : vector<64x4xbf16>, vector<4x128xbf16>, vector<64x128xf32> -> vector<64x128xf32>
    %65 = arith.addf %47, %64 : vector<64x128xf32>
    %c0_43 = arith.constant 0 : index
    %c0_44 = arith.constant 0 : index
    %c23 = arith.constant 23 : index
    %c0_45 = arith.constant 0 : index
    %66 = vector.load %arg2[%c0_43, %c0_44, %c23, %c0_45] : memref<1x1x96x4xbf16, #tpu.memory_space<vmem>>, vector<1x1x64x4xbf16>
    %67 = vector.shape_cast %66 : vector<1x1x64x4xbf16> to vector<64x4xbf16>
    %c6 = arith.constant 6 : index
    %c0_46 = arith.constant 0 : index
    %c0_47 = arith.constant 0 : index
    %68 = vector.load %arg5[%c6, %c0_46, %c0_47] : memref<27x4x128xbf16, #tpu.memory_space<vmem>>, vector<1x4x128xbf16>
    %69 = vector.shape_cast %68 : vector<1x4x128xbf16> to vector<4x128xbf16>
    %cst_48 = arith.constant dense<0.000000e+00> : vector<64x128xf32>
    %70 = tpu.matmul %67, %69, %cst_48 {dimension_numbers = #tpu.dot_dimension_numbers<[1], [0], [0], [1], [0, 0, 1, 1], [], []>} : vector<64x4xbf16>, vector<4x128xbf16>, vector<64x128xf32> -> vector<64x128xf32>
    %71 = arith.addf %53, %70 : vector<64x128xf32>
    %c0_49 = arith.constant 0 : index
    %c0_50 = arith.constant 0 : index
    %c24 = arith.constant 24 : index
    %c0_51 = arith.constant 0 : index
    %72 = vector.load %arg2[%c0_49, %c0_50, %c24, %c0_51] : memref<1x1x96x4xbf16, #tpu.memory_space<vmem>>, vector<1x1x64x4xbf16>
    %73 = vector.shape_cast %72 : vector<1x1x64x4xbf16> to vector<64x4xbf16>
    %c7_52 = arith.constant 7 : index
    %c0_53 = arith.constant 0 : index
    %c0_54 = arith.constant 0 : index
    %74 = vector.load %arg5[%c7_52, %c0_53, %c0_54] : memref<27x4x128xbf16, #tpu.memory_space<vmem>>, vector<1x4x128xbf16>
    %75 = vector.shape_cast %74 : vector<1x4x128xbf16> to vector<4x128xbf16>
    %cst_55 = arith.constant dense<0.000000e+00> : vector<64x128xf32>
    %76 = tpu.matmul %73, %75, %cst_55 {dimension_numbers = #tpu.dot_dimension_numbers<[1], [0], [0], [1], [0, 0, 1, 1], [], []>} : vector<64x4xbf16>, vector<4x128xbf16>, vector<64x128xf32> -> vector<64x128xf32>
    %77 = arith.addf %59, %76 : vector<64x128xf32>
    %c0_56 = arith.constant 0 : index
    %c0_57 = arith.constant 0 : index
    %c25 = arith.constant 25 : index
    %c0_58 = arith.constant 0 : index
    %78 = vector.load %arg2[%c0_56, %c0_57, %c25, %c0_58] : memref<1x1x96x4xbf16, #tpu.memory_space<vmem>>, vector<1x1x64x4xbf16>
    %79 = vector.shape_cast %78 : vector<1x1x64x4xbf16> to vector<64x4xbf16>
    %c8_59 = arith.constant 8 : index
    %c0_60 = arith.constant 0 : index
    %c0_61 = arith.constant 0 : index
    %80 = vector.load %arg5[%c8_59, %c0_60, %c0_61] : memref<27x4x128xbf16, #tpu.memory_space<vmem>>, vector<1x4x128xbf16>
    %81 = vector.shape_cast %80 : vector<1x4x128xbf16> to vector<4x128xbf16>
    %cst_62 = arith.constant dense<0.000000e+00> : vector<64x128xf32>
    %82 = tpu.matmul %79, %81, %cst_62 {dimension_numbers = #tpu.dot_dimension_numbers<[1], [0], [0], [1], [0, 0, 1, 1], [], []>} : vector<64x4xbf16>, vector<4x128xbf16>, vector<64x128xf32> -> vector<64x128xf32>
    %83 = arith.addf %65, %82 : vector<64x128xf32>
    %c0_63 = arith.constant 0 : index
    %c0_64 = arith.constant 0 : index
    %c7_65 = arith.constant 7 : index
    %c0_66 = arith.constant 0 : index
    %84 = vector.load %arg3[%c0_63, %c0_64, %c7_65, %c0_66] : memref<1x1x96x4xbf16, #tpu.memory_space<vmem>>, vector<1x1x64x4xbf16>
    %85 = vector.shape_cast %84 : vector<1x1x64x4xbf16> to vector<64x4xbf16>
    %c9_67 = arith.constant 9 : index
    %c0_68 = arith.constant 0 : index
    %c0_69 = arith.constant 0 : index
    %86 = vector.load %arg5[%c9_67, %c0_68, %c0_69] : memref<27x4x128xbf16, #tpu.memory_space<vmem>>, vector<1x4x128xbf16>
    %87 = vector.shape_cast %86 : vector<1x4x128xbf16> to vector<4x128xbf16>
    %cst_70 = arith.constant dense<0.000000e+00> : vector<64x128xf32>
    %88 = tpu.matmul %85, %87, %cst_70 {dimension_numbers = #tpu.dot_dimension_numbers<[1], [0], [0], [1], [0, 0, 1, 1], [], []>} : vector<64x4xbf16>, vector<4x128xbf16>, vector<64x128xf32> -> vector<64x128xf32>
    %89 = arith.addf %71, %88 : vector<64x128xf32>
    %c0_71 = arith.constant 0 : index
    %c0_72 = arith.constant 0 : index
    %c8_73 = arith.constant 8 : index
    %c0_74 = arith.constant 0 : index
    %90 = vector.load %arg3[%c0_71, %c0_72, %c8_73, %c0_74] : memref<1x1x96x4xbf16, #tpu.memory_space<vmem>>, vector<1x1x64x4xbf16>
    %91 = vector.shape_cast %90 : vector<1x1x64x4xbf16> to vector<64x4xbf16>
    %c10 = arith.constant 10 : index
    %c0_75 = arith.constant 0 : index
    %c0_76 = arith.constant 0 : index
    %92 = vector.load %arg5[%c10, %c0_75, %c0_76] : memref<27x4x128xbf16, #tpu.memory_space<vmem>>, vector<1x4x128xbf16>
    %93 = vector.shape_cast %92 : vector<1x4x128xbf16> to vector<4x128xbf16>
    %cst_77 = arith.constant dense<0.000000e+00> : vector<64x128xf32>
    %94 = tpu.matmul %91, %93, %cst_77 {dimension_numbers = #tpu.dot_dimension_numbers<[1], [0], [0], [1], [0, 0, 1, 1], [], []>} : vector<64x4xbf16>, vector<4x128xbf16>, vector<64x128xf32> -> vector<64x128xf32>
    %95 = arith.addf %77, %94 : vector<64x128xf32>
    %c0_78 = arith.constant 0 : index
    %c0_79 = arith.constant 0 : index
    %c9_80 = arith.constant 9 : index
    %c0_81 = arith.constant 0 : index
    %96 = vector.load %arg3[%c0_78, %c0_79, %c9_80, %c0_81] : memref<1x1x96x4xbf16, #tpu.memory_space<vmem>>, vector<1x1x64x4xbf16>
    %97 = vector.shape_cast %96 : vector<1x1x64x4xbf16> to vector<64x4xbf16>
    %c11 = arith.constant 11 : index
    %c0_82 = arith.constant 0 : index
    %c0_83 = arith.constant 0 : index
    %98 = vector.load %arg5[%c11, %c0_82, %c0_83] : memref<27x4x128xbf16, #tpu.memory_space<vmem>>, vector<1x4x128xbf16>
    %99 = vector.shape_cast %98 : vector<1x4x128xbf16> to vector<4x128xbf16>
    %cst_84 = arith.constant dense<0.000000e+00> : vector<64x128xf32>
    %100 = tpu.matmul %97, %99, %cst_84 {dimension_numbers = #tpu.dot_dimension_numbers<[1], [0], [0], [1], [0, 0, 1, 1], [], []>} : vector<64x4xbf16>, vector<4x128xbf16>, vector<64x128xf32> -> vector<64x128xf32>
    %101 = arith.addf %83, %100 : vector<64x128xf32>
    %c0_85 = arith.constant 0 : index
    %c0_86 = arith.constant 0 : index
    %c15_87 = arith.constant 15 : index
    %c0_88 = arith.constant 0 : index
    %102 = vector.load %arg3[%c0_85, %c0_86, %c15_87, %c0_88] : memref<1x1x96x4xbf16, #tpu.memory_space<vmem>>, vector<1x1x64x4xbf16>
    %103 = vector.shape_cast %102 : vector<1x1x64x4xbf16> to vector<64x4xbf16>
    %c12 = arith.constant 12 : index
    %c0_89 = arith.constant 0 : index
    %c0_90 = arith.constant 0 : index
    %104 = vector.load %arg5[%c12, %c0_89, %c0_90] : memref<27x4x128xbf16, #tpu.memory_space<vmem>>, vector<1x4x128xbf16>
    %105 = vector.shape_cast %104 : vector<1x4x128xbf16> to vector<4x128xbf16>
    %cst_91 = arith.constant dense<0.000000e+00> : vector<64x128xf32>
    %106 = tpu.matmul %103, %105, %cst_91 {dimension_numbers = #tpu.dot_dimension_numbers<[1], [0], [0], [1], [0, 0, 1, 1], [], []>} : vector<64x4xbf16>, vector<4x128xbf16>, vector<64x128xf32> -> vector<64x128xf32>
    %107 = arith.addf %89, %106 : vector<64x128xf32>
    %c0_92 = arith.constant 0 : index
    %c0_93 = arith.constant 0 : index
    %c16_94 = arith.constant 16 : index
    %c0_95 = arith.constant 0 : index
    %108 = vector.load %arg3[%c0_92, %c0_93, %c16_94, %c0_95] : memref<1x1x96x4xbf16, #tpu.memory_space<vmem>>, vector<1x1x64x4xbf16>
    %109 = vector.shape_cast %108 : vector<1x1x64x4xbf16> to vector<64x4xbf16>
    %c13 = arith.constant 13 : index
    %c0_96 = arith.constant 0 : index
    %c0_97 = arith.constant 0 : index
    %110 = vector.load %arg5[%c13, %c0_96, %c0_97] : memref<27x4x128xbf16, #tpu.memory_space<vmem>>, vector<1x4x128xbf16>
    %111 = vector.shape_cast %110 : vector<1x4x128xbf16> to vector<4x128xbf16>
    %cst_98 = arith.constant dense<0.000000e+00> : vector<64x128xf32>
    %112 = tpu.matmul %109, %111, %cst_98 {dimension_numbers = #tpu.dot_dimension_numbers<[1], [0], [0], [1], [0, 0, 1, 1], [], []>} : vector<64x4xbf16>, vector<4x128xbf16>, vector<64x128xf32> -> vector<64x128xf32>
    %113 = arith.addf %95, %112 : vector<64x128xf32>
    %c0_99 = arith.constant 0 : index
    %c0_100 = arith.constant 0 : index
    %c17_101 = arith.constant 17 : index
    %c0_102 = arith.constant 0 : index
    %114 = vector.load %arg3[%c0_99, %c0_100, %c17_101, %c0_102] : memref<1x1x96x4xbf16, #tpu.memory_space<vmem>>, vector<1x1x64x4xbf16>
    %115 = vector.shape_cast %114 : vector<1x1x64x4xbf16> to vector<64x4xbf16>
    %c14 = arith.constant 14 : index
    %c0_103 = arith.constant 0 : index
    %c0_104 = arith.constant 0 : index
    %116 = vector.load %arg5[%c14, %c0_103, %c0_104] : memref<27x4x128xbf16, #tpu.memory_space<vmem>>, vector<1x4x128xbf16>
    %117 = vector.shape_cast %116 : vector<1x4x128xbf16> to vector<4x128xbf16>
    %cst_105 = arith.constant dense<0.000000e+00> : vector<64x128xf32>
    %118 = tpu.matmul %115, %117, %cst_105 {dimension_numbers = #tpu.dot_dimension_numbers<[1], [0], [0], [1], [0, 0, 1, 1], [], []>} : vector<64x4xbf16>, vector<4x128xbf16>, vector<64x128xf32> -> vector<64x128xf32>
    %119 = arith.addf %101, %118 : vector<64x128xf32>
    %c0_106 = arith.constant 0 : index
    %c0_107 = arith.constant 0 : index
    %c23_108 = arith.constant 23 : index
    %c0_109 = arith.constant 0 : index
    %120 = vector.load %arg3[%c0_106, %c0_107, %c23_108, %c0_109] : memref<1x1x96x4xbf16, #tpu.memory_space<vmem>>, vector<1x1x64x4xbf16>
    %121 = vector.shape_cast %120 : vector<1x1x64x4xbf16> to vector<64x4xbf16>
    %c15_110 = arith.constant 15 : index
    %c0_111 = arith.constant 0 : index
    %c0_112 = arith.constant 0 : index
    %122 = vector.load %arg5[%c15_110, %c0_111, %c0_112] : memref<27x4x128xbf16, #tpu.memory_space<vmem>>, vector<1x4x128xbf16>
    %123 = vector.shape_cast %122 : vector<1x4x128xbf16> to vector<4x128xbf16>
    %cst_113 = arith.constant dense<0.000000e+00> : vector<64x128xf32>
    %124 = tpu.matmul %121, %123, %cst_113 {dimension_numbers = #tpu.dot_dimension_numbers<[1], [0], [0], [1], [0, 0, 1, 1], [], []>} : vector<64x4xbf16>, vector<4x128xbf16>, vector<64x128xf32> -> vector<64x128xf32>
    %125 = arith.addf %107, %124 : vector<64x128xf32>
    %c0_114 = arith.constant 0 : index
    %c0_115 = arith.constant 0 : index
    %c24_116 = arith.constant 24 : index
    %c0_117 = arith.constant 0 : index
    %126 = vector.load %arg3[%c0_114, %c0_115, %c24_116, %c0_117] : memref<1x1x96x4xbf16, #tpu.memory_space<vmem>>, vector<1x1x64x4xbf16>
    %127 = vector.shape_cast %126 : vector<1x1x64x4xbf16> to vector<64x4xbf16>
    %c16_118 = arith.constant 16 : index
    %c0_119 = arith.constant 0 : index
    %c0_120 = arith.constant 0 : index
    %128 = vector.load %arg5[%c16_118, %c0_119, %c0_120] : memref<27x4x128xbf16, #tpu.memory_space<vmem>>, vector<1x4x128xbf16>
    %129 = vector.shape_cast %128 : vector<1x4x128xbf16> to vector<4x128xbf16>
    %cst_121 = arith.constant dense<0.000000e+00> : vector<64x128xf32>
    %130 = tpu.matmul %127, %129, %cst_121 {dimension_numbers = #tpu.dot_dimension_numbers<[1], [0], [0], [1], [0, 0, 1, 1], [], []>} : vector<64x4xbf16>, vector<4x128xbf16>, vector<64x128xf32> -> vector<64x128xf32>
    %131 = arith.addf %113, %130 : vector<64x128xf32>
    %c0_122 = arith.constant 0 : index
    %c0_123 = arith.constant 0 : index
    %c25_124 = arith.constant 25 : index
    %c0_125 = arith.constant 0 : index
    %132 = vector.load %arg3[%c0_122, %c0_123, %c25_124, %c0_125] : memref<1x1x96x4xbf16, #tpu.memory_space<vmem>>, vector<1x1x64x4xbf16>
    %133 = vector.shape_cast %132 : vector<1x1x64x4xbf16> to vector<64x4xbf16>
    %c17_126 = arith.constant 17 : index
    %c0_127 = arith.constant 0 : index
    %c0_128 = arith.constant 0 : index
    %134 = vector.load %arg5[%c17_126, %c0_127, %c0_128] : memref<27x4x128xbf16, #tpu.memory_space<vmem>>, vector<1x4x128xbf16>
    %135 = vector.shape_cast %134 : vector<1x4x128xbf16> to vector<4x128xbf16>
    %cst_129 = arith.constant dense<0.000000e+00> : vector<64x128xf32>
    %136 = tpu.matmul %133, %135, %cst_129 {dimension_numbers = #tpu.dot_dimension_numbers<[1], [0], [0], [1], [0, 0, 1, 1], [], []>} : vector<64x4xbf16>, vector<4x128xbf16>, vector<64x128xf32> -> vector<64x128xf32>
    %137 = arith.addf %119, %136 : vector<64x128xf32>
    %c0_130 = arith.constant 0 : index
    %c0_131 = arith.constant 0 : index
    %c7_132 = arith.constant 7 : index
    %c0_133 = arith.constant 0 : index
    %138 = vector.load %arg4[%c0_130, %c0_131, %c7_132, %c0_133] : memref<1x1x96x4xbf16, #tpu.memory_space<vmem>>, vector<1x1x64x4xbf16>
    %139 = vector.shape_cast %138 : vector<1x1x64x4xbf16> to vector<64x4xbf16>
    %c18 = arith.constant 18 : index
    %c0_134 = arith.constant 0 : index
    %c0_135 = arith.constant 0 : index
    %140 = vector.load %arg5[%c18, %c0_134, %c0_135] : memref<27x4x128xbf16, #tpu.memory_space<vmem>>, vector<1x4x128xbf16>
    %141 = vector.shape_cast %140 : vector<1x4x128xbf16> to vector<4x128xbf16>
    %cst_136 = arith.constant dense<0.000000e+00> : vector<64x128xf32>
    %142 = tpu.matmul %139, %141, %cst_136 {dimension_numbers = #tpu.dot_dimension_numbers<[1], [0], [0], [1], [0, 0, 1, 1], [], []>} : vector<64x4xbf16>, vector<4x128xbf16>, vector<64x128xf32> -> vector<64x128xf32>
    %143 = arith.addf %125, %142 : vector<64x128xf32>
    %c0_137 = arith.constant 0 : index
    %c0_138 = arith.constant 0 : index
    %c8_139 = arith.constant 8 : index
    %c0_140 = arith.constant 0 : index
    %144 = vector.load %arg4[%c0_137, %c0_138, %c8_139, %c0_140] : memref<1x1x96x4xbf16, #tpu.memory_space<vmem>>, vector<1x1x64x4xbf16>
    %145 = vector.shape_cast %144 : vector<1x1x64x4xbf16> to vector<64x4xbf16>
    %c19 = arith.constant 19 : index
    %c0_141 = arith.constant 0 : index
    %c0_142 = arith.constant 0 : index
    %146 = vector.load %arg5[%c19, %c0_141, %c0_142] : memref<27x4x128xbf16, #tpu.memory_space<vmem>>, vector<1x4x128xbf16>
    %147 = vector.shape_cast %146 : vector<1x4x128xbf16> to vector<4x128xbf16>
    %cst_143 = arith.constant dense<0.000000e+00> : vector<64x128xf32>
    %148 = tpu.matmul %145, %147, %cst_143 {dimension_numbers = #tpu.dot_dimension_numbers<[1], [0], [0], [1], [0, 0, 1, 1], [], []>} : vector<64x4xbf16>, vector<4x128xbf16>, vector<64x128xf32> -> vector<64x128xf32>
    %149 = arith.addf %131, %148 : vector<64x128xf32>
    %c0_144 = arith.constant 0 : index
    %c0_145 = arith.constant 0 : index
    %c9_146 = arith.constant 9 : index
    %c0_147 = arith.constant 0 : index
    %150 = vector.load %arg4[%c0_144, %c0_145, %c9_146, %c0_147] : memref<1x1x96x4xbf16, #tpu.memory_space<vmem>>, vector<1x1x64x4xbf16>
    %151 = vector.shape_cast %150 : vector<1x1x64x4xbf16> to vector<64x4xbf16>
    %c20 = arith.constant 20 : index
    %c0_148 = arith.constant 0 : index
    %c0_149 = arith.constant 0 : index
    %152 = vector.load %arg5[%c20, %c0_148, %c0_149] : memref<27x4x128xbf16, #tpu.memory_space<vmem>>, vector<1x4x128xbf16>
    %153 = vector.shape_cast %152 : vector<1x4x128xbf16> to vector<4x128xbf16>
    %cst_150 = arith.constant dense<0.000000e+00> : vector<64x128xf32>
    %154 = tpu.matmul %151, %153, %cst_150 {dimension_numbers = #tpu.dot_dimension_numbers<[1], [0], [0], [1], [0, 0, 1, 1], [], []>} : vector<64x4xbf16>, vector<4x128xbf16>, vector<64x128xf32> -> vector<64x128xf32>
    %155 = arith.addf %137, %154 : vector<64x128xf32>
    %c0_151 = arith.constant 0 : index
    %c0_152 = arith.constant 0 : index
    %c15_153 = arith.constant 15 : index
    %c0_154 = arith.constant 0 : index
    %156 = vector.load %arg4[%c0_151, %c0_152, %c15_153, %c0_154] : memref<1x1x96x4xbf16, #tpu.memory_space<vmem>>, vector<1x1x64x4xbf16>
    %157 = vector.shape_cast %156 : vector<1x1x64x4xbf16> to vector<64x4xbf16>
    %c21 = arith.constant 21 : index
    %c0_155 = arith.constant 0 : index
    %c0_156 = arith.constant 0 : index
    %158 = vector.load %arg5[%c21, %c0_155, %c0_156] : memref<27x4x128xbf16, #tpu.memory_space<vmem>>, vector<1x4x128xbf16>
    %159 = vector.shape_cast %158 : vector<1x4x128xbf16> to vector<4x128xbf16>
    %cst_157 = arith.constant dense<0.000000e+00> : vector<64x128xf32>
    %160 = tpu.matmul %157, %159, %cst_157 {dimension_numbers = #tpu.dot_dimension_numbers<[1], [0], [0], [1], [0, 0, 1, 1], [], []>} : vector<64x4xbf16>, vector<4x128xbf16>, vector<64x128xf32> -> vector<64x128xf32>
    %161 = arith.addf %143, %160 : vector<64x128xf32>
    %c0_158 = arith.constant 0 : index
    %c0_159 = arith.constant 0 : index
    %c16_160 = arith.constant 16 : index
    %c0_161 = arith.constant 0 : index
    %162 = vector.load %arg4[%c0_158, %c0_159, %c16_160, %c0_161] : memref<1x1x96x4xbf16, #tpu.memory_space<vmem>>, vector<1x1x64x4xbf16>
    %163 = vector.shape_cast %162 : vector<1x1x64x4xbf16> to vector<64x4xbf16>
    %c22 = arith.constant 22 : index
    %c0_162 = arith.constant 0 : index
    %c0_163 = arith.constant 0 : index
    %164 = vector.load %arg5[%c22, %c0_162, %c0_163] : memref<27x4x128xbf16, #tpu.memory_space<vmem>>, vector<1x4x128xbf16>
    %165 = vector.shape_cast %164 : vector<1x4x128xbf16> to vector<4x128xbf16>
    %cst_164 = arith.constant dense<0.000000e+00> : vector<64x128xf32>
    %166 = tpu.matmul %163, %165, %cst_164 {dimension_numbers = #tpu.dot_dimension_numbers<[1], [0], [0], [1], [0, 0, 1, 1], [], []>} : vector<64x4xbf16>, vector<4x128xbf16>, vector<64x128xf32> -> vector<64x128xf32>
    %167 = arith.addf %149, %166 : vector<64x128xf32>
    %c0_165 = arith.constant 0 : index
    %c0_166 = arith.constant 0 : index
    %c17_167 = arith.constant 17 : index
    %c0_168 = arith.constant 0 : index
    %168 = vector.load %arg4[%c0_165, %c0_166, %c17_167, %c0_168] : memref<1x1x96x4xbf16, #tpu.memory_space<vmem>>, vector<1x1x64x4xbf16>
    %169 = vector.shape_cast %168 : vector<1x1x64x4xbf16> to vector<64x4xbf16>
    %c23_169 = arith.constant 23 : index
    %c0_170 = arith.constant 0 : index
    %c0_171 = arith.constant 0 : index
    %170 = vector.load %arg5[%c23_169, %c0_170, %c0_171] : memref<27x4x128xbf16, #tpu.memory_space<vmem>>, vector<1x4x128xbf16>
    %171 = vector.shape_cast %170 : vector<1x4x128xbf16> to vector<4x128xbf16>
    %cst_172 = arith.constant dense<0.000000e+00> : vector<64x128xf32>
    %172 = tpu.matmul %169, %171, %cst_172 {dimension_numbers = #tpu.dot_dimension_numbers<[1], [0], [0], [1], [0, 0, 1, 1], [], []>} : vector<64x4xbf16>, vector<4x128xbf16>, vector<64x128xf32> -> vector<64x128xf32>
    %173 = arith.addf %155, %172 : vector<64x128xf32>
    %c0_173 = arith.constant 0 : index
    %c0_174 = arith.constant 0 : index
    %c23_175 = arith.constant 23 : index
    %c0_176 = arith.constant 0 : index
    %174 = vector.load %arg4[%c0_173, %c0_174, %c23_175, %c0_176] : memref<1x1x96x4xbf16, #tpu.memory_space<vmem>>, vector<1x1x64x4xbf16>
    %175 = vector.shape_cast %174 : vector<1x1x64x4xbf16> to vector<64x4xbf16>
    %c24_177 = arith.constant 24 : index
    %c0_178 = arith.constant 0 : index
    %c0_179 = arith.constant 0 : index
    %176 = vector.load %arg5[%c24_177, %c0_178, %c0_179] : memref<27x4x128xbf16, #tpu.memory_space<vmem>>, vector<1x4x128xbf16>
    %177 = vector.shape_cast %176 : vector<1x4x128xbf16> to vector<4x128xbf16>
    %cst_180 = arith.constant dense<0.000000e+00> : vector<64x128xf32>
    %178 = tpu.matmul %175, %177, %cst_180 {dimension_numbers = #tpu.dot_dimension_numbers<[1], [0], [0], [1], [0, 0, 1, 1], [], []>} : vector<64x4xbf16>, vector<4x128xbf16>, vector<64x128xf32> -> vector<64x128xf32>
    %179 = arith.addf %161, %178 : vector<64x128xf32>
    %c0_181 = arith.constant 0 : index
    %c0_182 = arith.constant 0 : index
    %c24_183 = arith.constant 24 : index
    %c0_184 = arith.constant 0 : index
    %180 = vector.load %arg4[%c0_181, %c0_182, %c24_183, %c0_184] : memref<1x1x96x4xbf16, #tpu.memory_space<vmem>>, vector<1x1x64x4xbf16>
    %181 = vector.shape_cast %180 : vector<1x1x64x4xbf16> to vector<64x4xbf16>
    %c25_185 = arith.constant 25 : index
    %c0_186 = arith.constant 0 : index
    %c0_187 = arith.constant 0 : index
    %182 = vector.load %arg5[%c25_185, %c0_186, %c0_187] : memref<27x4x128xbf16, #tpu.memory_space<vmem>>, vector<1x4x128xbf16>
    %183 = vector.shape_cast %182 : vector<1x4x128xbf16> to vector<4x128xbf16>
    %cst_188 = arith.constant dense<0.000000e+00> : vector<64x128xf32>
    %184 = tpu.matmul %181, %183, %cst_188 {dimension_numbers = #tpu.dot_dimension_numbers<[1], [0], [0], [1], [0, 0, 1, 1], [], []>} : vector<64x4xbf16>, vector<4x128xbf16>, vector<64x128xf32> -> vector<64x128xf32>
    %185 = arith.addf %167, %184 : vector<64x128xf32>
    %c0_189 = arith.constant 0 : index
    %c0_190 = arith.constant 0 : index
    %c25_191 = arith.constant 25 : index
    %c0_192 = arith.constant 0 : index
    %186 = vector.load %arg4[%c0_189, %c0_190, %c25_191, %c0_192] : memref<1x1x96x4xbf16, #tpu.memory_space<vmem>>, vector<1x1x64x4xbf16>
    %187 = vector.shape_cast %186 : vector<1x1x64x4xbf16> to vector<64x4xbf16>
    %c26 = arith.constant 26 : index
    %c0_193 = arith.constant 0 : index
    %c0_194 = arith.constant 0 : index
    %188 = vector.load %arg5[%c26, %c0_193, %c0_194] : memref<27x4x128xbf16, #tpu.memory_space<vmem>>, vector<1x4x128xbf16>
    %189 = vector.shape_cast %188 : vector<1x4x128xbf16> to vector<4x128xbf16>
    %cst_195 = arith.constant dense<0.000000e+00> : vector<64x128xf32>
    %190 = tpu.matmul %187, %189, %cst_195 {dimension_numbers = #tpu.dot_dimension_numbers<[1], [0], [0], [1], [0, 0, 1, 1], [], []>} : vector<64x4xbf16>, vector<4x128xbf16>, vector<64x128xf32> -> vector<64x128xf32>
    %191 = arith.addf %173, %190 : vector<64x128xf32>
    %192 = vector.broadcast %20 : vector<64x1xf32> to vector<64x128xf32>
    %193 = arith.mulf %192, %179 : vector<64x128xf32>
    %194 = arith.addf %185, %193 : vector<64x128xf32>
    %195 = vector.broadcast %24 : vector<64x1xf32> to vector<64x128xf32>
    %196 = arith.mulf %195, %191 : vector<64x128xf32>
    %197 = arith.addf %194, %196 : vector<64x128xf32>
    %cst_196 = arith.constant 0.000000e+00 : f32
    %198 = vector.broadcast %cst_196 : f32 to vector<64x128xf32>
    %199 = arith.minimumf %197, %198 : vector<64x128xf32>
    %cst_197 = arith.constant 0.000000e+00 : f32
    %200 = vector.broadcast %cst_197 : f32 to vector<64x128xf32>
    %201 = arith.cmpf ogt, %197, %200 : vector<64x128xf32>
    %202 = math.exp %199 : vector<64x128xf32>
    %cst_198 = arith.constant 1.000000e+00 : f32
    %203 = vector.broadcast %cst_198 : f32 to vector<64x128xf32>
    %204 = arith.subf %202, %203 : vector<64x128xf32>
    %205 = arith.select %201, %197, %204 : vector<64x128xi1>, vector<64x128xf32>
    %c0_199 = arith.constant 0 : index
    %c0_200 = arith.constant 0 : index
    %c0_201 = arith.constant 0 : index
    %c0_202 = arith.constant 0 : index
    %206 = vector.load %arg7[%c0_199, %c0_200, %c0_201, %c0_202] : memref<1x1x64x128xf32, #tpu.memory_space<vmem>>, vector<1x1x64x128xf32>
    %207 = vector.shape_cast %206 : vector<1x1x64x128xf32> to vector<64x128xf32>
    %208 = vector.shape_cast %205 : vector<64x128xf32> to vector<1x1x64x128xf32>
    tpu.vector_store %arg7[%c0_199, %c0_200, %c0_201, %c0_202], %208 {strides = array<i32>} : memref<1x1x64x128xf32, #tpu.memory_space<vmem>>, vector<1x1x64x128xf32>,
    return
  }
  func.func @transform_0(%arg0: i32, %arg1: i32) -> (i32, i32, i32, i32) {
    %c0_i32 = arith.constant 0 : i32
    %c0_i32_0 = arith.constant 0 : i32
    %c0_i32_1 = arith.constant 0 : i32
    return %arg0, %arg1, %c0_i32, %c0_i32_0 : i32, i32, i32, i32
  }
  func.func @transform_1(%arg0: i32, %arg1: i32) -> (i32, i32, i32, i32) {
    %c1_i32 = arith.constant 1 : i32
    %0 = arith.addi %arg1, %c1_i32 : i32
    %c0_i32 = arith.constant 0 : i32
    %c0_i32_0 = arith.constant 0 : i32
    %c0_i32_1 = arith.constant 0 : i32
    return %arg0, %0, %c0_i32, %c0_i32_0 : i32, i32, i32, i32
  }
  func.func @transform_2(%arg0: i32, %arg1: i32) -> (i32, i32, i32, i32) {
    %c2_i32 = arith.constant 2 : i32
    %0 = arith.addi %arg1, %c2_i32 : i32
    %c0_i32 = arith.constant 0 : i32
    %c0_i32_0 = arith.constant 0 : i32
    %c0_i32_1 = arith.constant 0 : i32
    return %arg0, %0, %c0_i32, %c0_i32_0 : i32, i32, i32, i32
  }
  func.func @transform_3(%arg0: i32, %arg1: i32) -> (i32, i32, i32) {
    %c0_i32 = arith.constant 0 : i32
    %c0_i32_0 = arith.constant 0 : i32
    %c0_i32_1 = arith.constant 0 : i32
    %c0_i32_2 = arith.constant 0 : i32
    return %c0_i32, %c0_i32_0, %c0_i32_1 : i32, i32, i32
  }
  func.func @transform_4(%arg0: i32, %arg1: i32) -> (i32, i32) {
    %c0_i32 = arith.constant 0 : i32
    %c0_i32_0 = arith.constant 0 : i32
    %c0_i32_1 = arith.constant 0 : i32
    return %c0_i32, %c0_i32_0 : i32, i32
  }
  func.func @transform_5(%arg0: i32, %arg1: i32) -> (i32, i32, i32, i32) {
    %c0_i32 = arith.constant 0 : i32
    %c0_i32_0 = arith.constant 0 : i32
    %c0_i32_1 = arith.constant 0 : i32
    return %arg0, %arg1, %c0_i32, %c0_i32_0 : i32, i32, i32, i32
  }
}

</mosaic_0001>

<llo_original>
// kernel: tpu_custom_call.1
$region0: #{tpu_custom_call.1}
  #allocation0 [shape = 'u32[]', space=smem, size = 0x4, offset = 0x4, fixed_abs, tag = 'smem constant byte address 0x4 - core index']
  #allocation1 [shape = 'u32[144,128]{1,0:T(1,128)}', space=vmem, size = 0x12000, scoped, tag = 'internal scratch']
  %s0 = inlined_call_operand.hbm [shape: bf16[2,10,96,4], index: 0, kind: input, shape index: {}]
  %s1 = inlined_call_operand.hbm [shape: bf16[2,10,96,4], index: 1, kind: input, shape index: {}]
  %s2 = inlined_call_operand.hbm [shape: bf16[2,10,96,4], index: 2, kind: input, shape index: {}]
  %s3 = inlined_call_operand.hbm [shape: bf16[27,4,128], index: 3, kind: input, shape index: {}]
  %s4 = inlined_call_operand.hbm [shape: f32[1,128], index: 4, kind: input, shape index: {}]
  %s5 = inlined_call_operand.hbm [shape: f32[2,8,64,128], index: 5, kind: output, shape index: {}]
  %s6 = sld [smem:[#allocation0]]
  $region73: #{tpu_custom_call.1} parent=0
    _
  %s8 = ssub.s32 1, %s6
  %s9 = scalar_select 0, %s8, %s6
  $region1: #{tpu_custom_call.1} parent=0
    #allocation2 [shape = 'u8[49152]{0}', space=vmem, size = 0xc000, scoped, tag = 'input window, operand 0']
    #allocation3 [shape = 's32[2]{0}', space=sflag, size = 0x8, scoped, tag = 'scoped memory for tpu_custom_call.1']
    #allocation4 [shape = 's32[2]{0}', space=sflag, size = 0x8, scoped, tag = 'scoped memory for tpu_custom_call.1']
    #allocation5 [shape = 'u8[49152]{0}', space=vmem, size = 0xc000, scoped, tag = 'input window, operand 1']
    #allocation6 [shape = 's32[2]{0}', space=sflag, size = 0x8, scoped, tag = 'scoped memory for tpu_custom_call.1']
    #allocation7 [shape = 'u8[49152]{0}', space=vmem, size = 0xc000, scoped, tag = 'input window, operand 2']
    #allocation8 [shape = 'u8[27648]{0}', space=vmem, size = 0x6c00, scoped, tag = 'input window, operand 3, single buffered']
    #allocation9 [shape = 's32[1]{0}', space=sflag, size = 0x4, scoped, tag = 'scoped memory for tpu_custom_call.1']
    #allocation10 [shape = 'u8[512]{0}', space=vmem, size = 0x400, scoped, tag = 'input window, operand 4, single buffered']
    #allocation11 [shape = 'u8[65536]{0}', space=vmem, size = 0x10000, scoped, tag = 'output window, operand 0']
    %10 = vsyncpa [#allocation3], 0
    %s11 = scalar_lea.sflag [#allocation3], 1
    %12 = vsyncpa %s11, 0
    %13 = vsyncpa [#allocation6], 0
    %s14 = scalar_lea.sflag [#allocation6], 1
    %15 = vsyncpa %s14, 0
    %16 = vsyncpa [#allocation9], 0
    %17 = vsyncpa [#allocation4], 0
    %s18 = scalar_lea.sflag [#allocation4], 1
    %19 = vsyncpa %s18, 0
    loop: start=0, step=1, limit=18
    $region2: #{tpu_custom_call.1} parent=1 // loop_pre_header
      _
    $region3: #{tpu_custom_call.1} parent=1 // loop_header
      %s21 = sphi 0, %s25
      %p22 = scmp.ge.s32.totalorder %s21, 18
      %s28 = sphi 0, %s40
      %s29 = sphi 0, %s36
      %s30 = sphi 0, %s28
      %s31 = sphi 0, %s29
      %s32 = sphi 0, %s30
      %s33 = sphi 0, %s31
      %s45 = sphi 0, %s47
      %s48 = sphi 0, %s45
      %s49 = sphi 0, %s48
      %s65 = sphi 0, %s49
      %s75 = sphi 0, %s77
      %s78 = sphi 0, %s75
      %s79 = sphi 0, %s78
      %s95 = sphi 0, %s79
      %s105 = sphi 0, %s107
      %s108 = sphi 0, %s105
      %s109 = sphi 0, %s108
      %s125 = sphi 0, %s109
      %s129 = sphi 0, %s129
      %s131 = sphi 0, %s129
      %s132 = sphi 0, %s131
      %s146 = sphi 0, %s132
      %s150 = sphi 0, %s150
      %s152 = sphi 0, %s150
      %s153 = sphi 0, %s152
      %s167 = sphi 0, %s153
      %s175 = sphi 0, %s177
      %s178 = sphi 0, %s175
      %s179 = sphi 0, %s178
      %s195 = sphi 0, %s179
    $region4: #{tpu_custom_call.1} parent=1 // loop_header_branch
      %24 = sbr.rel (%p22) target = $region8
    $region5: #{tpu_custom_call.1} parent=1 // loop_body
      %s26 = ssub.s32 %s21, 1
      %s27 = ssub.s32 %s21, 2
      %s34 = sadd.s32 1, %s29
      %p35 = scmp.ge.s32.totalorder %s34, 8
      %s36 = scalar_select %p35, 0, %s34
      %s37 = sadd.s32 1, %s28
      %s38 = scalar_select %p35, %s37, %s28
      %p39 = scmp.ge.s32.totalorder %s38, 2
      %s40 = scalar_select %p39, 0, %s38
      %s41 = ssub.s32 %s28, %s40
      %s42 = ssub.s32 %s29, %s36
      %s43 = sor.u32 %s41, %s42
      %p44 = scmp.eq.s32.totalorder %s43, 0
      %s46 = sadd.s32 %s45, 1
      %s47 = scalar_select %p44, %s45, %s46
      %p50 = pneg %p44
      %p51 = scmp.eq.s32.totalorder %s21, 15
      %p52 = por %p50, %p51
      %p53 = scmp.ne.s32.totalorder %s45, %s48
      %p54 = scmp.eq.s32.totalorder %s21, 0
      %p55 = por %p53, %p54
      %p56 = scmp.ne.s32.totalorder %s45, %s48
      %p57 = scmp.eq.s32.totalorder %s26, 15
      %p58 = por %p56, %p57
      %p59 = scmp.ne.s32.totalorder %s48, %s49
      %p60 = scmp.eq.s32.totalorder %s26, 0
      %p61 = por %p59, %p60
      %p62 = scmp.ne.s32.totalorder %s48, %s49
      %p63 = scmp.eq.s32.totalorder %s27, 15
      %p64 = por %p62, %p63
      %p66 = scmp.ne.s32.totalorder %s49, %s65
      %p67 = scmp.eq.s32.totalorder %s27, 0
      %p68 = por %p66, %p67
      %s69 = sadd.s32 %s29, 1
      %s70 = sadd.s32 %s36, 1
      %s71 = ssub.s32 %s28, %s40
      %s72 = ssub.s32 %s69, %s70
      %s73 = sor.u32 %s71, %s72
      %p74 = scmp.eq.s32.totalorder %s73, 0
      %s76 = sadd.s32 %s75, 1
      %s77 = scalar_select %p74, %s75, %s76
      %p80 = pneg %p74
      %p81 = scmp.eq.s32.totalorder %s21, 15
      %p82 = por %p80, %p81
      %p83 = scmp.ne.s32.totalorder %s75, %s78
      %p84 = scmp.eq.s32.totalorder %s21, 0
      %p85 = por %p83, %p84
      %p86 = scmp.ne.s32.totalorder %s75, %s78
      %p87 = scmp.eq.s32.totalorder %s26, 15
      %p88 = por %p86, %p87
      %p89 = scmp.ne.s32.totalorder %s78, %s79
      %p90 = scmp.eq.s32.totalorder %s26, 0
      %p91 = por %p89, %p90
      %p92 = scmp.ne.s32.totalorder %s78, %s79
      %p93 = scmp.eq.s32.totalorder %s27, 15
      %p94 = por %p92, %p93
      %p96 = scmp.ne.s32.totalorder %s79, %s95
      %p97 = scmp.eq.s32.totalorder %s27, 0
      %p98 = por %p96, %p97
      %s99 = sadd.s32 %s29, 2
      %s100 = sadd.s32 %s36, 2
      %s101 = ssub.s32 %s28, %s40
      %s102 = ssub.s32 %s99, %s100
      %s103 = sor.u32 %s101, %s102
      %p104 = scmp.eq.s32.totalorder %s103, 0
      %s106 = sadd.s32 %s105, 1
      %s107 = scalar_select %p104, %s105, %s106
      %p110 = pneg %p104
      %p111 = scmp.eq.s32.totalorder %s21, 15
      %p112 = por %p110, %p111
      %p113 = scmp.ne.s32.totalorder %s105, %s108
      %p114 = scmp.eq.s32.totalorder %s21, 0
      %p115 = por %p113, %p114
      %p116 = scmp.ne.s32.totalorder %s105, %s108
      %p117 = scmp.eq.s32.totalorder %s26, 15
      %p118 = por %p116, %p117
      %p119 = scmp.ne.s32.totalorder %s108, %s109
      %p120 = scmp.eq.s32.totalorder %s26, 0
      %p121 = por %p119, %p120
      %p122 = scmp.ne.s32.totalorder %s108, %s109
      %p123 = scmp.eq.s32.totalorder %s27, 15
      %p124 = por %p122, %p123
      %p126 = scmp.ne.s32.totalorder %s109, %s125
      %p127 = scmp.eq.s32.totalorder %s27, 0
      %p128 = por %p126, %p127
      %s130 = sadd.s32 %s129, 1
      %p133 = scmp.eq.s32.totalorder %s21, 15
      %p134 = scmp.ne.s32.totalorder %s129, %s131
      %p135 = scmp.eq.s32.totalorder %s21, 0
      %p136 = por %p134, %p135
      %p137 = scmp.ne.s32.totalorder %s129, %s131
      %p138 = scmp.eq.s32.totalorder %s26, 15
      %p139 = por %p137, %p138
      %p140 = scmp.ne.s32.totalorder %s131, %s132
      %p141 = scmp.eq.s32.totalorder %s26, 0
      %p142 = por %p140, %p141
      %p143 = scmp.ne.s32.totalorder %s131, %s132
      %p144 = scmp.eq.s32.totalorder %s27, 15
      %p145 = por %p143, %p144
      %p147 = scmp.ne.s32.totalorder %s132, %s146
      %p148 = scmp.eq.s32.totalorder %s27, 0
      %p149 = por %p147, %p148
      %s151 = sadd.s32 %s150, 1
      %p154 = scmp.eq.s32.totalorder %s21, 15
      %p155 = scmp.ne.s32.totalorder %s150, %s152
      %p156 = scmp.eq.s32.totalorder %s21, 0
      %p157 = por %p155, %p156
      %p158 = scmp.ne.s32.totalorder %s150, %s152
      %p159 = scmp.eq.s32.totalorder %s26, 15
      %p160 = por %p158, %p159
      %p161 = scmp.ne.s32.totalorder %s152, %s153
      %p162 = scmp.eq.s32.totalorder %s26, 0
      %p163 = por %p161, %p162
      %p164 = scmp.ne.s32.totalorder %s152, %s153
      %p165 = scmp.eq.s32.totalorder %s27, 15
      %p166 = por %p164, %p165
      %p168 = scmp.ne.s32.totalorder %s153, %s167
      %p169 = scmp.eq.s32.totalorder %s27, 0
      %p170 = por %p168, %p169
      %s171 = ssub.s32 %s28, %s40
      %s172 = ssub.s32 %s29, %s36
      %s173 = sor.u32 %s171, %s172
      %p174 = scmp.eq.s32.totalorder %s173, 0
      %s176 = sadd.s32 %s175, 1
      %s177 = scalar_select %p174, %s175, %s176
      %p180 = pneg %p174
      %p181 = scmp.eq.s32.totalorder %s21, 15
      %p182 = por %p180, %p181
      %p183 = scmp.ne.s32.totalorder %s175, %s178
      %p184 = scmp.eq.s32.totalorder %s21, 0
      %p185 = por %p183, %p184
      %p186 = scmp.ne.s32.totalorder %s175, %s178
      %p187 = scmp.eq.s32.totalorder %s26, 15
      %p188 = por %p186, %p187
      %p189 = scmp.ne.s32.totalorder %s178, %s179
      %p190 = scmp.eq.s32.totalorder %s26, 0
      %p191 = por %p189, %p190
      %p192 = scmp.ne.s32.totalorder %s178, %s179
      %p193 = scmp.eq.s32.totalorder %s27, 15
      %p194 = por %p192, %p193
      %p196 = scmp.ne.s32.totalorder %s179, %s195
      %p197 = scmp.eq.s32.totalorder %s27, 0
      %p198 = por %p196, %p197
      %p199 = scmp.le.s32.totalorder 1, %s21
      %p200 = scmp.lt.s32.totalorder %s21, 17
      %p201 = pnand %p199, %p200
      %p202 = pneg %p201
      // Predicated region
      $region9: #{tpu_custom_call.1} parent=5 // pred_check
        _
      $region10: #{tpu_custom_call.1} parent=5 // pred_check_branch
        %204 = sbr.rel (%p201) target = $region12
      $region11: #{tpu_custom_call.1} parent=5 // pred_region
        %s205 = ssub.s32 %s21, 1
        // Predicated region
        $region13: #{tpu_custom_call.1} parent=11 // pred_check
          %p206 = pneg %p142
        $region14: #{tpu_custom_call.1} parent=11 // pred_check_branch
          %208 = sbr.rel (%p206) target = $region16
        $region15: #{tpu_custom_call.1} parent=11 // pred_region
          %s210 = ssub.s32 864, 864
          %211 = vsyncadd [#allocation9], %s210
          %s212 = sshll.u32 [#allocation8], 4
          %s213 = int_to_ptr.vmem [resolvable:$true] %s212
          %218 = dma.hbm_to_vmem [thread:$0]  %s3, 864, %s213, [#allocation9], 32, 32, 2
        $region16: #{tpu_custom_call.1} parent=11 // pred_fallthru
          _
        // Predicated region
        $region17: #{tpu_custom_call.1} parent=11 // pred_check
          %p219 = pneg %p163
        $region18: #{tpu_custom_call.1} parent=11 // pred_check_branch
          %221 = sbr.rel (%p219) target = $region20
        $region19: #{tpu_custom_call.1} parent=11 // pred_region
          %s223 = ssub.s32 16, 16
          %224 = vsyncadd [#allocation9], %s223
          %s226 = sshll.u32 [#allocation10], 4
          %s227 = int_to_ptr.vmem [resolvable:$true] %s226
          %229 = dma.hbm_to_vmem [thread:$0]  %s4, 16, %s227, [#allocation9]
        $region20: #{tpu_custom_call.1} parent=11 // pred_fallthru
          _
      $region12: #{tpu_custom_call.1} parent=5 // pred_fallthru
        _
      %p230 = scmp.lt.s32.totalorder %s21, 16
      // Predicated region
      $region21: #{tpu_custom_call.1} parent=5 // pred_check
        %p231 = pneg %p230
      $region22: #{tpu_custom_call.1} parent=5 // pred_check_branch
        %233 = sbr.rel (%p231) target = $region24
      $region23: #{tpu_custom_call.1} parent=5 // pred_region
        // Predicated region
        $region25: #{tpu_custom_call.1} parent=23 // pred_check
          %p234 = pneg %p55
        $region26: #{tpu_custom_call.1} parent=23 // pred_check_branch
          %236 = sbr.rel (%p234) target = $region28
        $region27: #{tpu_custom_call.1} parent=23 // pred_region
          %s237 = sand.u32 %s45, 1
          %s238 = scalar_lea.sflag [#allocation3], %s237
          %s239 = sand.u32 %s45, 1
          %s240 = smul.addr %s239, 48
          %s241 = scalar_lea.vmem [#allocation2], %s240
          %s243 = ssub.s32 768, 768
          %244 = vsyncadd %s238, %s243
          %s245 = smul.addr %s29, 12
          %s246 = smul.addr %s28, 120
          %s247 = sadd.s32 %s245, %s246
          %s248 = smul.addr %s247, 64
          %s249 = scalar_lea.hbm %s0, %s248
          %s250 = sshll.u32 %s241, 4
          %s251 = int_to_ptr.vmem [resolvable:$true] %s250
          %256 = dma.hbm_to_vmem [thread:$0]  %s249, 768, %s251, %s238, 64, 64, 4
        $region28: #{tpu_custom_call.1} parent=23 // pred_fallthru
          _
        // Predicated region
        $region29: #{tpu_custom_call.1} parent=23 // pred_check
          %p257 = pneg %p85
        $region30: #{tpu_custom_call.1} parent=23 // pred_check_branch
          %259 = sbr.rel (%p257) target = $region32
        $region31: #{tpu_custom_call.1} parent=23 // pred_region
          %s260 = sand.u32 %s21, 1
          %s261 = scalar_lea.sflag [#allocation6], %s260
          %s262 = sand.u32 %s75, 1
          %s263 = smul.addr %s262, 48
          %s264 = scalar_lea.vmem [#allocation5], %s263
          %s265 = sadd.s32 %s29, 1
          %s267 = ssub.s32 768, 768
          %268 = vsyncadd %s261, %s267
          %s269 = smul.addr %s265, 12
          %s270 = smul.addr %s28, 120
          %s271 = sadd.s32 %s269, %s270
          %s272 = smul.addr %s271, 64
          %s273 = scalar_lea.hbm %s1, %s272
          %s274 = sshll.u32 %s264, 4
          %s275 = int_to_ptr.vmem [resolvable:$true] %s274
          %280 = dma.hbm_to_vmem [thread:$0]  %s273, 768, %s275, %s261, 64, 64, 4
        $region32: #{tpu_custom_call.1} parent=23 // pred_fallthru
          _
        // Predicated region
        $region33: #{tpu_custom_call.1} parent=23 // pred_check
          %p281 = pneg %p115
        $region34: #{tpu_custom_call.1} parent=23 // pred_check_branch
          %283 = sbr.rel (%p281) target = $region36
        $region35: #{tpu_custom_call.1} parent=23 // pred_region
          %s284 = sand.u32 %s21, 1
          %s285 = scalar_lea.sflag [#allocation6], %s284
          %s286 = sand.u32 %s105, 1
          %s287 = smul.addr %s286, 48
          %s288 = scalar_lea.vmem [#allocation7], %s287
          %s289 = sadd.s32 %s29, 2
          %s291 = ssub.s32 768, 768
          %292 = vsyncadd %s285, %s291
          %s293 = smul.addr %s289, 12
          %s294 = smul.addr %s28, 120
          %s295 = sadd.s32 %s293, %s294
          %s296 = smul.addr %s295, 64
          %s297 = scalar_lea.hbm %s2, %s296
          %s298 = sshll.u32 %s288, 4
          %s299 = int_to_ptr.vmem [resolvable:$true] %s298
          %304 = dma.hbm_to_vmem [thread:$0]  %s297, 768, %s299, %s285, 64, 64, 4
        $region36: #{tpu_custom_call.1} parent=23 // pred_fallthru
          _
      $region24: #{tpu_custom_call.1} parent=5 // pred_fallthru
        _
      %p305 = scmp.le.s32.totalorder 1, %s21
      %p306 = scmp.lt.s32.totalorder %s21, 17
      %p307 = pnand %p305, %p306
      %p308 = pneg %p307
      // Predicated region
      $region37: #{tpu_custom_call.1} parent=5 // pred_check
        _
      $region38: #{tpu_custom_call.1} parent=5 // pred_check_branch
        %310 = sbr.rel (%p307) target = $region40
      $region39: #{tpu_custom_call.1} parent=5 // pred_region
        %s311 = ssub.s32 %s21, 1
        %s312 = sand.u32 %s48, 1
        %s313 = scalar_lea.sflag [#allocation3], %s312
        %s314 = sand.u32 %s48, 1
        %s315 = smul.addr %s314, 48
        %s316 = scalar_lea.vmem [#allocation2], %s315
        // Predicated region
        $region41: #{tpu_custom_call.1} parent=39 // pred_check
          %p317 = pneg %p61
        $region42: #{tpu_custom_call.1} parent=39 // pred_check_branch
          %319 = sbr.rel (%p317) target = $region44
        $region43: #{tpu_custom_call.1} parent=39 // pred_region
          %320 = dma.done %s313, 768
        $region44: #{tpu_custom_call.1} parent=39 // pred_fallthru
          _
        %s321 = sand.u32 %s26, 1
        %s322 = scalar_lea.sflag [#allocation6], %s321
        %s323 = sand.u32 %s78, 1
        %s324 = smul.addr %s323, 48
        %s325 = scalar_lea.vmem [#allocation5], %s324
        // Predicated region
        $region45: #{tpu_custom_call.1} parent=39 // pred_check
          %p326 = pneg %p91
        $region46: #{tpu_custom_call.1} parent=39 // pred_check_branch
          %328 = sbr.rel (%p326) target = $region48
        $region47: #{tpu_custom_call.1} parent=39 // pred_region
          %329 = dma.done %s322, 768
        $region48: #{tpu_custom_call.1} parent=39 // pred_fallthru
          _
        %s330 = sand.u32 %s26, 1
        %s331 = scalar_lea.sflag [#allocation6], %s330
        %s332 = sand.u32 %s108, 1
        %s333 = smul.addr %s332, 48
        %s334 = scalar_lea.vmem [#allocation7], %s333
        // Predicated region
        $region49: #{tpu_custom_call.1} parent=39 // pred_check
          %p335 = pneg %p121
        $region50: #{tpu_custom_call.1} parent=39 // pred_check_branch
          %337 = sbr.rel (%p335) target = $region52
        $region51: #{tpu_custom_call.1} parent=39 // pred_region
          %338 = dma.done %s331, 768
        $region52: #{tpu_custom_call.1} parent=39 // pred_fallthru
          _
        // Predicated region
        $region53: #{tpu_custom_call.1} parent=39 // pred_check
          %p339 = pneg %p142
        $region54: #{tpu_custom_call.1} parent=39 // pred_check_branch
          %341 = sbr.rel (%p339) target = $region56
        $region55: #{tpu_custom_call.1} parent=39 // pred_region
          %342 = dma.done [#allocation9], 864
        $region56: #{tpu_custom_call.1} parent=39 // pred_fallthru
          _
        // Predicated region
        $region57: #{tpu_custom_call.1} parent=39 // pred_check
          %p343 = pneg %p163
        $region58: #{tpu_custom_call.1} parent=39 // pred_check_branch
          %345 = sbr.rel (%p343) target = $region60
        $region59: #{tpu_custom_call.1} parent=39 // pred_region
          %346 = dma.done [#allocation9], 16
        $region60: #{tpu_custom_call.1} parent=39 // pred_fallthru
          _
        %s347 = sand.u32 %s48, 1
        %s348 = scalar_lea.sflag [#allocation3], %s347
        %s349 = sand.u32 %s48, 1
        %s350 = smul.addr %s349, 48
        %s351 = scalar_lea.vmem [#allocation2], %s350
        %p352 = pneg %p61
        %p353 = pneg %p58
        %s354 = sand.u32 %s26, 1
        %s355 = scalar_lea.sflag [#allocation6], %s354
        %s356 = sand.u32 %s78, 1
        %s357 = smul.addr %s356, 48
        %s358 = scalar_lea.vmem [#allocation5], %s357
        %p359 = pneg %p91
        %p360 = pneg %p88
        %s361 = sand.u32 %s26, 1
        %s362 = scalar_lea.sflag [#allocation6], %s361
        %s363 = sand.u32 %s108, 1
        %s364 = smul.addr %s363, 48
        %s365 = scalar_lea.vmem [#allocation7], %s364
        %p366 = pneg %p121
        %p367 = pneg %p118
        %p368 = pneg %p142
        %p369 = pneg %p139
        %p370 = pneg %p163
        %p371 = pneg %p160
        %p372 = pneg %p191
        %p373 = pneg %p188
        %s374 = sand.u32 %s178, 1
        %s375 = scalar_lea.sflag [#allocation4], %s374
        %s376 = sand.u32 %s178, 1
        %s377 = smul.addr %s376, 64
        %s378 = scalar_lea.vmem [#allocation11], %s377
        %s379 = sadd.s32 %s31, 1
        %s380 = sadd.s32 %s31, 2
        %v382 = vlaneseq
        %v383 = vshrl.u32 %v382, 7
        %v384 = vadd.s32 %v383, 8
        %v385 = vadd.s32 %v383, 16
        %v386 = vadd.s32 %v383, 24
        %v387 = vadd.s32 %v383, 32
        %v388 = vadd.s32 %v383, 40
        %v389 = vadd.s32 %v383, 48
        %v390 = vadd.s32 %v383, 56
        %vm391 = vcmp.lt.s32.totalorder %v383, 0
        %v392 = vsub.s32 0, %v383
        %v393 = vsel %vm391, %v392, %v383
        %v394 = vshrl.u32 %v393, 3
        %v395 = vand.u32 %v393, 7
        %v396 = vsub.s32 0, %v395
        %v397 = vsel %vm391, %v396, %v395
        %vm398 = vcmp.lt.s32.totalorder %v384, 0
        %v399 = vsub.s32 0, %v384
        %v400 = vsel %vm398, %v399, %v384
        %v401 = vshrl.u32 %v400, 3
        %v402 = vand.u32 %v400, 7
        %v403 = vsub.s32 0, %v402
        %v404 = vsel %vm398, %v403, %v402
        %vm405 = vcmp.lt.s32.totalorder %v385, 0
        %v406 = vsub.s32 0, %v385
        %v407 = vsel %vm405, %v406, %v385
        %v408 = vshrl.u32 %v407, 3
        %v409 = vand.u32 %v407, 7
        %v410 = vsub.s32 0, %v409
        %v411 = vsel %vm405, %v410, %v409
        %vm412 = vcmp.lt.s32.totalorder %v386, 0
        %v413 = vsub.s32 0, %v386
        %v414 = vsel %vm412, %v413, %v386
        %v415 = vshrl.u32 %v414, 3
        %v416 = vand.u32 %v414, 7
        %v417 = vsub.s32 0, %v416
        %v418 = vsel %vm412, %v417, %v416
        %vm419 = vcmp.lt.s32.totalorder %v387, 0
        %v420 = vsub.s32 0, %v387
        %v421 = vsel %vm419, %v420, %v387
        %v422 = vshrl.u32 %v421, 3
        %v423 = vand.u32 %v421, 7
        %v424 = vsub.s32 0, %v423
        %v425 = vsel %vm419, %v424, %v423
        %vm426 = vcmp.lt.s32.totalorder %v388, 0
        %v427 = vsub.s32 0, %v388
        %v428 = vsel %vm426, %v427, %v388
        %v429 = vshrl.u32 %v428, 3
        %v430 = vand.u32 %v428, 7
        %v431 = vsub.s32 0, %v430
        %v432 = vsel %vm426, %v431, %v430
        %vm433 = vcmp.lt.s32.totalorder %v389, 0
        %v434 = vsub.s32 0, %v389
        %v435 = vsel %vm433, %v434, %v389
        %v436 = vshrl.u32 %v435, 3
        %v437 = vand.u32 %v435, 7
        %v438 = vsub.s32 0, %v437
        %v439 = vsel %vm433, %v438, %v437
        %vm440 = vcmp.lt.s32.totalorder %v390, 0
        %v441 = vsub.s32 0, %v390
        %v442 = vsel %vm440, %v441, %v390
        %v443 = vshrl.u32 %v442, 3
        %v444 = vand.u32 %v442, 7
        %v445 = vsub.s32 0, %v444
        %v446 = vsel %vm440, %v445, %v444
        %vm447 = vcmp.ne.s32.totalorder %v397, 0
        %vm448 = vcmp.ne.s32.totalorder %v404, 0
        %vm449 = vcmp.ne.s32.totalorder %v411, 0
        %vm450 = vcmp.ne.s32.totalorder %v418, 0
        %vm451 = vcmp.ne.s32.totalorder %v425, 0
        %vm452 = vcmp.ne.s32.totalorder %v432, 0
        %vm453 = vcmp.ne.s32.totalorder %v439, 0
        %vm454 = vcmp.ne.s32.totalorder %v446, 0
        %vm455 = vcmp.lt.s32.totalorder %v397, 0
        %vm456 = vcmp.lt.s32.totalorder %v404, 0
        %vm457 = vcmp.lt.s32.totalorder %v411, 0
        %vm458 = vcmp.lt.s32.totalorder %v418, 0
        %vm459 = vcmp.lt.s32.totalorder %v425, 0
        %vm460 = vcmp.lt.s32.totalorder %v432, 0
        %vm461 = vcmp.lt.s32.totalorder %v439, 0
        %vm462 = vcmp.lt.s32.totalorder %v446, 0
        %vm463 = vmand %vm455, %vm447
        %vm464 = vmand %vm456, %vm448
        %vm465 = vmand %vm457, %vm449
        %vm466 = vmand %vm458, %vm450
        %vm467 = vmand %vm459, %vm451
        %vm468 = vmand %vm460, %vm452
        %vm469 = vmand %vm461, %vm453
        %vm470 = vmand %vm462, %vm454
        %v471 = vadd.s32 %v397, 8
        %v472 = vadd.s32 %v404, 8
        %v473 = vadd.s32 %v411, 8
        %v474 = vadd.s32 %v418, 8
        %v475 = vadd.s32 %v425, 8
        %v476 = vadd.s32 %v432, 8
        %v477 = vadd.s32 %v439, 8
        %v478 = vadd.s32 %v446, 8
        %v479 = vsel %vm463, %v471, %v397
        %v480 = vsel %vm464, %v472, %v404
        %v481 = vsel %vm465, %v473, %v411
        %v482 = vsel %vm466, %v474, %v418
        %v483 = vsel %vm467, %v475, %v425
        %v484 = vsel %vm468, %v476, %v432
        %v485 = vsel %vm469, %v477, %v439
        %v486 = vsel %vm470, %v478, %v446
        %vm487 = vcmp.ne.s32.totalorder %v479, 0
        %vm488 = vcmp.ne.s32.totalorder %v480, 0
        %vm489 = vcmp.ne.s32.totalorder %v481, 0
        %vm490 = vcmp.ne.s32.totalorder %v482, 0
        %vm491 = vcmp.ne.s32.totalorder %v483, 0
        %vm492 = vcmp.ne.s32.totalorder %v484, 0
        %vm493 = vcmp.ne.s32.totalorder %v485, 0
        %vm494 = vcmp.ne.s32.totalorder %v486, 0
        %v495 = vsel %vm487, 1, 0
        %v496 = vsel %vm488, 1, 0
        %v497 = vsel %vm489, 1, 0
        %v498 = vsel %vm490, 1, 0
        %v499 = vsel %vm491, 1, 0
        %v500 = vsel %vm492, 1, 0
        %v501 = vsel %vm493, 1, 0
        %v502 = vsel %vm494, 1, 0
        %v503 = vcvt.s32.f32 %v495
        %v504 = vcvt.s32.f32 %v496
        %v505 = vcvt.s32.f32 %v497
        %v506 = vcvt.s32.f32 %v498
        %v507 = vcvt.s32.f32 %v499
        %v508 = vcvt.s32.f32 %v500
        %v509 = vcvt.s32.f32 %v501
        %v510 = vcvt.s32.f32 %v502
        %vm511 = vcmp.ne.s32.totalorder %v479, 7
        %vm512 = vcmp.ne.s32.totalorder %v480, 7
        %vm513 = vcmp.ne.s32.totalorder %v481, 7
        %vm514 = vcmp.ne.s32.totalorder %v482, 7
        %vm515 = vcmp.ne.s32.totalorder %v483, 7
        %vm516 = vcmp.ne.s32.totalorder %v484, 7
        %vm517 = vcmp.ne.s32.totalorder %v485, 7
        %vm518 = vcmp.ne.s32.totalorder %v486, 7
        %v519 = vsel %vm511, 1, 0
        %v520 = vsel %vm512, 1, 0
        %v521 = vsel %vm513, 1, 0
        %v522 = vsel %vm514, 1, 0
        %v523 = vsel %vm515, 1, 0
        %v524 = vsel %vm516, 1, 0
        %v525 = vsel %vm517, 1, 0
        %v526 = vsel %vm518, 1, 0
        %v527 = vcvt.s32.f32 %v519
        %v528 = vcvt.s32.f32 %v520
        %v529 = vcvt.s32.f32 %v521
        %v530 = vcvt.s32.f32 %v522
        %v531 = vcvt.s32.f32 %v523
        %v532 = vcvt.s32.f32 %v524
        %v533 = vcvt.s32.f32 %v525
        %v534 = vcvt.s32.f32 %v526
        %v535 = vld [vmem:[#allocation10] sm:$0x1]
        %v537 = vlaneseq
        %v538 = vshrl.u32 %v537, 7
        %v539 = vsub.s32 0, %v538
        %v540 = vrot.slane %v535, %v539
        %v542 = vld [vmem:[%s316] sm:$0x8]
        %v543 = vld [vmem:[%s316 + $0x4] sm:$0xf]
        %v544 = vld [vmem:[%s316 + $0x8] sm:$0xf]
        %v545 = vld [vmem:[%s316 + $0xc] sm:$0xf]
        %v546 = vld [vmem:[%s316 + $0x10] sm:$0xf]
        %v547 = vld [vmem:[%s316 + $0x14] sm:$0xf]
        %v548 = vld [vmem:[%s316 + $0x18] sm:$0xf]
        %v549 = vld [vmem:[%s316 + $0x1c] sm:$0xf]
        %v550 = vld [vmem:[%s316 + $0x20] sm:$0xf]
        %v551 = vld [vmem:[#allocation8] sm:$0x3]
        %s552 = scalar_lea.vmem [#allocation8], 2
        %v553 = vld [vmem:[%s552] sm:$0x3]
        %v562 = vunpack.c.l.b16 %v543
        %v563 = vunpack.c.l.b16 %v544
        %v564 = vunpack.c.l.b16 %v545
        %v565 = vunpack.c.l.b16 %v546
        %v566 = vunpack.c.l.b16 %v547
        %v567 = vunpack.c.l.b16 %v548
        %v568 = vunpack.c.l.b16 %v549
        %v569 = vunpack.c.l.b16 %v550
        %v570 = vpack.c.b16 %v563, %v562
        %v571 = vpack.c.b16 %v565, %v564
        %v572 = vpack.c.b16 %v567, %v566
        %v573 = vpack.c.b16 %v569, %v568
        %vm574 = vcmask 31744
        %v576 = vsel %vm574, %v570, 0
        %v579 = vsel %vm574, %v571, 0
        %v582 = vsel %vm574, %v572, 0
        %v585 = vsel %vm574, %v573, 0
        %vm587 = vcmask 1041408
        %v589 = vsel %vm587, %v553, 0
        %591 = vmatprep.subr.bf16.mxu0 0
        %592 = vmatpush1.bf16.msra.mxu0 %v589
        %593 = vmatprep.subr.bf16.mxu0 0
        %594 = vmatpush1.bf16.msra.mxu0 0
        %595 = vmatprep.subr.bf16.mxu0 0
        %596 = vmatpush1.bf16.msra.mxu0 0
        %597 = vmatprep.subr.bf16.mxu0 0
        %598 = vmatpush1.bf16.msra.mxu0 0
        %599 = vmatprep.subr.bf16.mxu0 0
        %600 = vmatpush1.bf16.msra.mxu0 0
        %601 = vmatprep.subr.bf16.mxu0 0
        %602 = vmatpush1.bf16.msra.mxu0 0
        %603 = vmatprep.subr.bf16.mxu0 0
        %604 = vmatpush1.bf16.msra.mxu0 0
        %605 = vmatprep.subr.bf16.mxu0 0
        %606 = vmatpush1.bf16.msra.mxu0 0
        %607 = vmatprep.subr.bf16.mxu0 0
        %608 = vmatpush1.bf16.msra.mxu0 0
        %609 = vmatprep.subr.bf16.mxu0 0
        %610 = vmatpush1.bf16.msra.mxu0 0
        %611 = vmatprep.subr.bf16.mxu0 0
        %612 = vmatpush1.bf16.msra.mxu0 0
        %613 = vmatprep.subr.bf16.mxu0 0
        %614 = vmatpush1.bf16.msra.mxu0 0
        %615 = vmatprep.subr.bf16.mxu0 0
        %616 = vmatpush1.bf16.msra.mxu0 0
        %617 = vmatprep.subr.bf16.mxu0 0
        %618 = vmatpush1.bf16.msra.mxu0 0
        %619 = vmatprep.subr.bf16.mxu0 0
        %620 = vmatpush1.bf16.msra.mxu0 0
        %621 = vmatprep.subr.bf16.mxu0 0
        %622 = vmatpush1.bf16.msra.mxu0 0
        %623 = vmatprep.mubr.bf16.mxu0 0
        %624 = vmatmul.mubr.bf16.gmra.mrb[0].mxu0 %v576
        %v625 = vpop.f32.mrb[0].mxu0
        %v626 = vadd.f32 0.0, %v625
        %v627 = vpop.f32.mrb[0].mxu0
        %v628 = vpop.f32.mrb[0].mxu0
        %v629 = vadd.f32 0.0, %v628
        %v630 = vpop.f32.mrb[0].mxu0
        %631 = vmatprep.mubr.bf16.mxu0 0
        %632 = vmatmul.mubr.bf16.gmra.mrb[0].mxu0 %v579
        %v633 = vpop.f32.mrb[0].mxu0
        %v634 = vadd.f32 0.0, %v633
        %v635 = vpop.f32.mrb[0].mxu0
        %v636 = vpop.f32.mrb[0].mxu0
        %v637 = vadd.f32 0.0, %v636
        %v638 = vpop.f32.mrb[0].mxu0
        %639 = vmatprep.mubr.bf16.mxu0 0
        %640 = vmatmul.mubr.bf16.gmra.mrb[0].mxu0 %v582
        %v641 = vpop.f32.mrb[0].mxu0
        %v642 = vadd.f32 0.0, %v641
        %v643 = vpop.f32.mrb[0].mxu0
        %v644 = vpop.f32.mrb[0].mxu0
        %v645 = vadd.f32 0.0, %v644
        %v646 = vpop.f32.mrb[0].mxu0
        %647 = vmatprep.mubr.bf16.mxu0 0
        %648 = vmatmul.mubr.bf16.gmra.mrb[0].mxu0 %v585
        %v649 = vpop.f32.mrb[0].mxu0
        %v650 = vadd.f32 0.0, %v649
        %v651 = vpop.f32.mrb[0].mxu0
        %v652 = vpop.f32.mrb[0].mxu0
        %v653 = vadd.f32 0.0, %v652
        %v654 = vpop.f32.mrb[0].mxu0
        %655 = vdwg.mxu0
        %v656 = vadd.f32 %v540, %v626
        %v657 = vadd.f32 %v540, %v629
        %v658 = vadd.f32 %v540, %v634
        %v659 = vadd.f32 %v540, %v637
        %v660 = vadd.f32 %v540, %v642
        %v661 = vadd.f32 %v540, %v645
        %v662 = vadd.f32 %v540, %v650
        %v663 = vadd.f32 %v540, %v653
        %v664 = vld [vmem:[%s316 + $0x4] sm:$0xf]
        %v665 = vld [vmem:[%s316 + $0x8] sm:$0xf]
        %v666 = vld [vmem:[%s316 + $0xc] sm:$0xf]
        %v667 = vld [vmem:[%s316 + $0x10] sm:$0xf]
        %v668 = vld [vmem:[%s316 + $0x14] sm:$0xf]
        %v669 = vld [vmem:[%s316 + $0x18] sm:$0xf]
        %v670 = vld [vmem:[%s316 + $0x1c] sm:$0xf]
        %v671 = vld [vmem:[%s316 + $0x20] sm:$0xf]
        %v672 = vld [vmem:[%s316 + $0x24] sm:$0x1]
        %s673 = scalar_lea.vmem [#allocation8], 4
        %v674 = vld [vmem:[%s673] sm:$0x3]
        %v675 = vld [vmem:[%s316 + $0x4] sm:$0x8]
        %v676 = vld [vmem:[%s316 + $0x24] sm:$0xf]
        %s677 = scalar_lea.vmem [#allocation8], 6
        %v678 = vld [vmem:[%s677] sm:$0x3]
        %v688 = vunpack.c.l.b16 %v675
        %v689 = vunpack.c.l.b16 %v665
        %v690 = vunpack.c.l.b16 %v666
        %v691 = vunpack.c.l.b16 %v667
        %v692 = vunpack.c.l.b16 %v668
        %v693 = vunpack.c.l.b16 %v669
        %v694 = vunpack.c.l.b16 %v670
        %v695 = vunpack.c.l.b16 %v671
        %v696 = vunpack.c.l.b16 %v676
        %v697 = vpack.c.b16 %v689, %v688
        %v698 = vpack.c.b16 %v691, %v690
        %v699 = vpack.c.b16 %v693, %v692
        %v700 = vpack.c.b16 %v695, %v694
        %v701 = vpack.c.b16 %v696, %v696
        %vm702 = vsmask.f32 4352
        %v704 = vshrl.u32 %v697, 16
        %v706 = vrot.slane %v704, 3
        %v707 = vshll.u32 %v697, 16
        %v709 = vrot.slane %v707, 4
        %v710 = vor.u32 %v706, %v709
        %v712 = vshrl.u32 %v698, 16
        %v714 = vrot.slane %v712, 3
        %v715 = vshll.u32 %v698, 16
        %v717 = vrot.slane %v715, 4
        %v718 = vor.u32 %v714, %v717
        %v719 = vsel %vm702, %v710, %v718
        %v721 = vshrl.u32 %v699, 16
        %v723 = vrot.slane %v721, 3
        %v724 = vshll.u32 %v699, 16
        %v726 = vrot.slane %v724, 4
        %v727 = vor.u32 %v723, %v726
        %v728 = vsel %vm702, %v718, %v727
        %v730 = vshrl.u32 %v700, 16
        %v732 = vrot.slane %v730, 3
        %v733 = vshll.u32 %v700, 16
        %v735 = vrot.slane %v733, 4
        %v736 = vor.u32 %v732, %v735
        %v737 = vsel %vm702, %v727, %v736
        %v739 = vshrl.u32 %v701, 16
        %v741 = vrot.slane %v739, 3
        %v742 = vshll.u32 %v701, 16
        %v744 = vrot.slane %v742, 4
        %v745 = vor.u32 %v741, %v744
        %v746 = vsel %vm702, %v736, %v745
        %v748 = vsel %vm574, %v719, 0
        %v751 = vsel %vm574, %v728, 0
        %v754 = vsel %vm574, %v737, 0
        %v757 = vsel %vm574, %v746, 0
        %v760 = vsel %vm587, %v678, 0
        %762 = vmatprep.subr.bf16.mxu0 0
        %763 = vmatpush1.bf16.msra.mxu0 %v760
        %764 = vmatprep.subr.bf16.mxu0 0
        %765 = vmatpush1.bf16.msra.mxu0 0
        %766 = vmatprep.subr.bf16.mxu0 0
        %767 = vmatpush1.bf16.msra.mxu0 0
        %768 = vmatprep.subr.bf16.mxu0 0
        %769 = vmatpush1.bf16.msra.mxu0 0
        %770 = vmatprep.subr.bf16.mxu0 0
        %771 = vmatpush1.bf16.msra.mxu0 0
        %772 = vmatprep.subr.bf16.mxu0 0
        %773 = vmatpush1.bf16.msra.mxu0 0
        %774 = vmatprep.subr.bf16.mxu0 0
        %775 = vmatpush1.bf16.msra.mxu0 0
        %776 = vmatprep.subr.bf16.mxu0 0
        %777 = vmatpush1.bf16.msra.mxu0 0
        %778 = vmatprep.subr.bf16.mxu0 0
        %779 = vmatpush1.bf16.msra.mxu0 0
        %780 = vmatprep.subr.bf16.mxu0 0
        %781 = vmatpush1.bf16.msra.mxu0 0
        %782 = vmatprep.subr.bf16.mxu0 0
        %783 = vmatpush1.bf16.msra.mxu0 0
        %784 = vmatprep.subr.bf16.mxu0 0
        %785 = vmatpush1.bf16.msra.mxu0 0
        %786 = vmatprep.subr.bf16.mxu0 0
        %787 = vmatpush1.bf16.msra.mxu0 0
        %788 = vmatprep.subr.bf16.mxu0 0
        %789 = vmatpush1.bf16.msra.mxu0 0
        %790 = vmatprep.subr.bf16.mxu0 0
        %791 = vmatpush1.bf16.msra.mxu0 0
        %792 = vmatprep.subr.bf16.mxu0 0
        %793 = vmatpush1.bf16.msra.mxu0 0
        %794 = vmatprep.mubr.bf16.mxu0 0
        %795 = vmatmul.mubr.bf16.gmra.mrb[0].mxu0 %v748
        %v796 = vpop.f32.mrb[0].mxu0
        %v797 = vadd.f32 0.0, %v796
        %v798 = vpop.f32.mrb[0].mxu0
        %v799 = vpop.f32.mrb[0].mxu0
        %v800 = vadd.f32 0.0, %v799
        %v801 = vpop.f32.mrb[0].mxu0
        %802 = vmatprep.mubr.bf16.mxu0 0
        %803 = vmatmul.mubr.bf16.gmra.mrb[0].mxu0 %v751
        %v804 = vpop.f32.mrb[0].mxu0
        %v805 = vadd.f32 0.0, %v804
        %v806 = vpop.f32.mrb[0].mxu0
        %v807 = vpop.f32.mrb[0].mxu0
        %v808 = vadd.f32 0.0, %v807
        %v809 = vpop.f32.mrb[0].mxu0
        %810 = vmatprep.mubr.bf16.mxu0 0
        %811 = vmatmul.mubr.bf16.gmra.mrb[0].mxu0 %v754
        %v812 = vpop.f32.mrb[0].mxu0
        %v813 = vadd.f32 0.0, %v812
        %v814 = vpop.f32.mrb[0].mxu0
        %v815 = vpop.f32.mrb[0].mxu0
        %v816 = vadd.f32 0.0, %v815
        %v817 = vpop.f32.mrb[0].mxu0
        %818 = vmatprep.mubr.bf16.mxu0 0
        %819 = vmatmul.mubr.bf16.gmra.mrb[0].mxu0 %v757
        %v820 = vpop.f32.mrb[0].mxu0
        %v821 = vadd.f32 0.0, %v820
        %v822 = vpop.f32.mrb[0].mxu0
        %v823 = vpop.f32.mrb[0].mxu0
        %v824 = vadd.f32 0.0, %v823
        %v825 = vpop.f32.mrb[0].mxu0
        %826 = vdwg.mxu0
        %v828 = vunpack.c.l.b16 %v542
        %v829 = vpack.c.b16 %v562, %v828
        %v830 = vpack.c.b16 %v564, %v563
        %v831 = vpack.c.b16 %v566, %v565
        %v832 = vpack.c.b16 %v568, %v567
        %v833 = vpack.c.b16 %v569, %v569
        %v835 = vshrl.u32 %v829, 16
        %v837 = vrot.slane %v835, 3
        %v838 = vshll.u32 %v829, 16
        %v840 = vrot.slane %v838, 4
        %v841 = vor.u32 %v837, %v840
        %v843 = vshrl.u32 %v830, 16
        %v845 = vrot.slane %v843, 3
        %v846 = vshll.u32 %v830, 16
        %v848 = vrot.slane %v846, 4
        %v849 = vor.u32 %v845, %v848
        %v850 = vsel %vm702, %v841, %v849
        %v852 = vshrl.u32 %v831, 16
        %v854 = vrot.slane %v852, 3
        %v855 = vshll.u32 %v831, 16
        %v857 = vrot.slane %v855, 4
        %v858 = vor.u32 %v854, %v857
        %v859 = vsel %vm702, %v849, %v858
        %v861 = vshrl.u32 %v832, 16
        %v863 = vrot.slane %v861, 3
        %v864 = vshll.u32 %v832, 16
        %v866 = vrot.slane %v864, 4
        %v867 = vor.u32 %v863, %v866
        %v868 = vsel %vm702, %v858, %v867
        %v870 = vshrl.u32 %v833, 16
        %v872 = vrot.slane %v870, 3
        %v873 = vshll.u32 %v833, 16
        %v875 = vrot.slane %v873, 4
        %v876 = vor.u32 %v872, %v875
        %v877 = vsel %vm702, %v867, %v876
        %v879 = vsel %vm574, %v850, 0
        %v882 = vsel %vm574, %v859, 0
        %v885 = vsel %vm574, %v868, 0
        %v888 = vsel %vm574, %v877, 0
        %v891 = vsel %vm587, %v551, 0
        %893 = vmatprep.subr.bf16.mxu0 0
        %894 = vmatpush1.bf16.msra.mxu0 %v891
        %895 = vmatprep.subr.bf16.mxu0 0
        %896 = vmatpush1.bf16.msra.mxu0 0
        %897 = vmatprep.subr.bf16.mxu0 0
        %898 = vmatpush1.bf16.msra.mxu0 0
        %899 = vmatprep.subr.bf16.mxu0 0
        %900 = vmatpush1.bf16.msra.mxu0 0
        %901 = vmatprep.subr.bf16.mxu0 0
        %902 = vmatpush1.bf16.msra.mxu0 0
        %903 = vmatprep.subr.bf16.mxu0 0
        %904 = vmatpush1.bf16.msra.mxu0 0
        %905 = vmatprep.subr.bf16.mxu0 0
        %906 = vmatpush1.bf16.msra.mxu0 0
        %907 = vmatprep.subr.bf16.mxu0 0
        %908 = vmatpush1.bf16.msra.mxu0 0
        %909 = vmatprep.subr.bf16.mxu0 0
        %910 = vmatpush1.bf16.msra.mxu0 0
        %911 = vmatprep.subr.bf16.mxu0 0
        %912 = vmatpush1.bf16.msra.mxu0 0
        %913 = vmatprep.subr.bf16.mxu0 0
        %914 = vmatpush1.bf16.msra.mxu0 0
        %915 = vmatprep.subr.bf16.mxu0 0
        %916 = vmatpush1.bf16.msra.mxu0 0
        %917 = vmatprep.subr.bf16.mxu0 0
        %918 = vmatpush1.bf16.msra.mxu0 0
        %919 = vmatprep.subr.bf16.mxu0 0
        %920 = vmatpush1.bf16.msra.mxu0 0
        %921 = vmatprep.subr.bf16.mxu0 0
        %922 = vmatpush1.bf16.msra.mxu0 0
        %923 = vmatprep.subr.bf16.mxu0 0
        %924 = vmatpush1.bf16.msra.mxu0 0
        %925 = vmatprep.mubr.bf16.mxu0 0
        %926 = vmatmul.mubr.bf16.gmra.mrb[0].mxu0 %v879
        %v927 = vpop.f32.mrb[0].mxu0
        %v928 = vadd.f32 %v797, %v927
        %v929 = vpop.f32.mrb[0].mxu0
        %v930 = vpop.f32.mrb[0].mxu0
        %v931 = vadd.f32 %v800, %v930
        %v932 = vpop.f32.mrb[0].mxu0
        %933 = vmatprep.mubr.bf16.mxu0 0
        %934 = vmatmul.mubr.bf16.gmra.mrb[0].mxu0 %v882
        %v935 = vpop.f32.mrb[0].mxu0
        %v936 = vadd.f32 %v805, %v935
        %v937 = vpop.f32.mrb[0].mxu0
        %v938 = vpop.f32.mrb[0].mxu0
        %v939 = vadd.f32 %v808, %v938
        %v940 = vpop.f32.mrb[0].mxu0
        %941 = vmatprep.mubr.bf16.mxu0 0
        %942 = vmatmul.mubr.bf16.gmra.mrb[0].mxu0 %v885
        %v943 = vpop.f32.mrb[0].mxu0
        %v944 = vadd.f32 %v813, %v943
        %v945 = vpop.f32.mrb[0].mxu0
        %v946 = vpop.f32.mrb[0].mxu0
        %v947 = vadd.f32 %v816, %v946
        %v948 = vpop.f32.mrb[0].mxu0
        %949 = vmatprep.mubr.bf16.mxu0 0
        %950 = vmatmul.mubr.bf16.gmra.mrb[0].mxu0 %v888
        %v951 = vpop.f32.mrb[0].mxu0
        %v952 = vadd.f32 %v821, %v951
        %v953 = vpop.f32.mrb[0].mxu0
        %v954 = vpop.f32.mrb[0].mxu0
        %v955 = vadd.f32 %v824, %v954
        %v956 = vpop.f32.mrb[0].mxu0
        %957 = vdwg.mxu0
        %s958 = scalar_lea.vmem [#allocation8], 8
        %v959 = vld [vmem:[%s958] sm:$0x3]
        %v960 = vpack.c.b16 %v690, %v689
        %v961 = vpack.c.b16 %v692, %v691
        %v962 = vpack.c.b16 %v694, %v693
        %v963 = vpack.c.b16 %v696, %v695
        %v965 = vsel %vm574, %v960, 0
        %v968 = vsel %vm574, %v961, 0
        %v971 = vsel %vm574, %v962, 0
        %v974 = vsel %vm574, %v963, 0
        %v977 = vsel %vm587, %v959, 0
        %979 = vmatprep.subr.bf16.mxu0 0
        %980 = vmatpush1.bf16.msra.mxu0 %v977
        %981 = vmatprep.subr.bf16.mxu0 0
        %982 = vmatpush1.bf16.msra.mxu0 0
        %983 = vmatprep.subr.bf16.mxu0 0
        %984 = vmatpush1.bf16.msra.mxu0 0
        %985 = vmatprep.subr.bf16.mxu0 0
        %986 = vmatpush1.bf16.msra.mxu0 0
        %987 = vmatprep.subr.bf16.mxu0 0
        %988 = vmatpush1.bf16.msra.mxu0 0
        %989 = vmatprep.subr.bf16.mxu0 0
        %990 = vmatpush1.bf16.msra.mxu0 0
        %991 = vmatprep.subr.bf16.mxu0 0
        %992 = vmatpush1.bf16.msra.mxu0 0
        %993 = vmatprep.subr.bf16.mxu0 0
        %994 = vmatpush1.bf16.msra.mxu0 0
        %995 = vmatprep.subr.bf16.mxu0 0
        %996 = vmatpush1.bf16.msra.mxu0 0
        %997 = vmatprep.subr.bf16.mxu0 0
        %998 = vmatpush1.bf16.msra.mxu0 0
        %999 = vmatprep.subr.bf16.mxu0 0
        %1000 = vmatpush1.bf16.msra.mxu0 0
        %1001 = vmatprep.subr.bf16.mxu0 0
        %1002 = vmatpush1.bf16.msra.mxu0 0
        %1003 = vmatprep.subr.bf16.mxu0 0
        %1004 = vmatpush1.bf16.msra.mxu0 0
        %1005 = vmatprep.subr.bf16.mxu0 0
        %1006 = vmatpush1.bf16.msra.mxu0 0
        %1007 = vmatprep.subr.bf16.mxu0 0
        %1008 = vmatpush1.bf16.msra.mxu0 0
        %1009 = vmatprep.subr.bf16.mxu0 0
        %1010 = vmatpush1.bf16.msra.mxu0 0
        %1011 = vmatprep.mubr.bf16.mxu0 0
        %1012 = vmatmul.mubr.bf16.gmra.mrb[0].mxu0 %v965
        %v1013 = vpop.f32.mrb[0].mxu0
        %v1014 = vadd.f32 0.0, %v1013
        %v1015 = vpop.f32.mrb[0].mxu0
        %v1016 = vpop.f32.mrb[0].mxu0
        %v1017 = vadd.f32 0.0, %v1016
        %v1018 = vpop.f32.mrb[0].mxu0
        %1019 = vmatprep.mubr.bf16.mxu0 0
        %1020 = vmatmul.mubr.bf16.gmra.mrb[0].mxu0 %v968
        %v1021 = vpop.f32.mrb[0].mxu0
        %v1022 = vadd.f32 0.0, %v1021
        %v1023 = vpop.f32.mrb[0].mxu0
        %v1024 = vpop.f32.mrb[0].mxu0
        %v1025 = vadd.f32 0.0, %v1024
        %v1026 = vpop.f32.mrb[0].mxu0
        %1027 = vmatprep.mubr.bf16.mxu0 0
        %1028 = vmatmul.mubr.bf16.gmra.mrb[0].mxu0 %v971
        %v1029 = vpop.f32.mrb[0].mxu0
        %v1030 = vadd.f32 0.0, %v1029
        %v1031 = vpop.f32.mrb[0].mxu0
        %v1032 = vpop.f32.mrb[0].mxu0
        %v1033 = vadd.f32 0.0, %v1032
        %v1034 = vpop.f32.mrb[0].mxu0
        %1035 = vmatprep.mubr.bf16.mxu0 0
        %1036 = vmatmul.mubr.bf16.gmra.mrb[0].mxu0 %v974
        %v1037 = vpop.f32.mrb[0].mxu0
        %v1038 = vadd.f32 0.0, %v1037
        %v1039 = vpop.f32.mrb[0].mxu0
        %v1040 = vpop.f32.mrb[0].mxu0
        %v1041 = vadd.f32 0.0, %v1040
        %v1042 = vpop.f32.mrb[0].mxu0
        %1043 = vdwg.mxu0
        %v1044 = vadd.f32 %v656, %v1014
        %v1045 = vadd.f32 %v657, %v1017
        %v1046 = vadd.f32 %v658, %v1022
        %v1047 = vadd.f32 %v659, %v1025
        %v1048 = vadd.f32 %v660, %v1030
        %v1049 = vadd.f32 %v661, %v1033
        %v1050 = vadd.f32 %v662, %v1038
        %v1051 = vadd.f32 %v663, %v1041
        %v1052 = vld [vmem:[%s316 + $0x8] sm:$0xf]
        %v1053 = vld [vmem:[%s316 + $0xc] sm:$0xf]
        %v1054 = vld [vmem:[%s316 + $0x10] sm:$0xf]
        %v1055 = vld [vmem:[%s316 + $0x14] sm:$0xf]
        %v1056 = vld [vmem:[%s316 + $0x18] sm:$0xf]
        %v1057 = vld [vmem:[%s316 + $0x1c] sm:$0xf]
        %v1058 = vld [vmem:[%s316 + $0x20] sm:$0xf]
        %v1059 = vld [vmem:[%s316 + $0x24] sm:$0xf]
        %v1060 = vld [vmem:[%s316 + $0x28] sm:$0x1]
        %s1061 = scalar_lea.vmem [#allocation8], 10
        %v1062 = vld [vmem:[%s1061] sm:$0x3]
        %v1072 = vunpack.c.l.b16 %v1052
        %v1073 = vunpack.c.l.b16 %v1053
        %v1074 = vunpack.c.l.b16 %v1054
        %v1075 = vunpack.c.l.b16 %v1055
        %v1076 = vunpack.c.l.b16 %v1056
        %v1077 = vunpack.c.l.b16 %v1057
        %v1078 = vunpack.c.l.b16 %v1058
        %v1079 = vunpack.c.l.b16 %v1059
        %v1080 = vunpack.c.l.b16 %v1060
        %v1081 = vpack.c.b16 %v1073, %v1072
        %v1082 = vpack.c.b16 %v1075, %v1074
        %v1083 = vpack.c.b16 %v1077, %v1076
        %v1084 = vpack.c.b16 %v1079, %v1078
        %v1085 = vpack.c.b16 %v1080, %v1080
        %vm1086 = vsmask.f32 7424
        %v1088 = vshrl.u32 %v1081, 16
        %v1090 = vshll.u32 %v1081, 16
        %v1092 = vrot.slane %v1090, 1
        %v1093 = vor.u32 %v1088, %v1092
        %v1095 = vshll.u32 %v1082, 16
        %v1097 = vrot.slane %v1095, 1
        %v1098 = vsel %vm1086, %v1093, %v1097
        %v1099 = vshrl.u32 %v1082, 16
        %v1101 = vor.u32 %v1099, %v1097
        %v1103 = vshll.u32 %v1083, 16
        %v1105 = vrot.slane %v1103, 1
        %v1106 = vsel %vm1086, %v1101, %v1105
        %v1107 = vshrl.u32 %v1083, 16
        %v1109 = vor.u32 %v1107, %v1105
        %v1111 = vshll.u32 %v1084, 16
        %v1113 = vrot.slane %v1111, 1
        %v1114 = vsel %vm1086, %v1109, %v1113
        %v1115 = vshrl.u32 %v1084, 16
        %v1117 = vor.u32 %v1115, %v1113
        %v1119 = vshll.u32 %v1085, 16
        %v1121 = vrot.slane %v1119, 1
        %v1122 = vsel %vm1086, %v1117, %v1121
        %v1124 = vsel %vm574, %v1098, 0
        %v1127 = vsel %vm574, %v1106, 0
        %v1130 = vsel %vm574, %v1114, 0
        %v1133 = vsel %vm574, %v1122, 0
        %v1136 = vsel %vm587, %v1062, 0
        %1138 = vmatprep.subr.bf16.mxu0 0
        %1139 = vmatpush1.bf16.msra.mxu0 %v1136
        %1140 = vmatprep.subr.bf16.mxu0 0
        %1141 = vmatpush1.bf16.msra.mxu0 0
        %1142 = vmatprep.subr.bf16.mxu0 0
        %1143 = vmatpush1.bf16.msra.mxu0 0
        %1144 = vmatprep.subr.bf16.mxu0 0
        %1145 = vmatpush1.bf16.msra.mxu0 0
        %1146 = vmatprep.subr.bf16.mxu0 0
        %1147 = vmatpush1.bf16.msra.mxu0 0
        %1148 = vmatprep.subr.bf16.mxu0 0
        %1149 = vmatpush1.bf16.msra.mxu0 0
        %1150 = vmatprep.subr.bf16.mxu0 0
        %1151 = vmatpush1.bf16.msra.mxu0 0
        %1152 = vmatprep.subr.bf16.mxu0 0
        %1153 = vmatpush1.bf16.msra.mxu0 0
        %1154 = vmatprep.subr.bf16.mxu0 0
        %1155 = vmatpush1.bf16.msra.mxu0 0
        %1156 = vmatprep.subr.bf16.mxu0 0
        %1157 = vmatpush1.bf16.msra.mxu0 0
        %1158 = vmatprep.subr.bf16.mxu0 0
        %1159 = vmatpush1.bf16.msra.mxu0 0
        %1160 = vmatprep.subr.bf16.mxu0 0
        %1161 = vmatpush1.bf16.msra.mxu0 0
        %1162 = vmatprep.subr.bf16.mxu0 0
        %1163 = vmatpush1.bf16.msra.mxu0 0
        %1164 = vmatprep.subr.bf16.mxu0 0
        %1165 = vmatpush1.bf16.msra.mxu0 0
        %1166 = vmatprep.subr.bf16.mxu0 0
        %1167 = vmatpush1.bf16.msra.mxu0 0
        %1168 = vmatprep.subr.bf16.mxu0 0
        %1169 = vmatpush1.bf16.msra.mxu0 0
        %1170 = vmatprep.mubr.bf16.mxu0 0
        %1171 = vmatmul.mubr.bf16.gmra.mrb[0].mxu0 %v1124
        %v1172 = vpop.f32.mrb[0].mxu0
        %v1173 = vadd.f32 0.0, %v1172
        %v1174 = vpop.f32.mrb[0].mxu0
        %v1175 = vpop.f32.mrb[0].mxu0
        %v1176 = vadd.f32 0.0, %v1175
        %v1177 = vpop.f32.mrb[0].mxu0
        %1178 = vmatprep.mubr.bf16.mxu0 0
        %1179 = vmatmul.mubr.bf16.gmra.mrb[0].mxu0 %v1127
        %v1180 = vpop.f32.mrb[0].mxu0
        %v1181 = vadd.f32 0.0, %v1180
        %v1182 = vpop.f32.mrb[0].mxu0
        %v1183 = vpop.f32.mrb[0].mxu0
        %v1184 = vadd.f32 0.0, %v1183
        %v1185 = vpop.f32.mrb[0].mxu0
        %1186 = vmatprep.mubr.bf16.mxu0 0
        %1187 = vmatmul.mubr.bf16.gmra.mrb[0].mxu0 %v1130
        %v1188 = vpop.f32.mrb[0].mxu0
        %v1189 = vadd.f32 0.0, %v1188
        %v1190 = vpop.f32.mrb[0].mxu0
        %v1191 = vpop.f32.mrb[0].mxu0
        %v1192 = vadd.f32 0.0, %v1191
        %v1193 = vpop.f32.mrb[0].mxu0
        %1194 = vmatprep.mubr.bf16.mxu0 0
        %1195 = vmatmul.mubr.bf16.gmra.mrb[0].mxu0 %v1133
        %v1196 = vpop.f32.mrb[0].mxu0
        %v1197 = vadd.f32 0.0, %v1196
        %v1198 = vpop.f32.mrb[0].mxu0
        %v1199 = vpop.f32.mrb[0].mxu0
        %v1200 = vadd.f32 0.0, %v1199
        %v1201 = vpop.f32.mrb[0].mxu0
        %1202 = vdwg.mxu0
        %v1205 = vunpack.c.l.b16 %v664
        %v1206 = vunpack.c.l.b16 %v672
        %v1207 = vpack.c.b16 %v689, %v1205
        %v1208 = vpack.c.b16 %v1206, %v1206
        %v1210 = vshrl.u32 %v1207, 16
        %v1212 = vshll.u32 %v1207, 16
        %v1214 = vrot.slane %v1212, 1
        %v1215 = vor.u32 %v1210, %v1214
        %v1216 = vrot.slane %v715, 1
        %v1217 = vsel %vm1086, %v1215, %v1216
        %v1218 = vor.u32 %v712, %v1216
        %v1219 = vrot.slane %v724, 1
        %v1220 = vsel %vm1086, %v1218, %v1219
        %v1221 = vor.u32 %v721, %v1219
        %v1222 = vrot.slane %v733, 1
        %v1223 = vsel %vm1086, %v1221, %v1222
        %v1224 = vor.u32 %v730, %v1222
        %v1226 = vshll.u32 %v1208, 16
        %v1228 = vrot.slane %v1226, 1
        %v1229 = vsel %vm1086, %v1224, %v1228
        %v1231 = vsel %vm574, %v1217, 0
        %v1234 = vsel %vm574, %v1220, 0
        %v1237 = vsel %vm574, %v1223, 0
        %v1240 = vsel %vm574, %v1229, 0
        %v1243 = vsel %vm587, %v674, 0
        %1245 = vmatprep.subr.bf16.mxu0 0
        %1246 = vmatpush1.bf16.msra.mxu0 %v1243
        %1247 = vmatprep.subr.bf16.mxu0 0
        %1248 = vmatpush1.bf16.msra.mxu0 0
        %1249 = vmatprep.subr.bf16.mxu0 0
        %1250 = vmatpush1.bf16.msra.mxu0 0
        %1251 = vmatprep.subr.bf16.mxu0 0
        %1252 = vmatpush1.bf16.msra.mxu0 0
        %1253 = vmatprep.subr.bf16.mxu0 0
        %1254 = vmatpush1.bf16.msra.mxu0 0
        %1255 = vmatprep.subr.bf16.mxu0 0
        %1256 = vmatpush1.bf16.msra.mxu0 0
        %1257 = vmatprep.subr.bf16.mxu0 0
        %1258 = vmatpush1.bf16.msra.mxu0 0
        %1259 = vmatprep.subr.bf16.mxu0 0
        %1260 = vmatpush1.bf16.msra.mxu0 0
        %1261 = vmatprep.subr.bf16.mxu0 0
        %1262 = vmatpush1.bf16.msra.mxu0 0
        %1263 = vmatprep.subr.bf16.mxu0 0
        %1264 = vmatpush1.bf16.msra.mxu0 0
        %1265 = vmatprep.subr.bf16.mxu0 0
        %1266 = vmatpush1.bf16.msra.mxu0 0
        %1267 = vmatprep.subr.bf16.mxu0 0
        %1268 = vmatpush1.bf16.msra.mxu0 0
        %1269 = vmatprep.subr.bf16.mxu0 0
        %1270 = vmatpush1.bf16.msra.mxu0 0
        %1271 = vmatprep.subr.bf16.mxu0 0
        %1272 = vmatpush1.bf16.msra.mxu0 0
        %1273 = vmatprep.subr.bf16.mxu0 0
        %1274 = vmatpush1.bf16.msra.mxu0 0
        %1275 = vmatprep.subr.bf16.mxu0 0
        %1276 = vmatpush1.bf16.msra.mxu0 0
        %1277 = vmatprep.mubr.bf16.mxu0 0
        %1278 = vmatmul.mubr.bf16.gmra.mrb[0].mxu0 %v1231
        %v1279 = vpop.f32.mrb[0].mxu0
        %v1280 = vadd.f32 %v1173, %v1279
        %v1281 = vpop.f32.mrb[0].mxu0
        %v1282 = vpop.f32.mrb[0].mxu0
        %v1283 = vadd.f32 %v1176, %v1282
        %v1284 = vpop.f32.mrb[0].mxu0
        %1285 = vmatprep.mubr.bf16.mxu0 0
        %1286 = vmatmul.mubr.bf16.gmra.mrb[0].mxu0 %v1234
        %v1287 = vpop.f32.mrb[0].mxu0
        %v1288 = vadd.f32 %v1181, %v1287
        %v1289 = vpop.f32.mrb[0].mxu0
        %v1290 = vpop.f32.mrb[0].mxu0
        %v1291 = vadd.f32 %v1184, %v1290
        %v1292 = vpop.f32.mrb[0].mxu0
        %1293 = vmatprep.mubr.bf16.mxu0 0
        %1294 = vmatmul.mubr.bf16.gmra.mrb[0].mxu0 %v1237
        %v1295 = vpop.f32.mrb[0].mxu0
        %v1296 = vadd.f32 %v1189, %v1295
        %v1297 = vpop.f32.mrb[0].mxu0
        %v1298 = vpop.f32.mrb[0].mxu0
        %v1299 = vadd.f32 %v1192, %v1298
        %v1300 = vpop.f32.mrb[0].mxu0
        %1301 = vmatprep.mubr.bf16.mxu0 0
        %1302 = vmatmul.mubr.bf16.gmra.mrb[0].mxu0 %v1240
        %v1303 = vpop.f32.mrb[0].mxu0
        %v1304 = vadd.f32 %v1197, %v1303
        %v1305 = vpop.f32.mrb[0].mxu0
        %v1306 = vpop.f32.mrb[0].mxu0
        %v1307 = vadd.f32 %v1200, %v1306
        %v1308 = vpop.f32.mrb[0].mxu0
        %1309 = vdwg.mxu0
        %v1310 = vld [vmem:[%s316 + $0x8] sm:$0x8]
        %v1311 = vld [vmem:[%s316 + $0x28] sm:$0xf]
        %s1312 = scalar_lea.vmem [#allocation8], 12
        %v1313 = vld [vmem:[%s1312] sm:$0x3]
        %v1316 = vunpack.c.l.b16 %v1310
        %v1317 = vunpack.c.l.b16 %v1311
        %v1318 = vpack.c.b16 %v1073, %v1316
        %v1319 = vpack.c.b16 %v1317, %v1317
        %v1321 = vshrl.u32 %v1318, 16
        %v1323 = vrot.slane %v1321, 3
        %v1324 = vshll.u32 %v1318, 16
        %v1326 = vrot.slane %v1324, 4
        %v1327 = vor.u32 %v1323, %v1326
        %v1328 = vrot.slane %v1099, 3
        %v1329 = vrot.slane %v1095, 4
        %v1330 = vor.u32 %v1328, %v1329
        %v1331 = vsel %vm702, %v1327, %v1330
        %v1332 = vrot.slane %v1107, 3
        %v1333 = vrot.slane %v1103, 4
        %v1334 = vor.u32 %v1332, %v1333
        %v1335 = vsel %vm702, %v1330, %v1334
        %v1336 = vrot.slane %v1115, 3
        %v1337 = vrot.slane %v1111, 4
        %v1338 = vor.u32 %v1336, %v1337
        %v1339 = vsel %vm702, %v1334, %v1338
        %v1341 = vshrl.u32 %v1319, 16
        %v1343 = vrot.slane %v1341, 3
        %v1344 = vshll.u32 %v1319, 16
        %v1346 = vrot.slane %v1344, 4
        %v1347 = vor.u32 %v1343, %v1346
        %v1348 = vsel %vm702, %v1338, %v1347
        %v1350 = vsel %vm574, %v1331, 0
        %v1353 = vsel %vm574, %v1335, 0
        %v1356 = vsel %vm574, %v1339, 0
        %v1359 = vsel %vm574, %v1348, 0
        %v1362 = vsel %vm587, %v1313, 0
        %1364 = vmatprep.subr.bf16.mxu0 0
        %1365 = vmatpush1.bf16.msra.mxu0 %v1362
        %1366 = vmatprep.subr.bf16.mxu0 0
        %1367 = vmatpush1.bf16.msra.mxu0 0
        %1368 = vmatprep.subr.bf16.mxu0 0
        %1369 = vmatpush1.bf16.msra.mxu0 0
        %1370 = vmatprep.subr.bf16.mxu0 0
        %1371 = vmatpush1.bf16.msra.mxu0 0
        %1372 = vmatprep.subr.bf16.mxu0 0
        %1373 = vmatpush1.bf16.msra.mxu0 0
        %1374 = vmatprep.subr.bf16.mxu0 0
        %1375 = vmatpush1.bf16.msra.mxu0 0
        %1376 = vmatprep.subr.bf16.mxu0 0
        %1377 = vmatpush1.bf16.msra.mxu0 0
        %1378 = vmatprep.subr.bf16.mxu0 0
        %1379 = vmatpush1.bf16.msra.mxu0 0
        %1380 = vmatprep.subr.bf16.mxu0 0
        %1381 = vmatpush1.bf16.msra.mxu0 0
        %1382 = vmatprep.subr.bf16.mxu0 0
        %1383 = vmatpush1.bf16.msra.mxu0 0
        %1384 = vmatprep.subr.bf16.mxu0 0
        %1385 = vmatpush1.bf16.msra.mxu0 0
        %1386 = vmatprep.subr.bf16.mxu0 0
        %1387 = vmatpush1.bf16.msra.mxu0 0
        %1388 = vmatprep.subr.bf16.mxu0 0
        %1389 = vmatpush1.bf16.msra.mxu0 0
        %1390 = vmatprep.subr.bf16.mxu0 0
        %1391 = vmatpush1.bf16.msra.mxu0 0
        %1392 = vmatprep.subr.bf16.mxu0 0
        %1393 = vmatpush1.bf16.msra.mxu0 0
        %1394 = vmatprep.subr.bf16.mxu0 0
        %1395 = vmatpush1.bf16.msra.mxu0 0
        %1396 = vmatprep.mubr.bf16.mxu0 0
        %1397 = vmatmul.mubr.bf16.gmra.mrb[0].mxu0 %v1350
        %v1398 = vpop.f32.mrb[0].mxu0
        %v1399 = vadd.f32 0.0, %v1398
        %v1400 = vpop.f32.mrb[0].mxu0
        %v1401 = vpop.f32.mrb[0].mxu0
        %v1402 = vadd.f32 0.0, %v1401
        %v1403 = vpop.f32.mrb[0].mxu0
        %1404 = vmatprep.mubr.bf16.mxu0 0
        %1405 = vmatmul.mubr.bf16.gmra.mrb[0].mxu0 %v1353
        %v1406 = vpop.f32.mrb[0].mxu0
        %v1407 = vadd.f32 0.0, %v1406
        %v1408 = vpop.f32.mrb[0].mxu0
        %v1409 = vpop.f32.mrb[0].mxu0
        %v1410 = vadd.f32 0.0, %v1409
        %v1411 = vpop.f32.mrb[0].mxu0
        %1412 = vmatprep.mubr.bf16.mxu0 0
        %1413 = vmatmul.mubr.bf16.gmra.mrb[0].mxu0 %v1356
        %v1414 = vpop.f32.mrb[0].mxu0
        %v1415 = vadd.f32 0.0, %v1414
        %v1416 = vpop.f32.mrb[0].mxu0
        %v1417 = vpop.f32.mrb[0].mxu0
        %v1418 = vadd.f32 0.0, %v1417
        %v1419 = vpop.f32.mrb[0].mxu0
        %1420 = vmatprep.mubr.bf16.mxu0 0
        %1421 = vmatmul.mubr.bf16.gmra.mrb[0].mxu0 %v1359
        %v1422 = vpop.f32.mrb[0].mxu0
        %v1423 = vadd.f32 0.0, %v1422
        %v1424 = vpop.f32.mrb[0].mxu0
        %v1425 = vpop.f32.mrb[0].mxu0
        %v1426 = vadd.f32 0.0, %v1425
        %v1427 = vpop.f32.mrb[0].mxu0
        %1428 = vdwg.mxu0
        %v1429 = vadd.f32 %v928, %v1399
        %v1430 = vadd.f32 %v931, %v1402
        %v1431 = vadd.f32 %v936, %v1407
        %v1432 = vadd.f32 %v939, %v1410
        %v1433 = vadd.f32 %v944, %v1415
        %v1434 = vadd.f32 %v947, %v1418
        %v1435 = vadd.f32 %v952, %v1423
        %v1436 = vadd.f32 %v955, %v1426
        %s1437 = scalar_lea.vmem [#allocation8], 14
        %v1438 = vld [vmem:[%s1437] sm:$0x3]
        %v1439 = vpack.c.b16 %v1074, %v1073
        %v1440 = vpack.c.b16 %v1076, %v1075
        %v1441 = vpack.c.b16 %v1078, %v1077
        %v1442 = vpack.c.b16 %v1317, %v1079
        %v1444 = vsel %vm574, %v1439, 0
        %v1447 = vsel %vm574, %v1440, 0
        %v1450 = vsel %vm574, %v1441, 0
        %v1453 = vsel %vm574, %v1442, 0
        %v1456 = vsel %vm587, %v1438, 0
        %1458 = vmatprep.subr.bf16.mxu0 0
        %1459 = vmatpush1.bf16.msra.mxu0 %v1456
        %1460 = vmatprep.subr.bf16.mxu0 0
        %1461 = vmatpush1.bf16.msra.mxu0 0
        %1462 = vmatprep.subr.bf16.mxu0 0
        %1463 = vmatpush1.bf16.msra.mxu0 0
        %1464 = vmatprep.subr.bf16.mxu0 0
        %1465 = vmatpush1.bf16.msra.mxu0 0
        %1466 = vmatprep.subr.bf16.mxu0 0
        %1467 = vmatpush1.bf16.msra.mxu0 0
        %1468 = vmatprep.subr.bf16.mxu0 0
        %1469 = vmatpush1.bf16.msra.mxu0 0
        %1470 = vmatprep.subr.bf16.mxu0 0
        %1471 = vmatpush1.bf16.msra.mxu0 0
        %1472 = vmatprep.subr.bf16.mxu0 0
        %1473 = vmatpush1.bf16.msra.mxu0 0
        %1474 = vmatprep.subr.bf16.mxu0 0
        %1475 = vmatpush1.bf16.msra.mxu0 0
        %1476 = vmatprep.subr.bf16.mxu0 0
        %1477 = vmatpush1.bf16.msra.mxu0 0
        %1478 = vmatprep.subr.bf16.mxu0 0
        %1479 = vmatpush1.bf16.msra.mxu0 0
        %1480 = vmatprep.subr.bf16.mxu0 0
        %1481 = vmatpush1.bf16.msra.mxu0 0
        %1482 = vmatprep.subr.bf16.mxu0 0
        %1483 = vmatpush1.bf16.msra.mxu0 0
        %1484 = vmatprep.subr.bf16.mxu0 0
        %1485 = vmatpush1.bf16.msra.mxu0 0
        %1486 = vmatprep.subr.bf16.mxu0 0
        %1487 = vmatpush1.bf16.msra.mxu0 0
        %1488 = vmatprep.subr.bf16.mxu0 0
        %1489 = vmatpush1.bf16.msra.mxu0 0
        %1490 = vmatprep.mubr.bf16.mxu0 0
        %1491 = vmatmul.mubr.bf16.gmra.mrb[0].mxu0 %v1444
        %v1492 = vpop.f32.mrb[0].mxu0
        %v1493 = vadd.f32 0.0, %v1492
        %v1494 = vpop.f32.mrb[0].mxu0
        %v1495 = vpop.f32.mrb[0].mxu0
        %v1496 = vadd.f32 0.0, %v1495
        %v1497 = vpop.f32.mrb[0].mxu0
        %1498 = vmatprep.mubr.bf16.mxu0 0
        %1499 = vmatmul.mubr.bf16.gmra.mrb[0].mxu0 %v1447
        %v1500 = vpop.f32.mrb[0].mxu0
        %v1501 = vadd.f32 0.0, %v1500
        %v1502 = vpop.f32.mrb[0].mxu0
        %v1503 = vpop.f32.mrb[0].mxu0
        %v1504 = vadd.f32 0.0, %v1503
        %v1505 = vpop.f32.mrb[0].mxu0
        %1506 = vmatprep.mubr.bf16.mxu0 0
        %1507 = vmatmul.mubr.bf16.gmra.mrb[0].mxu0 %v1450
        %v1508 = vpop.f32.mrb[0].mxu0
        %v1509 = vadd.f32 0.0, %v1508
        %v1510 = vpop.f32.mrb[0].mxu0
        %v1511 = vpop.f32.mrb[0].mxu0
        %v1512 = vadd.f32 0.0, %v1511
        %v1513 = vpop.f32.mrb[0].mxu0
        %1514 = vmatprep.mubr.bf16.mxu0 0
        %1515 = vmatmul.mubr.bf16.gmra.mrb[0].mxu0 %v1453
        %v1516 = vpop.f32.mrb[0].mxu0
        %v1517 = vadd.f32 0.0, %v1516
        %v1518 = vpop.f32.mrb[0].mxu0
        %v1519 = vpop.f32.mrb[0].mxu0
        %v1520 = vadd.f32 0.0, %v1519
        %v1521 = vpop.f32.mrb[0].mxu0
        %1522 = vdwg.mxu0
        %v1523 = vadd.f32 %v1044, %v1493
        %v1524 = vadd.f32 %v1045, %v1496
        %v1525 = vadd.f32 %v1046, %v1501
        %v1526 = vadd.f32 %v1047, %v1504
        %v1527 = vadd.f32 %v1048, %v1509
        %v1528 = vadd.f32 %v1049, %v1512
        %v1529 = vadd.f32 %v1050, %v1517
        %v1530 = vadd.f32 %v1051, %v1520
        %v1531 = vld [vmem:[%s316 + $0xc] sm:$0xf]
        %v1532 = vld [vmem:[%s316 + $0x10] sm:$0xf]
        %v1533 = vld [vmem:[%s316 + $0x14] sm:$0xf]
        %v1534 = vld [vmem:[%s316 + $0x18] sm:$0xf]
        %v1535 = vld [vmem:[%s316 + $0x1c] sm:$0xf]
        %v1536 = vld [vmem:[%s316 + $0x20] sm:$0xf]
        %v1537 = vld [vmem:[%s316 + $0x24] sm:$0xf]
        %v1538 = vld [vmem:[%s316 + $0x28] sm:$0xf]
        %v1539 = vld [vmem:[%s316 + $0x2c] sm:$0x1]
        %s1540 = scalar_lea.vmem [#allocation8], 16
        %v1541 = vld [vmem:[%s1540] sm:$0x3]
        %v1551 = vunpack.c.l.b16 %v1531
        %v1552 = vunpack.c.l.b16 %v1532
        %v1553 = vunpack.c.l.b16 %v1533
        %v1554 = vunpack.c.l.b16 %v1534
        %v1555 = vunpack.c.l.b16 %v1535
        %v1556 = vunpack.c.l.b16 %v1536
        %v1557 = vunpack.c.l.b16 %v1537
        %v1558 = vunpack.c.l.b16 %v1538
        %v1559 = vunpack.c.l.b16 %v1539
        %v1560 = vpack.c.b16 %v1552, %v1551
        %v1561 = vpack.c.b16 %v1554, %v1553
        %v1562 = vpack.c.b16 %v1556, %v1555
        %v1563 = vpack.c.b16 %v1558, %v1557
        %v1564 = vpack.c.b16 %v1559, %v1559
        %v1566 = vshrl.u32 %v1560, 16
        %v1568 = vshll.u32 %v1560, 16
        %v1570 = vrot.slane %v1568, 1
        %v1571 = vor.u32 %v1566, %v1570
        %v1573 = vshll.u32 %v1561, 16
        %v1575 = vrot.slane %v1573, 1
        %v1576 = vsel %vm1086, %v1571, %v1575
        %v1577 = vshrl.u32 %v1561, 16
        %v1579 = vor.u32 %v1577, %v1575
        %v1581 = vshll.u32 %v1562, 16
        %v1583 = vrot.slane %v1581, 1
        %v1584 = vsel %vm1086, %v1579, %v1583
        %v1585 = vshrl.u32 %v1562, 16
        %v1587 = vor.u32 %v1585, %v1583
        %v1589 = vshll.u32 %v1563, 16
        %v1591 = vrot.slane %v1589, 1
        %v1592 = vsel %vm1086, %v1587, %v1591
        %v1593 = vshrl.u32 %v1563, 16
        %v1595 = vor.u32 %v1593, %v1591
        %v1597 = vshll.u32 %v1564, 16
        %v1599 = vrot.slane %v1597, 1
        %v1600 = vsel %vm1086, %v1595, %v1599
        %v1602 = vsel %vm574, %v1576, 0
        %v1605 = vsel %vm574, %v1584, 0
        %v1608 = vsel %vm574, %v1592, 0
        %v1611 = vsel %vm574, %v1600, 0
        %v1614 = vsel %vm587, %v1541, 0
        %1616 = vmatprep.subr.bf16.mxu0 0
        %1617 = vmatpush1.bf16.msra.mxu0 %v1614
        %1618 = vmatprep.subr.bf16.mxu0 0
        %1619 = vmatpush1.bf16.msra.mxu0 0
        %1620 = vmatprep.subr.bf16.mxu0 0
        %1621 = vmatpush1.bf16.msra.mxu0 0
        %1622 = vmatprep.subr.bf16.mxu0 0
        %1623 = vmatpush1.bf16.msra.mxu0 0
        %1624 = vmatprep.subr.bf16.mxu0 0
        %1625 = vmatpush1.bf16.msra.mxu0 0
        %1626 = vmatprep.subr.bf16.mxu0 0
        %1627 = vmatpush1.bf16.msra.mxu0 0
        %1628 = vmatprep.subr.bf16.mxu0 0
        %1629 = vmatpush1.bf16.msra.mxu0 0
        %1630 = vmatprep.subr.bf16.mxu0 0
        %1631 = vmatpush1.bf16.msra.mxu0 0
        %1632 = vmatprep.subr.bf16.mxu0 0
        %1633 = vmatpush1.bf16.msra.mxu0 0
        %1634 = vmatprep.subr.bf16.mxu0 0
        %1635 = vmatpush1.bf16.msra.mxu0 0
        %1636 = vmatprep.subr.bf16.mxu0 0
        %1637 = vmatpush1.bf16.msra.mxu0 0
        %1638 = vmatprep.subr.bf16.mxu0 0
        %1639 = vmatpush1.bf16.msra.mxu0 0
        %1640 = vmatprep.subr.bf16.mxu0 0
        %1641 = vmatpush1.bf16.msra.mxu0 0
        %1642 = vmatprep.subr.bf16.mxu0 0
        %1643 = vmatpush1.bf16.msra.mxu0 0
        %1644 = vmatprep.subr.bf16.mxu0 0
        %1645 = vmatpush1.bf16.msra.mxu0 0
        %1646 = vmatprep.subr.bf16.mxu0 0
        %1647 = vmatpush1.bf16.msra.mxu0 0
        %1648 = vmatprep.mubr.bf16.mxu0 0
        %1649 = vmatmul.mubr.bf16.gmra.mrb[0].mxu0 %v1602
        %v1650 = vpop.f32.mrb[0].mxu0
        %v1651 = vadd.f32 0.0, %v1650
        %v1652 = vpop.f32.mrb[0].mxu0
        %v1653 = vpop.f32.mrb[0].mxu0
        %v1654 = vadd.f32 0.0, %v1653
        %v1655 = vpop.f32.mrb[0].mxu0
        %1656 = vmatprep.mubr.bf16.mxu0 0
        %1657 = vmatmul.mubr.bf16.gmra.mrb[0].mxu0 %v1605
        %v1658 = vpop.f32.mrb[0].mxu0
        %v1659 = vadd.f32 0.0, %v1658
        %v1660 = vpop.f32.mrb[0].mxu0
        %v1661 = vpop.f32.mrb[0].mxu0
        %v1662 = vadd.f32 0.0, %v1661
        %v1663 = vpop.f32.mrb[0].mxu0
        %1664 = vmatprep.mubr.bf16.mxu0 0
        %1665 = vmatmul.mubr.bf16.gmra.mrb[0].mxu0 %v1608
        %v1666 = vpop.f32.mrb[0].mxu0
        %v1667 = vadd.f32 0.0, %v1666
        %v1668 = vpop.f32.mrb[0].mxu0
        %v1669 = vpop.f32.mrb[0].mxu0
        %v1670 = vadd.f32 0.0, %v1669
        %v1671 = vpop.f32.mrb[0].mxu0
        %1672 = vmatprep.mubr.bf16.mxu0 0
        %1673 = vmatmul.mubr.bf16.gmra.mrb[0].mxu0 %v1611
        %v1674 = vpop.f32.mrb[0].mxu0
        %v1675 = vadd.f32 0.0, %v1674
        %v1676 = vpop.f32.mrb[0].mxu0
        %v1677 = vpop.f32.mrb[0].mxu0
        %v1678 = vadd.f32 0.0, %v1677
        %v1679 = vpop.f32.mrb[0].mxu0
        %1680 = vdwg.mxu0
        %v1681 = vadd.f32 %v1280, %v1651
        %v1682 = vadd.f32 %v1283, %v1654
        %v1683 = vadd.f32 %v1288, %v1659
        %v1684 = vadd.f32 %v1291, %v1662
        %v1685 = vadd.f32 %v1296, %v1667
        %v1686 = vadd.f32 %v1299, %v1670
        %v1687 = vadd.f32 %v1304, %v1675
        %v1688 = vadd.f32 %v1307, %v1678
        %v1689 = vld [vmem:[%s325] sm:$0x8]
        %v1690 = vld [vmem:[%s325 + $0x4] sm:$0xf]
        %v1691 = vld [vmem:[%s325 + $0x8] sm:$0xf]
        %v1692 = vld [vmem:[%s325 + $0xc] sm:$0xf]
        %v1693 = vld [vmem:[%s325 + $0x10] sm:$0xf]
        %v1694 = vld [vmem:[%s325 + $0x14] sm:$0xf]
        %v1695 = vld [vmem:[%s325 + $0x18] sm:$0xf]
        %v1696 = vld [vmem:[%s325 + $0x1c] sm:$0xf]
        %v1697 = vld [vmem:[%s325 + $0x20] sm:$0xf]
        %s1698 = scalar_lea.vmem [#allocation8], 18
        %v1699 = vld [vmem:[%s1698] sm:$0x3]
        %v1709 = vunpack.c.l.b16 %v1689
        %v1710 = vunpack.c.l.b16 %v1690
        %v1711 = vunpack.c.l.b16 %v1691
        %v1712 = vunpack.c.l.b16 %v1692
        %v1713 = vunpack.c.l.b16 %v1693
        %v1714 = vunpack.c.l.b16 %v1694
        %v1715 = vunpack.c.l.b16 %v1695
        %v1716 = vunpack.c.l.b16 %v1696
        %v1717 = vunpack.c.l.b16 %v1697
        %v1718 = vpack.c.b16 %v1710, %v1709
        %v1719 = vpack.c.b16 %v1712, %v1711
        %v1720 = vpack.c.b16 %v1714, %v1713
        %v1721 = vpack.c.b16 %v1716, %v1715
        %v1722 = vpack.c.b16 %v1717, %v1717
        %v1724 = vshrl.u32 %v1718, 16
        %v1726 = vrot.slane %v1724, 3
        %v1727 = vshll.u32 %v1718, 16
        %v1729 = vrot.slane %v1727, 4
        %v1730 = vor.u32 %v1726, %v1729
        %v1732 = vshrl.u32 %v1719, 16
        %v1734 = vrot.slane %v1732, 3
        %v1735 = vshll.u32 %v1719, 16
        %v1737 = vrot.slane %v1735, 4
        %v1738 = vor.u32 %v1734, %v1737
        %v1739 = vsel %vm702, %v1730, %v1738
        %v1741 = vshrl.u32 %v1720, 16
        %v1743 = vrot.slane %v1741, 3
        %v1744 = vshll.u32 %v1720, 16
        %v1746 = vrot.slane %v1744, 4
        %v1747 = vor.u32 %v1743, %v1746
        %v1748 = vsel %vm702, %v1738, %v1747
        %v1750 = vshrl.u32 %v1721, 16
        %v1752 = vrot.slane %v1750, 3
        %v1753 = vshll.u32 %v1721, 16
        %v1755 = vrot.slane %v1753, 4
        %v1756 = vor.u32 %v1752, %v1755
        %v1757 = vsel %vm702, %v1747, %v1756
        %v1759 = vshrl.u32 %v1722, 16
        %v1761 = vrot.slane %v1759, 3
        %v1762 = vshll.u32 %v1722, 16
        %v1764 = vrot.slane %v1762, 4
        %v1765 = vor.u32 %v1761, %v1764
        %v1766 = vsel %vm702, %v1756, %v1765
        %v1768 = vsel %vm574, %v1739, 0
        %v1771 = vsel %vm574, %v1748, 0
        %v1774 = vsel %vm574, %v1757, 0
        %v1777 = vsel %vm574, %v1766, 0
        %v1780 = vsel %vm587, %v1699, 0
        %1782 = vmatprep.subr.bf16.mxu0 0
        %1783 = vmatpush1.bf16.msra.mxu0 %v1780
        %1784 = vmatprep.subr.bf16.mxu0 0
        %1785 = vmatpush1.bf16.msra.mxu0 0
        %1786 = vmatprep.subr.bf16.mxu0 0
        %1787 = vmatpush1.bf16.msra.mxu0 0
        %1788 = vmatprep.subr.bf16.mxu0 0
        %1789 = vmatpush1.bf16.msra.mxu0 0
        %1790 = vmatprep.subr.bf16.mxu0 0
        %1791 = vmatpush1.bf16.msra.mxu0 0
        %1792 = vmatprep.subr.bf16.mxu0 0
        %1793 = vmatpush1.bf16.msra.mxu0 0
        %1794 = vmatprep.subr.bf16.mxu0 0
        %1795 = vmatpush1.bf16.msra.mxu0 0
        %1796 = vmatprep.subr.bf16.mxu0 0
        %1797 = vmatpush1.bf16.msra.mxu0 0
        %1798 = vmatprep.subr.bf16.mxu0 0
        %1799 = vmatpush1.bf16.msra.mxu0 0
        %1800 = vmatprep.subr.bf16.mxu0 0
        %1801 = vmatpush1.bf16.msra.mxu0 0
        %1802 = vmatprep.subr.bf16.mxu0 0
        %1803 = vmatpush1.bf16.msra.mxu0 0
        %1804 = vmatprep.subr.bf16.mxu0 0
        %1805 = vmatpush1.bf16.msra.mxu0 0
        %1806 = vmatprep.subr.bf16.mxu0 0
        %1807 = vmatpush1.bf16.msra.mxu0 0
        %1808 = vmatprep.subr.bf16.mxu0 0
        %1809 = vmatpush1.bf16.msra.mxu0 0
        %1810 = vmatprep.subr.bf16.mxu0 0
        %1811 = vmatpush1.bf16.msra.mxu0 0
        %1812 = vmatprep.subr.bf16.mxu0 0
        %1813 = vmatpush1.bf16.msra.mxu0 0
        %1814 = vmatprep.mubr.bf16.mxu0 0
        %1815 = vmatmul.mubr.bf16.gmra.mrb[0].mxu0 %v1768
        %v1816 = vpop.f32.mrb[0].mxu0
        %v1817 = vadd.f32 0.0, %v1816
        %v1818 = vpop.f32.mrb[0].mxu0
        %v1819 = vpop.f32.mrb[0].mxu0
        %v1820 = vadd.f32 0.0, %v1819
        %v1821 = vpop.f32.mrb[0].mxu0
        %1822 = vmatprep.mubr.bf16.mxu0 0
        %1823 = vmatmul.mubr.bf16.gmra.mrb[0].mxu0 %v1771
        %v1824 = vpop.f32.mrb[0].mxu0
        %v1825 = vadd.f32 0.0, %v1824
        %v1826 = vpop.f32.mrb[0].mxu0
        %v1827 = vpop.f32.mrb[0].mxu0
        %v1828 = vadd.f32 0.0, %v1827
        %v1829 = vpop.f32.mrb[0].mxu0
        %1830 = vmatprep.mubr.bf16.mxu0 0
        %1831 = vmatmul.mubr.bf16.gmra.mrb[0].mxu0 %v1774
        %v1832 = vpop.f32.mrb[0].mxu0
        %v1833 = vadd.f32 0.0, %v1832
        %v1834 = vpop.f32.mrb[0].mxu0
        %v1835 = vpop.f32.mrb[0].mxu0
        %v1836 = vadd.f32 0.0, %v1835
        %v1837 = vpop.f32.mrb[0].mxu0
        %1838 = vmatprep.mubr.bf16.mxu0 0
        %1839 = vmatmul.mubr.bf16.gmra.mrb[0].mxu0 %v1777
        %v1840 = vpop.f32.mrb[0].mxu0
        %v1841 = vadd.f32 0.0, %v1840
        %v1842 = vpop.f32.mrb[0].mxu0
        %v1843 = vpop.f32.mrb[0].mxu0
        %v1844 = vadd.f32 0.0, %v1843
        %v1845 = vpop.f32.mrb[0].mxu0
        %1846 = vdwg.mxu0
        %v1847 = vadd.f32 %v1429, %v1817
        %v1848 = vadd.f32 %v1430, %v1820
        %v1849 = vadd.f32 %v1431, %v1825
        %v1850 = vadd.f32 %v1432, %v1828
        %v1851 = vadd.f32 %v1433, %v1833
        %v1852 = vadd.f32 %v1434, %v1836
        %v1853 = vadd.f32 %v1435, %v1841
        %v1854 = vadd.f32 %v1436, %v1844
        %s1855 = scalar_lea.vmem [#allocation8], 20
        %v1856 = vld [vmem:[%s1855] sm:$0x3]
        %v1857 = vpack.c.b16 %v1711, %v1710
        %v1858 = vpack.c.b16 %v1713, %v1712
        %v1859 = vpack.c.b16 %v1715, %v1714
        %v1860 = vpack.c.b16 %v1717, %v1716
        %v1862 = vsel %vm574, %v1857, 0
        %v1865 = vsel %vm574, %v1858, 0
        %v1868 = vsel %vm574, %v1859, 0
        %v1871 = vsel %vm574, %v1860, 0
        %v1874 = vsel %vm587, %v1856, 0
        %1876 = vmatprep.subr.bf16.mxu0 0
        %1877 = vmatpush1.bf16.msra.mxu0 %v1874
        %1878 = vmatprep.subr.bf16.mxu0 0
        %1879 = vmatpush1.bf16.msra.mxu0 0
        %1880 = vmatprep.subr.bf16.mxu0 0
        %1881 = vmatpush1.bf16.msra.mxu0 0
        %1882 = vmatprep.subr.bf16.mxu0 0
        %1883 = vmatpush1.bf16.msra.mxu0 0
        %1884 = vmatprep.subr.bf16.mxu0 0
        %1885 = vmatpush1.bf16.msra.mxu0 0
        %1886 = vmatprep.subr.bf16.mxu0 0
        %1887 = vmatpush1.bf16.msra.mxu0 0
        %1888 = vmatprep.subr.bf16.mxu0 0
        %1889 = vmatpush1.bf16.msra.mxu0 0
        %1890 = vmatprep.subr.bf16.mxu0 0
        %1891 = vmatpush1.bf16.msra.mxu0 0
        %1892 = vmatprep.subr.bf16.mxu0 0
        %1893 = vmatpush1.bf16.msra.mxu0 0
        %1894 = vmatprep.subr.bf16.mxu0 0
        %1895 = vmatpush1.bf16.msra.mxu0 0
        %1896 = vmatprep.subr.bf16.mxu0 0
        %1897 = vmatpush1.bf16.msra.mxu0 0
        %1898 = vmatprep.subr.bf16.mxu0 0
        %1899 = vmatpush1.bf16.msra.mxu0 0
        %1900 = vmatprep.subr.bf16.mxu0 0
        %1901 = vmatpush1.bf16.msra.mxu0 0
        %1902 = vmatprep.subr.bf16.mxu0 0
        %1903 = vmatpush1.bf16.msra.mxu0 0
        %1904 = vmatprep.subr.bf16.mxu0 0
        %1905 = vmatpush1.bf16.msra.mxu0 0
        %1906 = vmatprep.subr.bf16.mxu0 0
        %1907 = vmatpush1.bf16.msra.mxu0 0
        %1908 = vmatprep.mubr.bf16.mxu0 0
        %1909 = vmatmul.mubr.bf16.gmra.mrb[0].mxu0 %v1862
        %v1910 = vpop.f32.mrb[0].mxu0
        %v1911 = vadd.f32 0.0, %v1910
        %v1912 = vpop.f32.mrb[0].mxu0
        %v1913 = vpop.f32.mrb[0].mxu0
        %v1914 = vadd.f32 0.0, %v1913
        %v1915 = vpop.f32.mrb[0].mxu0
        %1916 = vmatprep.mubr.bf16.mxu0 0
        %1917 = vmatmul.mubr.bf16.gmra.mrb[0].mxu0 %v1865
        %v1918 = vpop.f32.mrb[0].mxu0
        %v1919 = vadd.f32 0.0, %v1918
        %v1920 = vpop.f32.mrb[0].mxu0
        %v1921 = vpop.f32.mrb[0].mxu0
        %v1922 = vadd.f32 0.0, %v1921
        %v1923 = vpop.f32.mrb[0].mxu0
        %1924 = vmatprep.mubr.bf16.mxu0 0
        %1925 = vmatmul.mubr.bf16.gmra.mrb[0].mxu0 %v1868
        %v1926 = vpop.f32.mrb[0].mxu0
        %v1927 = vadd.f32 0.0, %v1926
        %v1928 = vpop.f32.mrb[0].mxu0
        %v1929 = vpop.f32.mrb[0].mxu0
        %v1930 = vadd.f32 0.0, %v1929
        %v1931 = vpop.f32.mrb[0].mxu0
        %1932 = vmatprep.mubr.bf16.mxu0 0
        %1933 = vmatmul.mubr.bf16.gmra.mrb[0].mxu0 %v1871
        %v1934 = vpop.f32.mrb[0].mxu0
        %v1935 = vadd.f32 0.0, %v1934
        %v1936 = vpop.f32.mrb[0].mxu0
        %v1937 = vpop.f32.mrb[0].mxu0
        %v1938 = vadd.f32 0.0, %v1937
        %v1939 = vpop.f32.mrb[0].mxu0
        %1940 = vdwg.mxu0
        %v1941 = vadd.f32 %v1523, %v1911
        %v1942 = vadd.f32 %v1524, %v1914
        %v1943 = vadd.f32 %v1525, %v1919
        %v1944 = vadd.f32 %v1526, %v1922
        %v1945 = vadd.f32 %v1527, %v1927
        %v1946 = vadd.f32 %v1528, %v1930
        %v1947 = vadd.f32 %v1529, %v1935
        %v1948 = vadd.f32 %v1530, %v1938
        %v1949 = vld [vmem:[%s325 + $0x4] sm:$0xf]
        %v1950 = vld [vmem:[%s325 + $0x8] sm:$0xf]
        %v1951 = vld [vmem:[%s325 + $0xc] sm:$0xf]
        %v1952 = vld [vmem:[%s325 + $0x10] sm:$0xf]
        %v1953 = vld [vmem:[%s325 + $0x14] sm:$0xf]
        %v1954 = vld [vmem:[%s325 + $0x18] sm:$0xf]
        %v1955 = vld [vmem:[%s325 + $0x1c] sm:$0xf]
        %v1956 = vld [vmem:[%s325 + $0x20] sm:$0xf]
        %v1957 = vld [vmem:[%s325 + $0x24] sm:$0x1]
        %s1958 = scalar_lea.vmem [#allocation8], 22
        %v1959 = vld [vmem:[%s1958] sm:$0x3]
        %v1969 = vunpack.c.l.b16 %v1949
        %v1970 = vunpack.c.l.b16 %v1950
        %v1971 = vunpack.c.l.b16 %v1951
        %v1972 = vunpack.c.l.b16 %v1952
        %v1973 = vunpack.c.l.b16 %v1953
        %v1974 = vunpack.c.l.b16 %v1954
        %v1975 = vunpack.c.l.b16 %v1955
        %v1976 = vunpack.c.l.b16 %v1956
        %v1977 = vunpack.c.l.b16 %v1957
        %v1978 = vpack.c.b16 %v1970, %v1969
        %v1979 = vpack.c.b16 %v1972, %v1971
        %v1980 = vpack.c.b16 %v1974, %v1973
        %v1981 = vpack.c.b16 %v1976, %v1975
        %v1982 = vpack.c.b16 %v1977, %v1977
        %v1984 = vshrl.u32 %v1978, 16
        %v1986 = vshll.u32 %v1978, 16
        %v1988 = vrot.slane %v1986, 1
        %v1989 = vor.u32 %v1984, %v1988
        %v1991 = vshll.u32 %v1979, 16
        %v1993 = vrot.slane %v1991, 1
        %v1994 = vsel %vm1086, %v1989, %v1993
        %v1995 = vshrl.u32 %v1979, 16
        %v1997 = vor.u32 %v1995, %v1993
        %v1999 = vshll.u32 %v1980, 16
        %v2001 = vrot.slane %v1999, 1
        %v2002 = vsel %vm1086, %v1997, %v2001
        %v2003 = vshrl.u32 %v1980, 16
        %v2005 = vor.u32 %v2003, %v2001
        %v2007 = vshll.u32 %v1981, 16
        %v2009 = vrot.slane %v2007, 1
        %v2010 = vsel %vm1086, %v2005, %v2009
        %v2011 = vshrl.u32 %v1981, 16
        %v2013 = vor.u32 %v2011, %v2009
        %v2015 = vshll.u32 %v1982, 16
        %v2017 = vrot.slane %v2015, 1
        %v2018 = vsel %vm1086, %v2013, %v2017
        %v2020 = vsel %vm574, %v1994, 0
        %v2023 = vsel %vm574, %v2002, 0
        %v2026 = vsel %vm574, %v2010, 0
        %v2029 = vsel %vm574, %v2018, 0
        %v2032 = vsel %vm587, %v1959, 0
        %2034 = vmatprep.subr.bf16.mxu0 0
        %2035 = vmatpush1.bf16.msra.mxu0 %v2032
        %2036 = vmatprep.subr.bf16.mxu0 0
        %2037 = vmatpush1.bf16.msra.mxu0 0
        %2038 = vmatprep.subr.bf16.mxu0 0
        %2039 = vmatpush1.bf16.msra.mxu0 0
        %2040 = vmatprep.subr.bf16.mxu0 0
        %2041 = vmatpush1.bf16.msra.mxu0 0
        %2042 = vmatprep.subr.bf16.mxu0 0
        %2043 = vmatpush1.bf16.msra.mxu0 0
        %2044 = vmatprep.subr.bf16.mxu0 0
        %2045 = vmatpush1.bf16.msra.mxu0 0
        %2046 = vmatprep.subr.bf16.mxu0 0
        %2047 = vmatpush1.bf16.msra.mxu0 0
        %2048 = vmatprep.subr.bf16.mxu0 0
        %2049 = vmatpush1.bf16.msra.mxu0 0
        %2050 = vmatprep.subr.bf16.mxu0 0
        %2051 = vmatpush1.bf16.msra.mxu0 0
        %2052 = vmatprep.subr.bf16.mxu0 0
        %2053 = vmatpush1.bf16.msra.mxu0 0
        %2054 = vmatprep.subr.bf16.mxu0 0
        %2055 = vmatpush1.bf16.msra.mxu0 0
        %2056 = vmatprep.subr.bf16.mxu0 0
        %2057 = vmatpush1.bf16.msra.mxu0 0
        %2058 = vmatprep.subr.bf16.mxu0 0
        %2059 = vmatpush1.bf16.msra.mxu0 0
        %2060 = vmatprep.subr.bf16.mxu0 0
        %2061 = vmatpush1.bf16.msra.mxu0 0
        %2062 = vmatprep.subr.bf16.mxu0 0
        %2063 = vmatpush1.bf16.msra.mxu0 0
        %2064 = vmatprep.subr.bf16.mxu0 0
        %2065 = vmatpush1.bf16.msra.mxu0 0
        %2066 = vmatprep.mubr.bf16.mxu0 0
        %2067 = vmatmul.mubr.bf16.gmra.mrb[0].mxu0 %v2020
        %v2068 = vpop.f32.mrb[0].mxu0
        %v2069 = vadd.f32 0.0, %v2068
        %v2070 = vpop.f32.mrb[0].mxu0
        %v2071 = vpop.f32.mrb[0].mxu0
        %v2072 = vadd.f32 0.0, %v2071
        %v2073 = vpop.f32.mrb[0].mxu0
        %2074 = vmatprep.mubr.bf16.mxu0 0
        %2075 = vmatmul.mubr.bf16.gmra.mrb[0].mxu0 %v2023
        %v2076 = vpop.f32.mrb[0].mxu0
        %v2077 = vadd.f32 0.0, %v2076
        %v2078 = vpop.f32.mrb[0].mxu0
        %v2079 = vpop.f32.mrb[0].mxu0
        %v2080 = vadd.f32 0.0, %v2079
        %v2081 = vpop.f32.mrb[0].mxu0
        %2082 = vmatprep.mubr.bf16.mxu0 0
        %2083 = vmatmul.mubr.bf16.gmra.mrb[0].mxu0 %v2026
        %v2084 = vpop.f32.mrb[0].mxu0
        %v2085 = vadd.f32 0.0, %v2084
        %v2086 = vpop.f32.mrb[0].mxu0
        %v2087 = vpop.f32.mrb[0].mxu0
        %v2088 = vadd.f32 0.0, %v2087
        %v2089 = vpop.f32.mrb[0].mxu0
        %2090 = vmatprep.mubr.bf16.mxu0 0
        %2091 = vmatmul.mubr.bf16.gmra.mrb[0].mxu0 %v2029
        %v2092 = vpop.f32.mrb[0].mxu0
        %v2093 = vadd.f32 0.0, %v2092
        %v2094 = vpop.f32.mrb[0].mxu0
        %v2095 = vpop.f32.mrb[0].mxu0
        %v2096 = vadd.f32 0.0, %v2095
        %v2097 = vpop.f32.mrb[0].mxu0
        %2098 = vdwg.mxu0
        %v2099 = vadd.f32 %v1681, %v2069
        %v2100 = vadd.f32 %v1682, %v2072
        %v2101 = vadd.f32 %v1683, %v2077
        %v2102 = vadd.f32 %v1684, %v2080
        %v2103 = vadd.f32 %v1685, %v2085
        %v2104 = vadd.f32 %v1686, %v2088
        %v2105 = vadd.f32 %v1687, %v2093
        %v2106 = vadd.f32 %v1688, %v2096
        %v2107 = vld [vmem:[%s325 + $0x4] sm:$0x8]
        %v2108 = vld [vmem:[%s325 + $0x24] sm:$0xf]
        %s2109 = scalar_lea.vmem [#allocation8], 24
        %v2110 = vld [vmem:[%s2109] sm:$0x3]
        %v2113 = vunpack.c.l.b16 %v2107
        %v2114 = vunpack.c.l.b16 %v2108
        %v2115 = vpack.c.b16 %v1970, %v2113
        %v2116 = vpack.c.b16 %v2114, %v2114
        %v2118 = vshrl.u32 %v2115, 16
        %v2120 = vrot.slane %v2118, 3
        %v2121 = vshll.u32 %v2115, 16
        %v2123 = vrot.slane %v2121, 4
        %v2124 = vor.u32 %v2120, %v2123
        %v2125 = vrot.slane %v1995, 3
        %v2126 = vrot.slane %v1991, 4
        %v2127 = vor.u32 %v2125, %v2126
        %v2128 = vsel %vm702, %v2124, %v2127
        %v2129 = vrot.slane %v2003, 3
        %v2130 = vrot.slane %v1999, 4
        %v2131 = vor.u32 %v2129, %v2130
        %v2132 = vsel %vm702, %v2127, %v2131
        %v2133 = vrot.slane %v2011, 3
        %v2134 = vrot.slane %v2007, 4
        %v2135 = vor.u32 %v2133, %v2134
        %v2136 = vsel %vm702, %v2131, %v2135
        %v2138 = vshrl.u32 %v2116, 16
        %v2140 = vrot.slane %v2138, 3
        %v2141 = vshll.u32 %v2116, 16
        %v2143 = vrot.slane %v2141, 4
        %v2144 = vor.u32 %v2140, %v2143
        %v2145 = vsel %vm702, %v2135, %v2144
        %v2147 = vsel %vm574, %v2128, 0
        %v2150 = vsel %vm574, %v2132, 0
        %v2153 = vsel %vm574, %v2136, 0
        %v2156 = vsel %vm574, %v2145, 0
        %v2159 = vsel %vm587, %v2110, 0
        %2161 = vmatprep.subr.bf16.mxu0 0
        %2162 = vmatpush1.bf16.msra.mxu0 %v2159
        %2163 = vmatprep.subr.bf16.mxu0 0
        %2164 = vmatpush1.bf16.msra.mxu0 0
        %2165 = vmatprep.subr.bf16.mxu0 0
        %2166 = vmatpush1.bf16.msra.mxu0 0
        %2167 = vmatprep.subr.bf16.mxu0 0
        %2168 = vmatpush1.bf16.msra.mxu0 0
        %2169 = vmatprep.subr.bf16.mxu0 0
        %2170 = vmatpush1.bf16.msra.mxu0 0
        %2171 = vmatprep.subr.bf16.mxu0 0
        %2172 = vmatpush1.bf16.msra.mxu0 0
        %2173 = vmatprep.subr.bf16.mxu0 0
        %2174 = vmatpush1.bf16.msra.mxu0 0
        %2175 = vmatprep.subr.bf16.mxu0 0
        %2176 = vmatpush1.bf16.msra.mxu0 0
        %2177 = vmatprep.subr.bf16.mxu0 0
        %2178 = vmatpush1.bf16.msra.mxu0 0
        %2179 = vmatprep.subr.bf16.mxu0 0
        %2180 = vmatpush1.bf16.msra.mxu0 0
        %2181 = vmatprep.subr.bf16.mxu0 0
        %2182 = vmatpush1.bf16.msra.mxu0 0
        %2183 = vmatprep.subr.bf16.mxu0 0
        %2184 = vmatpush1.bf16.msra.mxu0 0
        %2185 = vmatprep.subr.bf16.mxu0 0
        %2186 = vmatpush1.bf16.msra.mxu0 0
        %2187 = vmatprep.subr.bf16.mxu0 0
        %2188 = vmatpush1.bf16.msra.mxu0 0
        %2189 = vmatprep.subr.bf16.mxu0 0
        %2190 = vmatpush1.bf16.msra.mxu0 0
        %2191 = vmatprep.subr.bf16.mxu0 0
        %2192 = vmatpush1.bf16.msra.mxu0 0
        %2193 = vmatprep.mubr.bf16.mxu0 0
        %2194 = vmatmul.mubr.bf16.gmra.mrb[0].mxu0 %v2147
        %v2195 = vpop.f32.mrb[0].mxu0
        %v2196 = vadd.f32 0.0, %v2195
        %v2197 = vpop.f32.mrb[0].mxu0
        %v2198 = vpop.f32.mrb[0].mxu0
        %v2199 = vadd.f32 0.0, %v2198
        %v2200 = vpop.f32.mrb[0].mxu0
        %2201 = vmatprep.mubr.bf16.mxu0 0
        %2202 = vmatmul.mubr.bf16.gmra.mrb[0].mxu0 %v2150
        %v2203 = vpop.f32.mrb[0].mxu0
        %v2204 = vadd.f32 0.0, %v2203
        %v2205 = vpop.f32.mrb[0].mxu0
        %v2206 = vpop.f32.mrb[0].mxu0
        %v2207 = vadd.f32 0.0, %v2206
        %v2208 = vpop.f32.mrb[0].mxu0
        %2209 = vmatprep.mubr.bf16.mxu0 0
        %2210 = vmatmul.mubr.bf16.gmra.mrb[0].mxu0 %v2153
        %v2211 = vpop.f32.mrb[0].mxu0
        %v2212 = vadd.f32 0.0, %v2211
        %v2213 = vpop.f32.mrb[0].mxu0
        %v2214 = vpop.f32.mrb[0].mxu0
        %v2215 = vadd.f32 0.0, %v2214
        %v2216 = vpop.f32.mrb[0].mxu0
        %2217 = vmatprep.mubr.bf16.mxu0 0
        %2218 = vmatmul.mubr.bf16.gmra.mrb[0].mxu0 %v2156
        %v2219 = vpop.f32.mrb[0].mxu0
        %v2220 = vadd.f32 0.0, %v2219
        %v2221 = vpop.f32.mrb[0].mxu0
        %v2222 = vpop.f32.mrb[0].mxu0
        %v2223 = vadd.f32 0.0, %v2222
        %v2224 = vpop.f32.mrb[0].mxu0
        %2225 = vdwg.mxu0
        %v2226 = vadd.f32 %v1847, %v2196
        %v2227 = vadd.f32 %v1848, %v2199
        %v2228 = vadd.f32 %v1849, %v2204
        %v2229 = vadd.f32 %v1850, %v2207
        %v2230 = vadd.f32 %v1851, %v2212
        %v2231 = vadd.f32 %v1852, %v2215
        %v2232 = vadd.f32 %v1853, %v2220
        %v2233 = vadd.f32 %v1854, %v2223
        %s2234 = scalar_lea.vmem [#allocation8], 26
        %v2235 = vld [vmem:[%s2234] sm:$0x3]
        %v2236 = vpack.c.b16 %v1971, %v1970
        %v2237 = vpack.c.b16 %v1973, %v1972
        %v2238 = vpack.c.b16 %v1975, %v1974
        %v2239 = vpack.c.b16 %v2114, %v1976
        %v2241 = vsel %vm574, %v2236, 0
        %v2244 = vsel %vm574, %v2237, 0
        %v2247 = vsel %vm574, %v2238, 0
        %v2250 = vsel %vm574, %v2239, 0
        %v2253 = vsel %vm587, %v2235, 0
        %2255 = vmatprep.subr.bf16.mxu0 0
        %2256 = vmatpush1.bf16.msra.mxu0 %v2253
        %2257 = vmatprep.subr.bf16.mxu0 0
        %2258 = vmatpush1.bf16.msra.mxu0 0
        %2259 = vmatprep.subr.bf16.mxu0 0
        %2260 = vmatpush1.bf16.msra.mxu0 0
        %2261 = vmatprep.subr.bf16.mxu0 0
        %2262 = vmatpush1.bf16.msra.mxu0 0
        %2263 = vmatprep.subr.bf16.mxu0 0
        %2264 = vmatpush1.bf16.msra.mxu0 0
        %2265 = vmatprep.subr.bf16.mxu0 0
        %2266 = vmatpush1.bf16.msra.mxu0 0
        %2267 = vmatprep.subr.bf16.mxu0 0
        %2268 = vmatpush1.bf16.msra.mxu0 0
        %2269 = vmatprep.subr.bf16.mxu0 0
        %2270 = vmatpush1.bf16.msra.mxu0 0
        %2271 = vmatprep.subr.bf16.mxu0 0
        %2272 = vmatpush1.bf16.msra.mxu0 0
        %2273 = vmatprep.subr.bf16.mxu0 0
        %2274 = vmatpush1.bf16.msra.mxu0 0
        %2275 = vmatprep.subr.bf16.mxu0 0
        %2276 = vmatpush1.bf16.msra.mxu0 0
        %2277 = vmatprep.subr.bf16.mxu0 0
        %2278 = vmatpush1.bf16.msra.mxu0 0
        %2279 = vmatprep.subr.bf16.mxu0 0
        %2280 = vmatpush1.bf16.msra.mxu0 0
        %2281 = vmatprep.subr.bf16.mxu0 0
        %2282 = vmatpush1.bf16.msra.mxu0 0
        %2283 = vmatprep.subr.bf16.mxu0 0
        %2284 = vmatpush1.bf16.msra.mxu0 0
        %2285 = vmatprep.subr.bf16.mxu0 0
        %2286 = vmatpush1.bf16.msra.mxu0 0
        %2287 = vmatprep.mubr.bf16.mxu0 0
        %2288 = vmatmul.mubr.bf16.gmra.mrb[0].mxu0 %v2241
        %v2289 = vpop.f32.mrb[0].mxu0
        %v2290 = vadd.f32 0.0, %v2289
        %v2291 = vpop.f32.mrb[0].mxu0
        %v2292 = vpop.f32.mrb[0].mxu0
        %v2293 = vadd.f32 0.0, %v2292
        %v2294 = vpop.f32.mrb[0].mxu0
        %2295 = vmatprep.mubr.bf16.mxu0 0
        %2296 = vmatmul.mubr.bf16.gmra.mrb[0].mxu0 %v2244
        %v2297 = vpop.f32.mrb[0].mxu0
        %v2298 = vadd.f32 0.0, %v2297
        %v2299 = vpop.f32.mrb[0].mxu0
        %v2300 = vpop.f32.mrb[0].mxu0
        %v2301 = vadd.f32 0.0, %v2300
        %v2302 = vpop.f32.mrb[0].mxu0
        %2303 = vmatprep.mubr.bf16.mxu0 0
        %2304 = vmatmul.mubr.bf16.gmra.mrb[0].mxu0 %v2247
        %v2305 = vpop.f32.mrb[0].mxu0
        %v2306 = vadd.f32 0.0, %v2305
        %v2307 = vpop.f32.mrb[0].mxu0
        %v2308 = vpop.f32.mrb[0].mxu0
        %v2309 = vadd.f32 0.0, %v2308
        %v2310 = vpop.f32.mrb[0].mxu0
        %2311 = vmatprep.mubr.bf16.mxu0 0
        %2312 = vmatmul.mubr.bf16.gmra.mrb[0].mxu0 %v2250
        %v2313 = vpop.f32.mrb[0].mxu0
        %v2314 = vadd.f32 0.0, %v2313
        %v2315 = vpop.f32.mrb[0].mxu0
        %v2316 = vpop.f32.mrb[0].mxu0
        %v2317 = vadd.f32 0.0, %v2316
        %v2318 = vpop.f32.mrb[0].mxu0
        %2319 = vdwg.mxu0
        %v2320 = vadd.f32 %v1941, %v2290
        %v2321 = vadd.f32 %v1942, %v2293
        %v2322 = vadd.f32 %v1943, %v2298
        %v2323 = vadd.f32 %v1944, %v2301
        %v2324 = vadd.f32 %v1945, %v2306
        %v2325 = vadd.f32 %v1946, %v2309
        %v2326 = vadd.f32 %v1947, %v2314
        %v2327 = vadd.f32 %v1948, %v2317
        %v2328 = vld [vmem:[%s325 + $0x8] sm:$0xf]
        %v2329 = vld [vmem:[%s325 + $0xc] sm:$0xf]
        %v2330 = vld [vmem:[%s325 + $0x10] sm:$0xf]
        %v2331 = vld [vmem:[%s325 + $0x14] sm:$0xf]
        %v2332 = vld [vmem:[%s325 + $0x18] sm:$0xf]
        %v2333 = vld [vmem:[%s325 + $0x1c] sm:$0xf]
        %v2334 = vld [vmem:[%s325 + $0x20] sm:$0xf]
        %v2335 = vld [vmem:[%s325 + $0x24] sm:$0xf]
        %v2336 = vld [vmem:[%s325 + $0x28] sm:$0x1]
        %s2337 = scalar_lea.vmem [#allocation8], 28
        %v2338 = vld [vmem:[%s2337] sm:$0x3]
        %v2348 = vunpack.c.l.b16 %v2328
        %v2349 = vunpack.c.l.b16 %v2329
        %v2350 = vunpack.c.l.b16 %v2330
        %v2351 = vunpack.c.l.b16 %v2331
        %v2352 = vunpack.c.l.b16 %v2332
        %v2353 = vunpack.c.l.b16 %v2333
        %v2354 = vunpack.c.l.b16 %v2334
        %v2355 = vunpack.c.l.b16 %v2335
        %v2356 = vunpack.c.l.b16 %v2336
        %v2357 = vpack.c.b16 %v2349, %v2348
        %v2358 = vpack.c.b16 %v2351, %v2350
        %v2359 = vpack.c.b16 %v2353, %v2352
        %v2360 = vpack.c.b16 %v2355, %v2354
        %v2361 = vpack.c.b16 %v2356, %v2356
        %v2363 = vshrl.u32 %v2357, 16
        %v2365 = vshll.u32 %v2357, 16
        %v2367 = vrot.slane %v2365, 1
        %v2368 = vor.u32 %v2363, %v2367
        %v2370 = vshll.u32 %v2358, 16
        %v2372 = vrot.slane %v2370, 1
        %v2373 = vsel %vm1086, %v2368, %v2372
        %v2374 = vshrl.u32 %v2358, 16
        %v2376 = vor.u32 %v2374, %v2372
        %v2378 = vshll.u32 %v2359, 16
        %v2380 = vrot.slane %v2378, 1
        %v2381 = vsel %vm1086, %v2376, %v2380
        %v2382 = vshrl.u32 %v2359, 16
        %v2384 = vor.u32 %v2382, %v2380
        %v2386 = vshll.u32 %v2360, 16
        %v2388 = vrot.slane %v2386, 1
        %v2389 = vsel %vm1086, %v2384, %v2388
        %v2390 = vshrl.u32 %v2360, 16
        %v2392 = vor.u32 %v2390, %v2388
        %v2394 = vshll.u32 %v2361, 16
        %v2396 = vrot.slane %v2394, 1
        %v2397 = vsel %vm1086, %v2392, %v2396
        %v2399 = vsel %vm574, %v2373, 0
        %v2402 = vsel %vm574, %v2381, 0
        %v2405 = vsel %vm574, %v2389, 0
        %v2408 = vsel %vm574, %v2397, 0
        %v2411 = vsel %vm587, %v2338, 0
        %2413 = vmatprep.subr.bf16.mxu0 0
        %2414 = vmatpush1.bf16.msra.mxu0 %v2411
        %2415 = vmatprep.subr.bf16.mxu0 0
        %2416 = vmatpush1.bf16.msra.mxu0 0
        %2417 = vmatprep.subr.bf16.mxu0 0
        %2418 = vmatpush1.bf16.msra.mxu0 0
        %2419 = vmatprep.subr.bf16.mxu0 0
        %2420 = vmatpush1.bf16.msra.mxu0 0
        %2421 = vmatprep.subr.bf16.mxu0 0
        %2422 = vmatpush1.bf16.msra.mxu0 0
        %2423 = vmatprep.subr.bf16.mxu0 0
        %2424 = vmatpush1.bf16.msra.mxu0 0
        %2425 = vmatprep.subr.bf16.mxu0 0
        %2426 = vmatpush1.bf16.msra.mxu0 0
        %2427 = vmatprep.subr.bf16.mxu0 0
        %2428 = vmatpush1.bf16.msra.mxu0 0
        %2429 = vmatprep.subr.bf16.mxu0 0
        %2430 = vmatpush1.bf16.msra.mxu0 0
        %2431 = vmatprep.subr.bf16.mxu0 0
        %2432 = vmatpush1.bf16.msra.mxu0 0
        %2433 = vmatprep.subr.bf16.mxu0 0
        %2434 = vmatpush1.bf16.msra.mxu0 0
        %2435 = vmatprep.subr.bf16.mxu0 0
        %2436 = vmatpush1.bf16.msra.mxu0 0
        %2437 = vmatprep.subr.bf16.mxu0 0
        %2438 = vmatpush1.bf16.msra.mxu0 0
        %2439 = vmatprep.subr.bf16.mxu0 0
        %2440 = vmatpush1.bf16.msra.mxu0 0
        %2441 = vmatprep.subr.bf16.mxu0 0
        %2442 = vmatpush1.bf16.msra.mxu0 0
        %2443 = vmatprep.subr.bf16.mxu0 0
        %2444 = vmatpush1.bf16.msra.mxu0 0
        %2445 = vmatprep.mubr.bf16.mxu0 0
        %2446 = vmatmul.mubr.bf16.gmra.mrb[0].mxu0 %v2399
        %v2447 = vpop.f32.mrb[0].mxu0
        %v2448 = vadd.f32 0.0, %v2447
        %v2449 = vpop.f32.mrb[0].mxu0
        %v2450 = vpop.f32.mrb[0].mxu0
        %v2451 = vadd.f32 0.0, %v2450
        %v2452 = vpop.f32.mrb[0].mxu0
        %2453 = vmatprep.mubr.bf16.mxu0 0
        %2454 = vmatmul.mubr.bf16.gmra.mrb[0].mxu0 %v2402
        %v2455 = vpop.f32.mrb[0].mxu0
        %v2456 = vadd.f32 0.0, %v2455
        %v2457 = vpop.f32.mrb[0].mxu0
        %v2458 = vpop.f32.mrb[0].mxu0
        %v2459 = vadd.f32 0.0, %v2458
        %v2460 = vpop.f32.mrb[0].mxu0
        %2461 = vmatprep.mubr.bf16.mxu0 0
        %2462 = vmatmul.mubr.bf16.gmra.mrb[0].mxu0 %v2405
        %v2463 = vpop.f32.mrb[0].mxu0
        %v2464 = vadd.f32 0.0, %v2463
        %v2465 = vpop.f32.mrb[0].mxu0
        %v2466 = vpop.f32.mrb[0].mxu0
        %v2467 = vadd.f32 0.0, %v2466
        %v2468 = vpop.f32.mrb[0].mxu0
        %2469 = vmatprep.mubr.bf16.mxu0 0
        %2470 = vmatmul.mubr.bf16.gmra.mrb[0].mxu0 %v2408
        %v2471 = vpop.f32.mrb[0].mxu0
        %v2472 = vadd.f32 0.0, %v2471
        %v2473 = vpop.f32.mrb[0].mxu0
        %v2474 = vpop.f32.mrb[0].mxu0
        %v2475 = vadd.f32 0.0, %v2474
        %v2476 = vpop.f32.mrb[0].mxu0
        %2477 = vdwg.mxu0
        %v2478 = vadd.f32 %v2099, %v2448
        %v2479 = vadd.f32 %v2100, %v2451
        %v2480 = vadd.f32 %v2101, %v2456
        %v2481 = vadd.f32 %v2102, %v2459
        %v2482 = vadd.f32 %v2103, %v2464
        %v2483 = vadd.f32 %v2104, %v2467
        %v2484 = vadd.f32 %v2105, %v2472
        %v2485 = vadd.f32 %v2106, %v2475
        %v2486 = vld [vmem:[%s325 + $0x8] sm:$0x8]
        %v2487 = vld [vmem:[%s325 + $0x28] sm:$0xf]
        %s2488 = scalar_lea.vmem [#allocation8], 30
        %v2489 = vld [vmem:[%s2488] sm:$0x3]
        %v2492 = vunpack.c.l.b16 %v2486
        %v2493 = vunpack.c.l.b16 %v2487
        %v2494 = vpack.c.b16 %v2349, %v2492
        %v2495 = vpack.c.b16 %v2493, %v2493
        %v2497 = vshrl.u32 %v2494, 16
        %v2499 = vrot.slane %v2497, 3
        %v2500 = vshll.u32 %v2494, 16
        %v2502 = vrot.slane %v2500, 4
        %v2503 = vor.u32 %v2499, %v2502
        %v2504 = vrot.slane %v2374, 3
        %v2505 = vrot.slane %v2370, 4
        %v2506 = vor.u32 %v2504, %v2505
        %v2507 = vsel %vm702, %v2503, %v2506
        %v2508 = vrot.slane %v2382, 3
        %v2509 = vrot.slane %v2378, 4
        %v2510 = vor.u32 %v2508, %v2509
        %v2511 = vsel %vm702, %v2506, %v2510
        %v2512 = vrot.slane %v2390, 3
        %v2513 = vrot.slane %v2386, 4
        %v2514 = vor.u32 %v2512, %v2513
        %v2515 = vsel %vm702, %v2510, %v2514
        %v2517 = vshrl.u32 %v2495, 16
        %v2519 = vrot.slane %v2517, 3
        %v2520 = vshll.u32 %v2495, 16
        %v2522 = vrot.slane %v2520, 4
        %v2523 = vor.u32 %v2519, %v2522
        %v2524 = vsel %vm702, %v2514, %v2523
        %v2526 = vsel %vm574, %v2507, 0
        %v2529 = vsel %vm574, %v2511, 0
        %v2532 = vsel %vm574, %v2515, 0
        %v2535 = vsel %vm574, %v2524, 0
        %v2538 = vsel %vm587, %v2489, 0
        %2540 = vmatprep.subr.bf16.mxu0 0
        %2541 = vmatpush1.bf16.msra.mxu0 %v2538
        %2542 = vmatprep.subr.bf16.mxu0 0
        %2543 = vmatpush1.bf16.msra.mxu0 0
        %2544 = vmatprep.subr.bf16.mxu0 0
        %2545 = vmatpush1.bf16.msra.mxu0 0
        %2546 = vmatprep.subr.bf16.mxu0 0
        %2547 = vmatpush1.bf16.msra.mxu0 0
        %2548 = vmatprep.subr.bf16.mxu0 0
        %2549 = vmatpush1.bf16.msra.mxu0 0
        %2550 = vmatprep.subr.bf16.mxu0 0
        %2551 = vmatpush1.bf16.msra.mxu0 0
        %2552 = vmatprep.subr.bf16.mxu0 0
        %2553 = vmatpush1.bf16.msra.mxu0 0
        %2554 = vmatprep.subr.bf16.mxu0 0
        %2555 = vmatpush1.bf16.msra.mxu0 0
        %2556 = vmatprep.subr.bf16.mxu0 0
        %2557 = vmatpush1.bf16.msra.mxu0 0
        %2558 = vmatprep.subr.bf16.mxu0 0
        %2559 = vmatpush1.bf16.msra.mxu0 0
        %2560 = vmatprep.subr.bf16.mxu0 0
        %2561 = vmatpush1.bf16.msra.mxu0 0
        %2562 = vmatprep.subr.bf16.mxu0 0
        %2563 = vmatpush1.bf16.msra.mxu0 0
        %2564 = vmatprep.subr.bf16.mxu0 0
        %2565 = vmatpush1.bf16.msra.mxu0 0
        %2566 = vmatprep.subr.bf16.mxu0 0
        %2567 = vmatpush1.bf16.msra.mxu0 0
        %2568 = vmatprep.subr.bf16.mxu0 0
        %2569 = vmatpush1.bf16.msra.mxu0 0
        %2570 = vmatprep.subr.bf16.mxu0 0
        %2571 = vmatpush1.bf16.msra.mxu0 0
        %2572 = vmatprep.mubr.bf16.mxu0 0
        %2573 = vmatmul.mubr.bf16.gmra.mrb[0].mxu0 %v2526
        %v2574 = vpop.f32.mrb[0].mxu0
        %v2575 = vadd.f32 0.0, %v2574
        %v2576 = vpop.f32.mrb[0].mxu0
        %v2577 = vpop.f32.mrb[0].mxu0
        %v2578 = vadd.f32 0.0, %v2577
        %v2579 = vpop.f32.mrb[0].mxu0
        %2580 = vmatprep.mubr.bf16.mxu0 0
        %2581 = vmatmul.mubr.bf16.gmra.mrb[0].mxu0 %v2529
        %v2582 = vpop.f32.mrb[0].mxu0
        %v2583 = vadd.f32 0.0, %v2582
        %v2584 = vpop.f32.mrb[0].mxu0
        %v2585 = vpop.f32.mrb[0].mxu0
        %v2586 = vadd.f32 0.0, %v2585
        %v2587 = vpop.f32.mrb[0].mxu0
        %2588 = vmatprep.mubr.bf16.mxu0 0
        %2589 = vmatmul.mubr.bf16.gmra.mrb[0].mxu0 %v2532
        %v2590 = vpop.f32.mrb[0].mxu0
        %v2591 = vadd.f32 0.0, %v2590
        %v2592 = vpop.f32.mrb[0].mxu0
        %v2593 = vpop.f32.mrb[0].mxu0
        %v2594 = vadd.f32 0.0, %v2593
        %v2595 = vpop.f32.mrb[0].mxu0
        %2596 = vmatprep.mubr.bf16.mxu0 0
        %2597 = vmatmul.mubr.bf16.gmra.mrb[0].mxu0 %v2535
        %v2598 = vpop.f32.mrb[0].mxu0
        %v2599 = vadd.f32 0.0, %v2598
        %v2600 = vpop.f32.mrb[0].mxu0
        %v2601 = vpop.f32.mrb[0].mxu0
        %v2602 = vadd.f32 0.0, %v2601
        %v2603 = vpop.f32.mrb[0].mxu0
        %2604 = vdwg.mxu0
        %v2605 = vadd.f32 %v2226, %v2575
        %v2606 = vadd.f32 %v2227, %v2578
        %v2607 = vadd.f32 %v2228, %v2583
        %v2608 = vadd.f32 %v2229, %v2586
        %v2609 = vadd.f32 %v2230, %v2591
        %v2610 = vadd.f32 %v2231, %v2594
        %v2611 = vadd.f32 %v2232, %v2599
        %v2612 = vadd.f32 %v2233, %v2602
        %s2613 = scalar_lea.vmem [#allocation8], 32
        %v2614 = vld [vmem:[%s2613] sm:$0x3]
        %v2615 = vpack.c.b16 %v2350, %v2349
        %v2616 = vpack.c.b16 %v2352, %v2351
        %v2617 = vpack.c.b16 %v2354, %v2353
        %v2618 = vpack.c.b16 %v2493, %v2355
        %v2620 = vsel %vm574, %v2615, 0
        %v2623 = vsel %vm574, %v2616, 0
        %v2626 = vsel %vm574, %v2617, 0
        %v2629 = vsel %vm574, %v2618, 0
        %v2632 = vsel %vm587, %v2614, 0
        %2634 = vmatprep.subr.bf16.mxu0 0
        %2635 = vmatpush1.bf16.msra.mxu0 %v2632
        %2636 = vmatprep.subr.bf16.mxu0 0
        %2637 = vmatpush1.bf16.msra.mxu0 0
        %2638 = vmatprep.subr.bf16.mxu0 0
        %2639 = vmatpush1.bf16.msra.mxu0 0
        %2640 = vmatprep.subr.bf16.mxu0 0
        %2641 = vmatpush1.bf16.msra.mxu0 0
        %2642 = vmatprep.subr.bf16.mxu0 0
        %2643 = vmatpush1.bf16.msra.mxu0 0
        %2644 = vmatprep.subr.bf16.mxu0 0
        %2645 = vmatpush1.bf16.msra.mxu0 0
        %2646 = vmatprep.subr.bf16.mxu0 0
        %2647 = vmatpush1.bf16.msra.mxu0 0
        %2648 = vmatprep.subr.bf16.mxu0 0
        %2649 = vmatpush1.bf16.msra.mxu0 0
        %2650 = vmatprep.subr.bf16.mxu0 0
        %2651 = vmatpush1.bf16.msra.mxu0 0
        %2652 = vmatprep.subr.bf16.mxu0 0
        %2653 = vmatpush1.bf16.msra.mxu0 0
        %2654 = vmatprep.subr.bf16.mxu0 0
        %2655 = vmatpush1.bf16.msra.mxu0 0
        %2656 = vmatprep.subr.bf16.mxu0 0
        %2657 = vmatpush1.bf16.msra.mxu0 0
        %2658 = vmatprep.subr.bf16.mxu0 0
        %2659 = vmatpush1.bf16.msra.mxu0 0
        %2660 = vmatprep.subr.bf16.mxu0 0
        %2661 = vmatpush1.bf16.msra.mxu0 0
        %2662 = vmatprep.subr.bf16.mxu0 0
        %2663 = vmatpush1.bf16.msra.mxu0 0
        %2664 = vmatprep.subr.bf16.mxu0 0
        %2665 = vmatpush1.bf16.msra.mxu0 0
        %2666 = vmatprep.mubr.bf16.mxu0 0
        %2667 = vmatmul.mubr.bf16.gmra.mrb[0].mxu0 %v2620
        %v2668 = vpop.f32.mrb[0].mxu0
        %v2669 = vadd.f32 0.0, %v2668
        %v2670 = vpop.f32.mrb[0].mxu0
        %v2671 = vpop.f32.mrb[0].mxu0
        %v2672 = vadd.f32 0.0, %v2671
        %v2673 = vpop.f32.mrb[0].mxu0
        %2674 = vmatprep.mubr.bf16.mxu0 0
        %2675 = vmatmul.mubr.bf16.gmra.mrb[0].mxu0 %v2623
        %v2676 = vpop.f32.mrb[0].mxu0
        %v2677 = vadd.f32 0.0, %v2676
        %v2678 = vpop.f32.mrb[0].mxu0
        %v2679 = vpop.f32.mrb[0].mxu0
        %v2680 = vadd.f32 0.0, %v2679
        %v2681 = vpop.f32.mrb[0].mxu0
        %2682 = vmatprep.mubr.bf16.mxu0 0
        %2683 = vmatmul.mubr.bf16.gmra.mrb[0].mxu0 %v2626
        %v2684 = vpop.f32.mrb[0].mxu0
        %v2685 = vadd.f32 0.0, %v2684
        %v2686 = vpop.f32.mrb[0].mxu0
        %v2687 = vpop.f32.mrb[0].mxu0
        %v2688 = vadd.f32 0.0, %v2687
        %v2689 = vpop.f32.mrb[0].mxu0
        %2690 = vmatprep.mubr.bf16.mxu0 0
        %2691 = vmatmul.mubr.bf16.gmra.mrb[0].mxu0 %v2629
        %v2692 = vpop.f32.mrb[0].mxu0
        %v2693 = vadd.f32 0.0, %v2692
        %v2694 = vpop.f32.mrb[0].mxu0
        %v2695 = vpop.f32.mrb[0].mxu0
        %v2696 = vadd.f32 0.0, %v2695
        %v2697 = vpop.f32.mrb[0].mxu0
        %2698 = vdwg.mxu0
        %v2699 = vadd.f32 %v2320, %v2669
        %v2700 = vadd.f32 %v2321, %v2672
        %v2701 = vadd.f32 %v2322, %v2677
        %v2702 = vadd.f32 %v2323, %v2680
        %v2703 = vadd.f32 %v2324, %v2685
        %v2704 = vadd.f32 %v2325, %v2688
        %v2705 = vadd.f32 %v2326, %v2693
        %v2706 = vadd.f32 %v2327, %v2696
        %v2707 = vld [vmem:[%s325 + $0xc] sm:$0xf]
        %v2708 = vld [vmem:[%s325 + $0x10] sm:$0xf]
        %v2709 = vld [vmem:[%s325 + $0x14] sm:$0xf]
        %v2710 = vld [vmem:[%s325 + $0x18] sm:$0xf]
        %v2711 = vld [vmem:[%s325 + $0x1c] sm:$0xf]
        %v2712 = vld [vmem:[%s325 + $0x20] sm:$0xf]
        %v2713 = vld [vmem:[%s325 + $0x24] sm:$0xf]
        %v2714 = vld [vmem:[%s325 + $0x28] sm:$0xf]
        %v2715 = vld [vmem:[%s325 + $0x2c] sm:$0x1]
        %s2716 = scalar_lea.vmem [#allocation8], 34
        %v2717 = vld [vmem:[%s2716] sm:$0x3]
        %v2727 = vunpack.c.l.b16 %v2707
        %v2728 = vunpack.c.l.b16 %v2708
        %v2729 = vunpack.c.l.b16 %v2709
        %v2730 = vunpack.c.l.b16 %v2710
        %v2731 = vunpack.c.l.b16 %v2711
        %v2732 = vunpack.c.l.b16 %v2712
        %v2733 = vunpack.c.l.b16 %v2713
        %v2734 = vunpack.c.l.b16 %v2714
        %v2735 = vunpack.c.l.b16 %v2715
        %v2736 = vpack.c.b16 %v2728, %v2727
        %v2737 = vpack.c.b16 %v2730, %v2729
        %v2738 = vpack.c.b16 %v2732, %v2731
        %v2739 = vpack.c.b16 %v2734, %v2733
        %v2740 = vpack.c.b16 %v2735, %v2735
        %v2742 = vshrl.u32 %v2736, 16
        %v2744 = vshll.u32 %v2736, 16
        %v2746 = vrot.slane %v2744, 1
        %v2747 = vor.u32 %v2742, %v2746
        %v2749 = vshll.u32 %v2737, 16
        %v2751 = vrot.slane %v2749, 1
        %v2752 = vsel %vm1086, %v2747, %v2751
        %v2753 = vshrl.u32 %v2737, 16
        %v2755 = vor.u32 %v2753, %v2751
        %v2757 = vshll.u32 %v2738, 16
        %v2759 = vrot.slane %v2757, 1
        %v2760 = vsel %vm1086, %v2755, %v2759
        %v2761 = vshrl.u32 %v2738, 16
        %v2763 = vor.u32 %v2761, %v2759
        %v2765 = vshll.u32 %v2739, 16
        %v2767 = vrot.slane %v2765, 1
        %v2768 = vsel %vm1086, %v2763, %v2767
        %v2769 = vshrl.u32 %v2739, 16
        %v2771 = vor.u32 %v2769, %v2767
        %v2773 = vshll.u32 %v2740, 16
        %v2775 = vrot.slane %v2773, 1
        %v2776 = vsel %vm1086, %v2771, %v2775
        %v2778 = vsel %vm574, %v2752, 0
        %v2781 = vsel %vm574, %v2760, 0
        %v2784 = vsel %vm574, %v2768, 0
        %v2787 = vsel %vm574, %v2776, 0
        %v2790 = vsel %vm587, %v2717, 0
        %2792 = vmatprep.subr.bf16.mxu0 0
        %2793 = vmatpush1.bf16.msra.mxu0 %v2790
        %2794 = vmatprep.subr.bf16.mxu0 0
        %2795 = vmatpush1.bf16.msra.mxu0 0
        %2796 = vmatprep.subr.bf16.mxu0 0
        %2797 = vmatpush1.bf16.msra.mxu0 0
        %2798 = vmatprep.subr.bf16.mxu0 0
        %2799 = vmatpush1.bf16.msra.mxu0 0
        %2800 = vmatprep.subr.bf16.mxu0 0
        %2801 = vmatpush1.bf16.msra.mxu0 0
        %2802 = vmatprep.subr.bf16.mxu0 0
        %2803 = vmatpush1.bf16.msra.mxu0 0
        %2804 = vmatprep.subr.bf16.mxu0 0
        %2805 = vmatpush1.bf16.msra.mxu0 0
        %2806 = vmatprep.subr.bf16.mxu0 0
        %2807 = vmatpush1.bf16.msra.mxu0 0
        %2808 = vmatprep.subr.bf16.mxu0 0
        %2809 = vmatpush1.bf16.msra.mxu0 0
        %2810 = vmatprep.subr.bf16.mxu0 0
        %2811 = vmatpush1.bf16.msra.mxu0 0
        %2812 = vmatprep.subr.bf16.mxu0 0
        %2813 = vmatpush1.bf16.msra.mxu0 0
        %2814 = vmatprep.subr.bf16.mxu0 0
        %2815 = vmatpush1.bf16.msra.mxu0 0
        %2816 = vmatprep.subr.bf16.mxu0 0
        %2817 = vmatpush1.bf16.msra.mxu0 0
        %2818 = vmatprep.subr.bf16.mxu0 0
        %2819 = vmatpush1.bf16.msra.mxu0 0
        %2820 = vmatprep.subr.bf16.mxu0 0
        %2821 = vmatpush1.bf16.msra.mxu0 0
        %2822 = vmatprep.subr.bf16.mxu0 0
        %2823 = vmatpush1.bf16.msra.mxu0 0
        %2824 = vmatprep.mubr.bf16.mxu0 0
        %2825 = vmatmul.mubr.bf16.gmra.mrb[0].mxu0 %v2778
        %v2826 = vpop.f32.mrb[0].mxu0
        %v2827 = vadd.f32 0.0, %v2826
        %v2828 = vpop.f32.mrb[0].mxu0
        %v2829 = vpop.f32.mrb[0].mxu0
        %v2830 = vadd.f32 0.0, %v2829
        %v2831 = vpop.f32.mrb[0].mxu0
        %2832 = vmatprep.mubr.bf16.mxu0 0
        %2833 = vmatmul.mubr.bf16.gmra.mrb[0].mxu0 %v2781
        %v2834 = vpop.f32.mrb[0].mxu0
        %v2835 = vadd.f32 0.0, %v2834
        %v2836 = vpop.f32.mrb[0].mxu0
        %v2837 = vpop.f32.mrb[0].mxu0
        %v2838 = vadd.f32 0.0, %v2837
        %v2839 = vpop.f32.mrb[0].mxu0
        %2840 = vmatprep.mubr.bf16.mxu0 0
        %2841 = vmatmul.mubr.bf16.gmra.mrb[0].mxu0 %v2784
        %v2842 = vpop.f32.mrb[0].mxu0
        %v2843 = vadd.f32 0.0, %v2842
        %v2844 = vpop.f32.mrb[0].mxu0
        %v2845 = vpop.f32.mrb[0].mxu0
        %v2846 = vadd.f32 0.0, %v2845
        %v2847 = vpop.f32.mrb[0].mxu0
        %2848 = vmatprep.mubr.bf16.mxu0 0
        %2849 = vmatmul.mubr.bf16.gmra.mrb[0].mxu0 %v2787
        %v2850 = vpop.f32.mrb[0].mxu0
        %v2851 = vadd.f32 0.0, %v2850
        %v2852 = vpop.f32.mrb[0].mxu0
        %v2853 = vpop.f32.mrb[0].mxu0
        %v2854 = vadd.f32 0.0, %v2853
        %v2855 = vpop.f32.mrb[0].mxu0
        %2856 = vdwg.mxu0
        %v2857 = vadd.f32 %v2478, %v2827
        %v2858 = vadd.f32 %v2479, %v2830
        %v2859 = vadd.f32 %v2480, %v2835
        %v2860 = vadd.f32 %v2481, %v2838
        %v2861 = vadd.f32 %v2482, %v2843
        %v2862 = vadd.f32 %v2483, %v2846
        %v2863 = vadd.f32 %v2484, %v2851
        %v2864 = vadd.f32 %v2485, %v2854
        %v2865 = vld [vmem:[%s334] sm:$0x8]
        %v2866 = vld [vmem:[%s334 + $0x4] sm:$0xf]
        %v2867 = vld [vmem:[%s334 + $0x8] sm:$0xf]
        %v2868 = vld [vmem:[%s334 + $0xc] sm:$0xf]
        %v2869 = vld [vmem:[%s334 + $0x10] sm:$0xf]
        %v2870 = vld [vmem:[%s334 + $0x14] sm:$0xf]
        %v2871 = vld [vmem:[%s334 + $0x18] sm:$0xf]
        %v2872 = vld [vmem:[%s334 + $0x1c] sm:$0xf]
        %v2873 = vld [vmem:[%s334 + $0x20] sm:$0xf]
        %s2874 = scalar_lea.vmem [#allocation8], 36
        %v2875 = vld [vmem:[%s2874] sm:$0x3]
        %v2885 = vunpack.c.l.b16 %v2865
        %v2886 = vunpack.c.l.b16 %v2866
        %v2887 = vunpack.c.l.b16 %v2867
        %v2888 = vunpack.c.l.b16 %v2868
        %v2889 = vunpack.c.l.b16 %v2869
        %v2890 = vunpack.c.l.b16 %v2870
        %v2891 = vunpack.c.l.b16 %v2871
        %v2892 = vunpack.c.l.b16 %v2872
        %v2893 = vunpack.c.l.b16 %v2873
        %v2894 = vpack.c.b16 %v2886, %v2885
        %v2895 = vpack.c.b16 %v2888, %v2887
        %v2896 = vpack.c.b16 %v2890, %v2889
        %v2897 = vpack.c.b16 %v2892, %v2891
        %v2898 = vpack.c.b16 %v2893, %v2893
        %v2900 = vshrl.u32 %v2894, 16
        %v2902 = vrot.slane %v2900, 3
        %v2903 = vshll.u32 %v2894, 16
        %v2905 = vrot.slane %v2903, 4
        %v2906 = vor.u32 %v2902, %v2905
        %v2908 = vshrl.u32 %v2895, 16
        %v2910 = vrot.slane %v2908, 3
        %v2911 = vshll.u32 %v2895, 16
        %v2913 = vrot.slane %v2911, 4
        %v2914 = vor.u32 %v2910, %v2913
        %v2915 = vsel %vm702, %v2906, %v2914
        %v2917 = vshrl.u32 %v2896, 16
        %v2919 = vrot.slane %v2917, 3
        %v2920 = vshll.u32 %v2896, 16
        %v2922 = vrot.slane %v2920, 4
        %v2923 = vor.u32 %v2919, %v2922
        %v2924 = vsel %vm702, %v2914, %v2923
        %v2926 = vshrl.u32 %v2897, 16
        %v2928 = vrot.slane %v2926, 3
        %v2929 = vshll.u32 %v2897, 16
        %v2931 = vrot.slane %v2929, 4
        %v2932 = vor.u32 %v2928, %v2931
        %v2933 = vsel %vm702, %v2923, %v2932
        %v2935 = vshrl.u32 %v2898, 16
        %v2937 = vrot.slane %v2935, 3
        %v2938 = vshll.u32 %v2898, 16
        %v2940 = vrot.slane %v2938, 4
        %v2941 = vor.u32 %v2937, %v2940
        %v2942 = vsel %vm702, %v2932, %v2941
        %v2944 = vsel %vm574, %v2915, 0
        %v2947 = vsel %vm574, %v2924, 0
        %v2950 = vsel %vm574, %v2933, 0
        %v2953 = vsel %vm574, %v2942, 0
        %v2956 = vsel %vm587, %v2875, 0
        %2958 = vmatprep.subr.bf16.mxu0 0
        %2959 = vmatpush1.bf16.msra.mxu0 %v2956
        %2960 = vmatprep.subr.bf16.mxu0 0
        %2961 = vmatpush1.bf16.msra.mxu0 0
        %2962 = vmatprep.subr.bf16.mxu0 0
        %2963 = vmatpush1.bf16.msra.mxu0 0
        %2964 = vmatprep.subr.bf16.mxu0 0
        %2965 = vmatpush1.bf16.msra.mxu0 0
        %2966 = vmatprep.subr.bf16.mxu0 0
        %2967 = vmatpush1.bf16.msra.mxu0 0
        %2968 = vmatprep.subr.bf16.mxu0 0
        %2969 = vmatpush1.bf16.msra.mxu0 0
        %2970 = vmatprep.subr.bf16.mxu0 0
        %2971 = vmatpush1.bf16.msra.mxu0 0
        %2972 = vmatprep.subr.bf16.mxu0 0
        %2973 = vmatpush1.bf16.msra.mxu0 0
        %2974 = vmatprep.subr.bf16.mxu0 0
        %2975 = vmatpush1.bf16.msra.mxu0 0
        %2976 = vmatprep.subr.bf16.mxu0 0
        %2977 = vmatpush1.bf16.msra.mxu0 0
        %2978 = vmatprep.subr.bf16.mxu0 0
        %2979 = vmatpush1.bf16.msra.mxu0 0
        %2980 = vmatprep.subr.bf16.mxu0 0
        %2981 = vmatpush1.bf16.msra.mxu0 0
        %2982 = vmatprep.subr.bf16.mxu0 0
        %2983 = vmatpush1.bf16.msra.mxu0 0
        %2984 = vmatprep.subr.bf16.mxu0 0
        %2985 = vmatpush1.bf16.msra.mxu0 0
        %2986 = vmatprep.subr.bf16.mxu0 0
        %2987 = vmatpush1.bf16.msra.mxu0 0
        %2988 = vmatprep.subr.bf16.mxu0 0
        %2989 = vmatpush1.bf16.msra.mxu0 0
        %2990 = vmatprep.mubr.bf16.mxu0 0
        %2991 = vmatmul.mubr.bf16.gmra.mrb[0].mxu0 %v2944
        %v2992 = vpop.f32.mrb[0].mxu0
        %v2993 = vadd.f32 0.0, %v2992
        %v2994 = vpop.f32.mrb[0].mxu0
        %v2995 = vpop.f32.mrb[0].mxu0
        %v2996 = vadd.f32 0.0, %v2995
        %v2997 = vpop.f32.mrb[0].mxu0
        %2998 = vmatprep.mubr.bf16.mxu0 0
        %2999 = vmatmul.mubr.bf16.gmra.mrb[0].mxu0 %v2947
        %v3000 = vpop.f32.mrb[0].mxu0
        %v3001 = vadd.f32 0.0, %v3000
        %v3002 = vpop.f32.mrb[0].mxu0
        %v3003 = vpop.f32.mrb[0].mxu0
        %v3004 = vadd.f32 0.0, %v3003
        %v3005 = vpop.f32.mrb[0].mxu0
        %3006 = vmatprep.mubr.bf16.mxu0 0
        %3007 = vmatmul.mubr.bf16.gmra.mrb[0].mxu0 %v2950
        %v3008 = vpop.f32.mrb[0].mxu0
        %v3009 = vadd.f32 0.0, %v3008
        %v3010 = vpop.f32.mrb[0].mxu0
        %v3011 = vpop.f32.mrb[0].mxu0
        %v3012 = vadd.f32 0.0, %v3011
        %v3013 = vpop.f32.mrb[0].mxu0
        %3014 = vmatprep.mubr.bf16.mxu0 0
        %3015 = vmatmul.mubr.bf16.gmra.mrb[0].mxu0 %v2953
        %v3016 = vpop.f32.mrb[0].mxu0
        %v3017 = vadd.f32 0.0, %v3016
        %v3018 = vpop.f32.mrb[0].mxu0
        %v3019 = vpop.f32.mrb[0].mxu0
        %v3020 = vadd.f32 0.0, %v3019
        %v3021 = vpop.f32.mrb[0].mxu0
        %3022 = vdwg.mxu0
        %v3023 = vadd.f32 %v2605, %v2993
        %v3024 = vadd.f32 %v2606, %v2996
        %v3025 = vadd.f32 %v2607, %v3001
        %v3026 = vadd.f32 %v2608, %v3004
        %v3027 = vadd.f32 %v2609, %v3009
        %v3028 = vadd.f32 %v2610, %v3012
        %v3029 = vadd.f32 %v2611, %v3017
        %v3030 = vadd.f32 %v2612, %v3020
        %s3031 = scalar_lea.vmem [#allocation8], 38
        %v3032 = vld [vmem:[%s3031] sm:$0x3]
        %v3033 = vpack.c.b16 %v2887, %v2886
        %v3034 = vpack.c.b16 %v2889, %v2888
        %v3035 = vpack.c.b16 %v2891, %v2890
        %v3036 = vpack.c.b16 %v2893, %v2892
        %v3038 = vsel %vm574, %v3033, 0
        %v3041 = vsel %vm574, %v3034, 0
        %v3044 = vsel %vm574, %v3035, 0
        %v3047 = vsel %vm574, %v3036, 0
        %v3050 = vsel %vm587, %v3032, 0
        %3052 = vmatprep.subr.bf16.mxu0 0
        %3053 = vmatpush1.bf16.msra.mxu0 %v3050
        %3054 = vmatprep.subr.bf16.mxu0 0
        %3055 = vmatpush1.bf16.msra.mxu0 0
        %3056 = vmatprep.subr.bf16.mxu0 0
        %3057 = vmatpush1.bf16.msra.mxu0 0
        %3058 = vmatprep.subr.bf16.mxu0 0
        %3059 = vmatpush1.bf16.msra.mxu0 0
        %3060 = vmatprep.subr.bf16.mxu0 0
        %3061 = vmatpush1.bf16.msra.mxu0 0
        %3062 = vmatprep.subr.bf16.mxu0 0
        %3063 = vmatpush1.bf16.msra.mxu0 0
        %3064 = vmatprep.subr.bf16.mxu0 0
        %3065 = vmatpush1.bf16.msra.mxu0 0
        %3066 = vmatprep.subr.bf16.mxu0 0
        %3067 = vmatpush1.bf16.msra.mxu0 0
        %3068 = vmatprep.subr.bf16.mxu0 0
        %3069 = vmatpush1.bf16.msra.mxu0 0
        %3070 = vmatprep.subr.bf16.mxu0 0
        %3071 = vmatpush1.bf16.msra.mxu0 0
        %3072 = vmatprep.subr.bf16.mxu0 0
        %3073 = vmatpush1.bf16.msra.mxu0 0
        %3074 = vmatprep.subr.bf16.mxu0 0
        %3075 = vmatpush1.bf16.msra.mxu0 0
        %3076 = vmatprep.subr.bf16.mxu0 0
        %3077 = vmatpush1.bf16.msra.mxu0 0
        %3078 = vmatprep.subr.bf16.mxu0 0
        %3079 = vmatpush1.bf16.msra.mxu0 0
        %3080 = vmatprep.subr.bf16.mxu0 0
        %3081 = vmatpush1.bf16.msra.mxu0 0
        %3082 = vmatprep.subr.bf16.mxu0 0
        %3083 = vmatpush1.bf16.msra.mxu0 0
        %3084 = vmatprep.mubr.bf16.mxu0 0
        %3085 = vmatmul.mubr.bf16.gmra.mrb[0].mxu0 %v3038
        %v3086 = vpop.f32.mrb[0].mxu0
        %v3087 = vadd.f32 0.0, %v3086
        %v3088 = vpop.f32.mrb[0].mxu0
        %v3089 = vpop.f32.mrb[0].mxu0
        %v3090 = vadd.f32 0.0, %v3089
        %v3091 = vpop.f32.mrb[0].mxu0
        %3092 = vmatprep.mubr.bf16.mxu0 0
        %3093 = vmatmul.mubr.bf16.gmra.mrb[0].mxu0 %v3041
        %v3094 = vpop.f32.mrb[0].mxu0
        %v3095 = vadd.f32 0.0, %v3094
        %v3096 = vpop.f32.mrb[0].mxu0
        %v3097 = vpop.f32.mrb[0].mxu0
        %v3098 = vadd.f32 0.0, %v3097
        %v3099 = vpop.f32.mrb[0].mxu0
        %3100 = vmatprep.mubr.bf16.mxu0 0
        %3101 = vmatmul.mubr.bf16.gmra.mrb[0].mxu0 %v3044
        %v3102 = vpop.f32.mrb[0].mxu0
        %v3103 = vadd.f32 0.0, %v3102
        %v3104 = vpop.f32.mrb[0].mxu0
        %v3105 = vpop.f32.mrb[0].mxu0
        %v3106 = vadd.f32 0.0, %v3105
        %v3107 = vpop.f32.mrb[0].mxu0
        %3108 = vmatprep.mubr.bf16.mxu0 0
        %3109 = vmatmul.mubr.bf16.gmra.mrb[0].mxu0 %v3047
        %v3110 = vpop.f32.mrb[0].mxu0
        %v3111 = vadd.f32 0.0, %v3110
        %v3112 = vpop.f32.mrb[0].mxu0
        %v3113 = vpop.f32.mrb[0].mxu0
        %v3114 = vadd.f32 0.0, %v3113
        %v3115 = vpop.f32.mrb[0].mxu0
        %3116 = vdwg.mxu0
        %v3117 = vadd.f32 %v2699, %v3087
        %v3118 = vadd.f32 %v2700, %v3090
        %v3119 = vadd.f32 %v2701, %v3095
        %v3120 = vadd.f32 %v2702, %v3098
        %v3121 = vadd.f32 %v2703, %v3103
        %v3122 = vadd.f32 %v2704, %v3106
        %v3123 = vadd.f32 %v2705, %v3111
        %v3124 = vadd.f32 %v2706, %v3114
        %v3125 = vld [vmem:[%s334 + $0x4] sm:$0xf]
        %v3126 = vld [vmem:[%s334 + $0x8] sm:$0xf]
        %v3127 = vld [vmem:[%s334 + $0xc] sm:$0xf]
        %v3128 = vld [vmem:[%s334 + $0x10] sm:$0xf]
        %v3129 = vld [vmem:[%s334 + $0x14] sm:$0xf]
        %v3130 = vld [vmem:[%s334 + $0x18] sm:$0xf]
        %v3131 = vld [vmem:[%s334 + $0x1c] sm:$0xf]
        %v3132 = vld [vmem:[%s334 + $0x20] sm:$0xf]
        %v3133 = vld [vmem:[%s334 + $0x24] sm:$0x1]
        %s3134 = scalar_lea.vmem [#allocation8], 40
        %v3135 = vld [vmem:[%s3134] sm:$0x3]
        %v3145 = vunpack.c.l.b16 %v3125
        %v3146 = vunpack.c.l.b16 %v3126
        %v3147 = vunpack.c.l.b16 %v3127
        %v3148 = vunpack.c.l.b16 %v3128
        %v3149 = vunpack.c.l.b16 %v3129
        %v3150 = vunpack.c.l.b16 %v3130
        %v3151 = vunpack.c.l.b16 %v3131
        %v3152 = vunpack.c.l.b16 %v3132
        %v3153 = vunpack.c.l.b16 %v3133
        %v3154 = vpack.c.b16 %v3146, %v3145
        %v3155 = vpack.c.b16 %v3148, %v3147
        %v3156 = vpack.c.b16 %v3150, %v3149
        %v3157 = vpack.c.b16 %v3152, %v3151
        %v3158 = vpack.c.b16 %v3153, %v3153
        %v3160 = vshrl.u32 %v3154, 16
        %v3162 = vshll.u32 %v3154, 16
        %v3164 = vrot.slane %v3162, 1
        %v3165 = vor.u32 %v3160, %v3164
        %v3167 = vshll.u32 %v3155, 16
        %v3169 = vrot.slane %v3167, 1
        %v3170 = vsel %vm1086, %v3165, %v3169
        %v3171 = vshrl.u32 %v3155, 16
        %v3173 = vor.u32 %v3171, %v3169
        %v3175 = vshll.u32 %v3156, 16
        %v3177 = vrot.slane %v3175, 1
        %v3178 = vsel %vm1086, %v3173, %v3177
        %v3179 = vshrl.u32 %v3156, 16
        %v3181 = vor.u32 %v3179, %v3177
        %v3183 = vshll.u32 %v3157, 16
        %v3185 = vrot.slane %v3183, 1
        %v3186 = vsel %vm1086, %v3181, %v3185
        %v3187 = vshrl.u32 %v3157, 16
        %v3189 = vor.u32 %v3187, %v3185
        %v3191 = vshll.u32 %v3158, 16
        %v3193 = vrot.slane %v3191, 1
        %v3194 = vsel %vm1086, %v3189, %v3193
        %v3196 = vsel %vm574, %v3170, 0
        %v3199 = vsel %vm574, %v3178, 0
        %v3202 = vsel %vm574, %v3186, 0
        %v3205 = vsel %vm574, %v3194, 0
        %v3208 = vsel %vm587, %v3135, 0
        %3210 = vmatprep.subr.bf16.mxu0 0
        %3211 = vmatpush1.bf16.msra.mxu0 %v3208
        %3212 = vmatprep.subr.bf16.mxu0 0
        %3213 = vmatpush1.bf16.msra.mxu0 0
        %3214 = vmatprep.subr.bf16.mxu0 0
        %3215 = vmatpush1.bf16.msra.mxu0 0
        %3216 = vmatprep.subr.bf16.mxu0 0
        %3217 = vmatpush1.bf16.msra.mxu0 0
        %3218 = vmatprep.subr.bf16.mxu0 0
        %3219 = vmatpush1.bf16.msra.mxu0 0
        %3220 = vmatprep.subr.bf16.mxu0 0
        %3221 = vmatpush1.bf16.msra.mxu0 0
        %3222 = vmatprep.subr.bf16.mxu0 0
        %3223 = vmatpush1.bf16.msra.mxu0 0
        %3224 = vmatprep.subr.bf16.mxu0 0
        %3225 = vmatpush1.bf16.msra.mxu0 0
        %3226 = vmatprep.subr.bf16.mxu0 0
        %3227 = vmatpush1.bf16.msra.mxu0 0
        %3228 = vmatprep.subr.bf16.mxu0 0
        %3229 = vmatpush1.bf16.msra.mxu0 0
        %3230 = vmatprep.subr.bf16.mxu0 0
        %3231 = vmatpush1.bf16.msra.mxu0 0
        %3232 = vmatprep.subr.bf16.mxu0 0
        %3233 = vmatpush1.bf16.msra.mxu0 0
        %3234 = vmatprep.subr.bf16.mxu0 0
        %3235 = vmatpush1.bf16.msra.mxu0 0
        %3236 = vmatprep.subr.bf16.mxu0 0
        %3237 = vmatpush1.bf16.msra.mxu0 0
        %3238 = vmatprep.subr.bf16.mxu0 0
        %3239 = vmatpush1.bf16.msra.mxu0 0
        %3240 = vmatprep.subr.bf16.mxu0 0
        %3241 = vmatpush1.bf16.msra.mxu0 0
        %3242 = vmatprep.mubr.bf16.mxu0 0
        %3243 = vmatmul.mubr.bf16.gmra.mrb[0].mxu0 %v3196
        %v3244 = vpop.f32.mrb[0].mxu0
        %v3245 = vadd.f32 0.0, %v3244
        %v3246 = vpop.f32.mrb[0].mxu0
        %v3247 = vpop.f32.mrb[0].mxu0
        %v3248 = vadd.f32 0.0, %v3247
        %v3249 = vpop.f32.mrb[0].mxu0
        %3250 = vmatprep.mubr.bf16.mxu0 0
        %3251 = vmatmul.mubr.bf16.gmra.mrb[0].mxu0 %v3199
        %v3252 = vpop.f32.mrb[0].mxu0
        %v3253 = vadd.f32 0.0, %v3252
        %v3254 = vpop.f32.mrb[0].mxu0
        %v3255 = vpop.f32.mrb[0].mxu0
        %v3256 = vadd.f32 0.0, %v3255
        %v3257 = vpop.f32.mrb[0].mxu0
        %3258 = vmatprep.mubr.bf16.mxu0 0
        %3259 = vmatmul.mubr.bf16.gmra.mrb[0].mxu0 %v3202
        %v3260 = vpop.f32.mrb[0].mxu0
        %v3261 = vadd.f32 0.0, %v3260
        %v3262 = vpop.f32.mrb[0].mxu0
        %v3263 = vpop.f32.mrb[0].mxu0
        %v3264 = vadd.f32 0.0, %v3263
        %v3265 = vpop.f32.mrb[0].mxu0
        %3266 = vmatprep.mubr.bf16.mxu0 0
        %3267 = vmatmul.mubr.bf16.gmra.mrb[0].mxu0 %v3205
        %v3268 = vpop.f32.mrb[0].mxu0
        %v3269 = vadd.f32 0.0, %v3268
        %v3270 = vpop.f32.mrb[0].mxu0
        %v3271 = vpop.f32.mrb[0].mxu0
        %v3272 = vadd.f32 0.0, %v3271
        %v3273 = vpop.f32.mrb[0].mxu0
        %3274 = vdwg.mxu0
        %v3275 = vadd.f32 %v2857, %v3245
        %v3276 = vadd.f32 %v2858, %v3248
        %v3277 = vadd.f32 %v2859, %v3253
        %v3278 = vadd.f32 %v2860, %v3256
        %v3279 = vadd.f32 %v2861, %v3261
        %v3280 = vadd.f32 %v2862, %v3264
        %v3281 = vadd.f32 %v2863, %v3269
        %v3282 = vadd.f32 %v2864, %v3272
        %v3283 = vld [vmem:[%s334 + $0x4] sm:$0x8]
        %v3284 = vld [vmem:[%s334 + $0x24] sm:$0xf]
        %s3285 = scalar_lea.vmem [#allocation8], 42
        %v3286 = vld [vmem:[%s3285] sm:$0x3]
        %v3289 = vunpack.c.l.b16 %v3283
        %v3290 = vunpack.c.l.b16 %v3284
        %v3291 = vpack.c.b16 %v3146, %v3289
        %v3292 = vpack.c.b16 %v3290, %v3290
        %v3294 = vshrl.u32 %v3291, 16
        %v3296 = vrot.slane %v3294, 3
        %v3297 = vshll.u32 %v3291, 16
        %v3299 = vrot.slane %v3297, 4
        %v3300 = vor.u32 %v3296, %v3299
        %v3301 = vrot.slane %v3171, 3
        %v3302 = vrot.slane %v3167, 4
        %v3303 = vor.u32 %v3301, %v3302
        %v3304 = vsel %vm702, %v3300, %v3303
        %v3305 = vrot.slane %v3179, 3
        %v3306 = vrot.slane %v3175, 4
        %v3307 = vor.u32 %v3305, %v3306
        %v3308 = vsel %vm702, %v3303, %v3307
        %v3309 = vrot.slane %v3187, 3
        %v3310 = vrot.slane %v3183, 4
        %v3311 = vor.u32 %v3309, %v3310
        %v3312 = vsel %vm702, %v3307, %v3311
        %v3314 = vshrl.u32 %v3292, 16
        %v3316 = vrot.slane %v3314, 3
        %v3317 = vshll.u32 %v3292, 16
        %v3319 = vrot.slane %v3317, 4
        %v3320 = vor.u32 %v3316, %v3319
        %v3321 = vsel %vm702, %v3311, %v3320
        %v3323 = vsel %vm574, %v3304, 0
        %v3326 = vsel %vm574, %v3308, 0
        %v3329 = vsel %vm574, %v3312, 0
        %v3332 = vsel %vm574, %v3321, 0
        %v3335 = vsel %vm587, %v3286, 0
        %3337 = vmatprep.subr.bf16.mxu0 0
        %3338 = vmatpush1.bf16.msra.mxu0 %v3335
        %3339 = vmatprep.subr.bf16.mxu0 0
        %3340 = vmatpush1.bf16.msra.mxu0 0
        %3341 = vmatprep.subr.bf16.mxu0 0
        %3342 = vmatpush1.bf16.msra.mxu0 0
        %3343 = vmatprep.subr.bf16.mxu0 0
        %3344 = vmatpush1.bf16.msra.mxu0 0
        %3345 = vmatprep.subr.bf16.mxu0 0
        %3346 = vmatpush1.bf16.msra.mxu0 0
        %3347 = vmatprep.subr.bf16.mxu0 0
        %3348 = vmatpush1.bf16.msra.mxu0 0
        %3349 = vmatprep.subr.bf16.mxu0 0
        %3350 = vmatpush1.bf16.msra.mxu0 0
        %3351 = vmatprep.subr.bf16.mxu0 0
        %3352 = vmatpush1.bf16.msra.mxu0 0
        %3353 = vmatprep.subr.bf16.mxu0 0
        %3354 = vmatpush1.bf16.msra.mxu0 0
        %3355 = vmatprep.subr.bf16.mxu0 0
        %3356 = vmatpush1.bf16.msra.mxu0 0
        %3357 = vmatprep.subr.bf16.mxu0 0
        %3358 = vmatpush1.bf16.msra.mxu0 0
        %3359 = vmatprep.subr.bf16.mxu0 0
        %3360 = vmatpush1.bf16.msra.mxu0 0
        %3361 = vmatprep.subr.bf16.mxu0 0
        %3362 = vmatpush1.bf16.msra.mxu0 0
        %3363 = vmatprep.subr.bf16.mxu0 0
        %3364 = vmatpush1.bf16.msra.mxu0 0
        %3365 = vmatprep.subr.bf16.mxu0 0
        %3366 = vmatpush1.bf16.msra.mxu0 0
        %3367 = vmatprep.subr.bf16.mxu0 0
        %3368 = vmatpush1.bf16.msra.mxu0 0
        %3369 = vmatprep.mubr.bf16.mxu0 0
        %3370 = vmatmul.mubr.bf16.gmra.mrb[0].mxu0 %v3323
        %v3371 = vpop.f32.mrb[0].mxu0
        %v3372 = vadd.f32 0.0, %v3371
        %v3373 = vpop.f32.mrb[0].mxu0
        %v3374 = vpop.f32.mrb[0].mxu0
        %v3375 = vadd.f32 0.0, %v3374
        %v3376 = vpop.f32.mrb[0].mxu0
        %3377 = vmatprep.mubr.bf16.mxu0 0
        %3378 = vmatmul.mubr.bf16.gmra.mrb[0].mxu0 %v3326
        %v3379 = vpop.f32.mrb[0].mxu0
        %v3380 = vadd.f32 0.0, %v3379
        %v3381 = vpop.f32.mrb[0].mxu0
        %v3382 = vpop.f32.mrb[0].mxu0
        %v3383 = vadd.f32 0.0, %v3382
        %v3384 = vpop.f32.mrb[0].mxu0
        %3385 = vmatprep.mubr.bf16.mxu0 0
        %3386 = vmatmul.mubr.bf16.gmra.mrb[0].mxu0 %v3329
        %v3387 = vpop.f32.mrb[0].mxu0
        %v3388 = vadd.f32 0.0, %v3387
        %v3389 = vpop.f32.mrb[0].mxu0
        %v3390 = vpop.f32.mrb[0].mxu0
        %v3391 = vadd.f32 0.0, %v3390
        %v3392 = vpop.f32.mrb[0].mxu0
        %3393 = vmatprep.mubr.bf16.mxu0 0
        %3394 = vmatmul.mubr.bf16.gmra.mrb[0].mxu0 %v3332
        %v3395 = vpop.f32.mrb[0].mxu0
        %v3396 = vadd.f32 0.0, %v3395
        %v3397 = vpop.f32.mrb[0].mxu0
        %v3398 = vpop.f32.mrb[0].mxu0
        %v3399 = vadd.f32 0.0, %v3398
        %v3400 = vpop.f32.mrb[0].mxu0
        %3401 = vdwg.mxu0
        %v3402 = vadd.f32 %v3023, %v3372
        %v3403 = vadd.f32 %v3024, %v3375
        %v3404 = vadd.f32 %v3025, %v3380
        %v3405 = vadd.f32 %v3026, %v3383
        %v3406 = vadd.f32 %v3027, %v3388
        %v3407 = vadd.f32 %v3028, %v3391
        %v3408 = vadd.f32 %v3029, %v3396
        %v3409 = vadd.f32 %v3030, %v3399
        %s3410 = scalar_lea.vmem [#allocation8], 44
        %v3411 = vld [vmem:[%s3410] sm:$0x3]
        %v3412 = vpack.c.b16 %v3147, %v3146
        %v3413 = vpack.c.b16 %v3149, %v3148
        %v3414 = vpack.c.b16 %v3151, %v3150
        %v3415 = vpack.c.b16 %v3290, %v3152
        %v3417 = vsel %vm574, %v3412, 0
        %v3420 = vsel %vm574, %v3413, 0
        %v3423 = vsel %vm574, %v3414, 0
        %v3426 = vsel %vm574, %v3415, 0
        %v3429 = vsel %vm587, %v3411, 0
        %3431 = vmatprep.subr.bf16.mxu0 0
        %3432 = vmatpush1.bf16.msra.mxu0 %v3429
        %3433 = vmatprep.subr.bf16.mxu0 0
        %3434 = vmatpush1.bf16.msra.mxu0 0
        %3435 = vmatprep.subr.bf16.mxu0 0
        %3436 = vmatpush1.bf16.msra.mxu0 0
        %3437 = vmatprep.subr.bf16.mxu0 0
        %3438 = vmatpush1.bf16.msra.mxu0 0
        %3439 = vmatprep.subr.bf16.mxu0 0
        %3440 = vmatpush1.bf16.msra.mxu0 0
        %3441 = vmatprep.subr.bf16.mxu0 0
        %3442 = vmatpush1.bf16.msra.mxu0 0
        %3443 = vmatprep.subr.bf16.mxu0 0
        %3444 = vmatpush1.bf16.msra.mxu0 0
        %3445 = vmatprep.subr.bf16.mxu0 0
        %3446 = vmatpush1.bf16.msra.mxu0 0
        %3447 = vmatprep.subr.bf16.mxu0 0
        %3448 = vmatpush1.bf16.msra.mxu0 0
        %3449 = vmatprep.subr.bf16.mxu0 0
        %3450 = vmatpush1.bf16.msra.mxu0 0
        %3451 = vmatprep.subr.bf16.mxu0 0
        %3452 = vmatpush1.bf16.msra.mxu0 0
        %3453 = vmatprep.subr.bf16.mxu0 0
        %3454 = vmatpush1.bf16.msra.mxu0 0
        %3455 = vmatprep.subr.bf16.mxu0 0
        %3456 = vmatpush1.bf16.msra.mxu0 0
        %3457 = vmatprep.subr.bf16.mxu0 0
        %3458 = vmatpush1.bf16.msra.mxu0 0
        %3459 = vmatprep.subr.bf16.mxu0 0
        %3460 = vmatpush1.bf16.msra.mxu0 0
        %3461 = vmatprep.subr.bf16.mxu0 0
        %3462 = vmatpush1.bf16.msra.mxu0 0
        %3463 = vmatprep.mubr.bf16.mxu0 0
        %3464 = vmatmul.mubr.bf16.gmra.mrb[0].mxu0 %v3417
        %v3465 = vpop.f32.mrb[0].mxu0
        %v3466 = vadd.f32 0.0, %v3465
        %v3467 = vpop.f32.mrb[0].mxu0
        %v3468 = vpop.f32.mrb[0].mxu0
        %v3469 = vadd.f32 0.0, %v3468
        %v3470 = vpop.f32.mrb[0].mxu0
        %3471 = vmatprep.mubr.bf16.mxu0 0
        %3472 = vmatmul.mubr.bf16.gmra.mrb[0].mxu0 %v3420
        %v3473 = vpop.f32.mrb[0].mxu0
        %v3474 = vadd.f32 0.0, %v3473
        %v3475 = vpop.f32.mrb[0].mxu0
        %v3476 = vpop.f32.mrb[0].mxu0
        %v3477 = vadd.f32 0.0, %v3476
        %v3478 = vpop.f32.mrb[0].mxu0
        %3479 = vmatprep.mubr.bf16.mxu0 0
        %3480 = vmatmul.mubr.bf16.gmra.mrb[0].mxu0 %v3423
        %v3481 = vpop.f32.mrb[0].mxu0
        %v3482 = vadd.f32 0.0, %v3481
        %v3483 = vpop.f32.mrb[0].mxu0
        %v3484 = vpop.f32.mrb[0].mxu0
        %v3485 = vadd.f32 0.0, %v3484
        %v3486 = vpop.f32.mrb[0].mxu0
        %3487 = vmatprep.mubr.bf16.mxu0 0
        %3488 = vmatmul.mubr.bf16.gmra.mrb[0].mxu0 %v3426
        %v3489 = vpop.f32.mrb[0].mxu0
        %v3490 = vadd.f32 0.0, %v3489
        %v3491 = vpop.f32.mrb[0].mxu0
        %v3492 = vpop.f32.mrb[0].mxu0
        %v3493 = vadd.f32 0.0, %v3492
        %v3494 = vpop.f32.mrb[0].mxu0
        %3495 = vdwg.mxu0
        %v3496 = vadd.f32 %v3117, %v3466
        %v3497 = vadd.f32 %v3118, %v3469
        %v3498 = vadd.f32 %v3119, %v3474
        %v3499 = vadd.f32 %v3120, %v3477
        %v3500 = vadd.f32 %v3121, %v3482
        %v3501 = vadd.f32 %v3122, %v3485
        %v3502 = vadd.f32 %v3123, %v3490
        %v3503 = vadd.f32 %v3124, %v3493
        %v3504 = vld [vmem:[%s334 + $0x8] sm:$0xf]
        %v3505 = vld [vmem:[%s334 + $0xc] sm:$0xf]
        %v3506 = vld [vmem:[%s334 + $0x10] sm:$0xf]
        %v3507 = vld [vmem:[%s334 + $0x14] sm:$0xf]
        %v3508 = vld [vmem:[%s334 + $0x18] sm:$0xf]
        %v3509 = vld [vmem:[%s334 + $0x1c] sm:$0xf]
        %v3510 = vld [vmem:[%s334 + $0x20] sm:$0xf]
        %v3511 = vld [vmem:[%s334 + $0x24] sm:$0xf]
        %v3512 = vld [vmem:[%s334 + $0x28] sm:$0x1]
        %s3513 = scalar_lea.vmem [#allocation8], 46
        %v3514 = vld [vmem:[%s3513] sm:$0x3]
        %v3524 = vunpack.c.l.b16 %v3504
        %v3525 = vunpack.c.l.b16 %v3505
        %v3526 = vunpack.c.l.b16 %v3506
        %v3527 = vunpack.c.l.b16 %v3507
        %v3528 = vunpack.c.l.b16 %v3508
        %v3529 = vunpack.c.l.b16 %v3509
        %v3530 = vunpack.c.l.b16 %v3510
        %v3531 = vunpack.c.l.b16 %v3511
        %v3532 = vunpack.c.l.b16 %v3512
        %v3533 = vpack.c.b16 %v3525, %v3524
        %v3534 = vpack.c.b16 %v3527, %v3526
        %v3535 = vpack.c.b16 %v3529, %v3528
        %v3536 = vpack.c.b16 %v3531, %v3530
        %v3537 = vpack.c.b16 %v3532, %v3532
        %v3539 = vshrl.u32 %v3533, 16
        %v3541 = vshll.u32 %v3533, 16
        %v3543 = vrot.slane %v3541, 1
        %v3544 = vor.u32 %v3539, %v3543
        %v3546 = vshll.u32 %v3534, 16
        %v3548 = vrot.slane %v3546, 1
        %v3549 = vsel %vm1086, %v3544, %v3548
        %v3550 = vshrl.u32 %v3534, 16
        %v3552 = vor.u32 %v3550, %v3548
        %v3554 = vshll.u32 %v3535, 16
        %v3556 = vrot.slane %v3554, 1
        %v3557 = vsel %vm1086, %v3552, %v3556
        %v3558 = vshrl.u32 %v3535, 16
        %v3560 = vor.u32 %v3558, %v3556
        %v3562 = vshll.u32 %v3536, 16
        %v3564 = vrot.slane %v3562, 1
        %v3565 = vsel %vm1086, %v3560, %v3564
        %v3566 = vshrl.u32 %v3536, 16
        %v3568 = vor.u32 %v3566, %v3564
        %v3570 = vshll.u32 %v3537, 16
        %v3572 = vrot.slane %v3570, 1
        %v3573 = vsel %vm1086, %v3568, %v3572
        %v3575 = vsel %vm574, %v3549, 0
        %v3578 = vsel %vm574, %v3557, 0
        %v3581 = vsel %vm574, %v3565, 0
        %v3584 = vsel %vm574, %v3573, 0
        %v3587 = vsel %vm587, %v3514, 0
        %3589 = vmatprep.subr.bf16.mxu0 0
        %3590 = vmatpush1.bf16.msra.mxu0 %v3587
        %3591 = vmatprep.subr.bf16.mxu0 0
        %3592 = vmatpush1.bf16.msra.mxu0 0
        %3593 = vmatprep.subr.bf16.mxu0 0
        %3594 = vmatpush1.bf16.msra.mxu0 0
        %3595 = vmatprep.subr.bf16.mxu0 0
        %3596 = vmatpush1.bf16.msra.mxu0 0
        %3597 = vmatprep.subr.bf16.mxu0 0
        %3598 = vmatpush1.bf16.msra.mxu0 0
        %3599 = vmatprep.subr.bf16.mxu0 0
        %3600 = vmatpush1.bf16.msra.mxu0 0
        %3601 = vmatprep.subr.bf16.mxu0 0
        %3602 = vmatpush1.bf16.msra.mxu0 0
        %3603 = vmatprep.subr.bf16.mxu0 0
        %3604 = vmatpush1.bf16.msra.mxu0 0
        %3605 = vmatprep.subr.bf16.mxu0 0
        %3606 = vmatpush1.bf16.msra.mxu0 0
        %3607 = vmatprep.subr.bf16.mxu0 0
        %3608 = vmatpush1.bf16.msra.mxu0 0
        %3609 = vmatprep.subr.bf16.mxu0 0
        %3610 = vmatpush1.bf16.msra.mxu0 0
        %3611 = vmatprep.subr.bf16.mxu0 0
        %3612 = vmatpush1.bf16.msra.mxu0 0
        %3613 = vmatprep.subr.bf16.mxu0 0
        %3614 = vmatpush1.bf16.msra.mxu0 0
        %3615 = vmatprep.subr.bf16.mxu0 0
        %3616 = vmatpush1.bf16.msra.mxu0 0
        %3617 = vmatprep.subr.bf16.mxu0 0
        %3618 = vmatpush1.bf16.msra.mxu0 0
        %3619 = vmatprep.subr.bf16.mxu0 0
        %3620 = vmatpush1.bf16.msra.mxu0 0
        %3621 = vmatprep.mubr.bf16.mxu0 0
        %3622 = vmatmul.mubr.bf16.gmra.mrb[0].mxu0 %v3575
        %v3623 = vpop.f32.mrb[0].mxu0
        %v3624 = vadd.f32 0.0, %v3623
        %v3625 = vpop.f32.mrb[0].mxu0
        %v3626 = vpop.f32.mrb[0].mxu0
        %v3627 = vadd.f32 0.0, %v3626
        %v3628 = vpop.f32.mrb[0].mxu0
        %3629 = vmatprep.mubr.bf16.mxu0 0
        %3630 = vmatmul.mubr.bf16.gmra.mrb[0].mxu0 %v3578
        %v3631 = vpop.f32.mrb[0].mxu0
        %v3632 = vadd.f32 0.0, %v3631
        %v3633 = vpop.f32.mrb[0].mxu0
        %v3634 = vpop.f32.mrb[0].mxu0
        %v3635 = vadd.f32 0.0, %v3634
        %v3636 = vpop.f32.mrb[0].mxu0
        %3637 = vmatprep.mubr.bf16.mxu0 0
        %3638 = vmatmul.mubr.bf16.gmra.mrb[0].mxu0 %v3581
        %v3639 = vpop.f32.mrb[0].mxu0
        %v3640 = vadd.f32 0.0, %v3639
        %v3641 = vpop.f32.mrb[0].mxu0
        %v3642 = vpop.f32.mrb[0].mxu0
        %v3643 = vadd.f32 0.0, %v3642
        %v3644 = vpop.f32.mrb[0].mxu0
        %3645 = vmatprep.mubr.bf16.mxu0 0
        %3646 = vmatmul.mubr.bf16.gmra.mrb[0].mxu0 %v3584
        %v3647 = vpop.f32.mrb[0].mxu0
        %v3648 = vadd.f32 0.0, %v3647
        %v3649 = vpop.f32.mrb[0].mxu0
        %v3650 = vpop.f32.mrb[0].mxu0
        %v3651 = vadd.f32 0.0, %v3650
        %v3652 = vpop.f32.mrb[0].mxu0
        %3653 = vdwg.mxu0
        %v3654 = vadd.f32 %v3275, %v3624
        %v3655 = vadd.f32 %v3276, %v3627
        %v3656 = vadd.f32 %v3277, %v3632
        %v3657 = vadd.f32 %v3278, %v3635
        %v3658 = vadd.f32 %v3279, %v3640
        %v3659 = vadd.f32 %v3280, %v3643
        %v3660 = vadd.f32 %v3281, %v3648
        %v3661 = vadd.f32 %v3282, %v3651
        %v3662 = vld [vmem:[%s334 + $0x8] sm:$0x8]
        %v3663 = vld [vmem:[%s334 + $0x28] sm:$0xf]
        %s3664 = scalar_lea.vmem [#allocation8], 48
        %v3665 = vld [vmem:[%s3664] sm:$0x3]
        %v3668 = vunpack.c.l.b16 %v3662
        %v3669 = vunpack.c.l.b16 %v3663
        %v3670 = vpack.c.b16 %v3525, %v3668
        %v3671 = vpack.c.b16 %v3669, %v3669
        %v3673 = vshrl.u32 %v3670, 16
        %v3675 = vrot.slane %v3673, 3
        %v3676 = vshll.u32 %v3670, 16
        %v3678 = vrot.slane %v3676, 4
        %v3679 = vor.u32 %v3675, %v3678
        %v3680 = vrot.slane %v3550, 3
        %v3681 = vrot.slane %v3546, 4
        %v3682 = vor.u32 %v3680, %v3681
        %v3683 = vsel %vm702, %v3679, %v3682
        %v3684 = vrot.slane %v3558, 3
        %v3685 = vrot.slane %v3554, 4
        %v3686 = vor.u32 %v3684, %v3685
        %v3687 = vsel %vm702, %v3682, %v3686
        %v3688 = vrot.slane %v3566, 3
        %v3689 = vrot.slane %v3562, 4
        %v3690 = vor.u32 %v3688, %v3689
        %v3691 = vsel %vm702, %v3686, %v3690
        %v3693 = vshrl.u32 %v3671, 16
        %v3695 = vrot.slane %v3693, 3
        %v3696 = vshll.u32 %v3671, 16
        %v3698 = vrot.slane %v3696, 4
        %v3699 = vor.u32 %v3695, %v3698
        %v3700 = vsel %vm702, %v3690, %v3699
        %v3702 = vsel %vm574, %v3683, 0
        %v3705 = vsel %vm574, %v3687, 0
        %v3708 = vsel %vm574, %v3691, 0
        %v3711 = vsel %vm574, %v3700, 0
        %v3714 = vsel %vm587, %v3665, 0
        %3716 = vmatprep.subr.bf16.mxu0 0
        %3717 = vmatpush1.bf16.msra.mxu0 %v3714
        %3718 = vmatprep.subr.bf16.mxu0 0
        %3719 = vmatpush1.bf16.msra.mxu0 0
        %3720 = vmatprep.subr.bf16.mxu0 0
        %3721 = vmatpush1.bf16.msra.mxu0 0
        %3722 = vmatprep.subr.bf16.mxu0 0
        %3723 = vmatpush1.bf16.msra.mxu0 0
        %3724 = vmatprep.subr.bf16.mxu0 0
        %3725 = vmatpush1.bf16.msra.mxu0 0
        %3726 = vmatprep.subr.bf16.mxu0 0
        %3727 = vmatpush1.bf16.msra.mxu0 0
        %3728 = vmatprep.subr.bf16.mxu0 0
        %3729 = vmatpush1.bf16.msra.mxu0 0
        %3730 = vmatprep.subr.bf16.mxu0 0
        %3731 = vmatpush1.bf16.msra.mxu0 0
        %3732 = vmatprep.subr.bf16.mxu0 0
        %3733 = vmatpush1.bf16.msra.mxu0 0
        %3734 = vmatprep.subr.bf16.mxu0 0
        %3735 = vmatpush1.bf16.msra.mxu0 0
        %3736 = vmatprep.subr.bf16.mxu0 0
        %3737 = vmatpush1.bf16.msra.mxu0 0
        %3738 = vmatprep.subr.bf16.mxu0 0
        %3739 = vmatpush1.bf16.msra.mxu0 0
        %3740 = vmatprep.subr.bf16.mxu0 0
        %3741 = vmatpush1.bf16.msra.mxu0 0
        %3742 = vmatprep.subr.bf16.mxu0 0
        %3743 = vmatpush1.bf16.msra.mxu0 0
        %3744 = vmatprep.subr.bf16.mxu0 0
        %3745 = vmatpush1.bf16.msra.mxu0 0
        %3746 = vmatprep.subr.bf16.mxu0 0
        %3747 = vmatpush1.bf16.msra.mxu0 0
        %3748 = vmatprep.mubr.bf16.mxu0 0
        %3749 = vmatmul.mubr.bf16.gmra.mrb[0].mxu0 %v3702
        %v3750 = vpop.f32.mrb[0].mxu0
        %v3751 = vadd.f32 0.0, %v3750
        %v3752 = vpop.f32.mrb[0].mxu0
        %v3753 = vpop.f32.mrb[0].mxu0
        %v3754 = vadd.f32 0.0, %v3753
        %v3755 = vpop.f32.mrb[0].mxu0
        %3756 = vmatprep.mubr.bf16.mxu0 0
        %3757 = vmatmul.mubr.bf16.gmra.mrb[0].mxu0 %v3705
        %v3758 = vpop.f32.mrb[0].mxu0
        %v3759 = vadd.f32 0.0, %v3758
        %v3760 = vpop.f32.mrb[0].mxu0
        %v3761 = vpop.f32.mrb[0].mxu0
        %v3762 = vadd.f32 0.0, %v3761
        %v3763 = vpop.f32.mrb[0].mxu0
        %3764 = vmatprep.mubr.bf16.mxu0 0
        %3765 = vmatmul.mubr.bf16.gmra.mrb[0].mxu0 %v3708
        %v3766 = vpop.f32.mrb[0].mxu0
        %v3767 = vadd.f32 0.0, %v3766
        %v3768 = vpop.f32.mrb[0].mxu0
        %v3769 = vpop.f32.mrb[0].mxu0
        %v3770 = vadd.f32 0.0, %v3769
        %v3771 = vpop.f32.mrb[0].mxu0
        %3772 = vmatprep.mubr.bf16.mxu0 0
        %3773 = vmatmul.mubr.bf16.gmra.mrb[0].mxu0 %v3711
        %v3774 = vpop.f32.mrb[0].mxu0
        %v3775 = vadd.f32 0.0, %v3774
        %v3776 = vpop.f32.mrb[0].mxu0
        %v3777 = vpop.f32.mrb[0].mxu0
        %v3778 = vadd.f32 0.0, %v3777
        %v3779 = vpop.f32.mrb[0].mxu0
        %3780 = vdwg.mxu0
        %v3781 = vadd.f32 %v3402, %v3751
        %v3782 = vadd.f32 %v3403, %v3754
        %v3783 = vadd.f32 %v3404, %v3759
        %v3784 = vadd.f32 %v3405, %v3762
        %v3785 = vadd.f32 %v3406, %v3767
        %v3786 = vadd.f32 %v3407, %v3770
        %v3787 = vadd.f32 %v3408, %v3775
        %v3788 = vadd.f32 %v3409, %v3778
        %s3789 = scalar_lea.vmem [#allocation8], 50
        %v3790 = vld [vmem:[%s3789] sm:$0x3]
        %v3791 = vpack.c.b16 %v3526, %v3525
        %v3792 = vpack.c.b16 %v3528, %v3527
        %v3793 = vpack.c.b16 %v3530, %v3529
        %v3794 = vpack.c.b16 %v3669, %v3531
        %v3796 = vsel %vm574, %v3791, 0
        %v3799 = vsel %vm574, %v3792, 0
        %v3802 = vsel %vm574, %v3793, 0
        %v3805 = vsel %vm574, %v3794, 0
        %v3808 = vsel %vm587, %v3790, 0
        %3810 = vmatprep.subr.bf16.mxu0 0
        %3811 = vmatpush1.bf16.msra.mxu0 %v3808
        %3812 = vmatprep.subr.bf16.mxu0 0
        %3813 = vmatpush1.bf16.msra.mxu0 0
        %3814 = vmatprep.subr.bf16.mxu0 0
        %3815 = vmatpush1.bf16.msra.mxu0 0
        %3816 = vmatprep.subr.bf16.mxu0 0
        %3817 = vmatpush1.bf16.msra.mxu0 0
        %3818 = vmatprep.subr.bf16.mxu0 0
        %3819 = vmatpush1.bf16.msra.mxu0 0
        %3820 = vmatprep.subr.bf16.mxu0 0
        %3821 = vmatpush1.bf16.msra.mxu0 0
        %3822 = vmatprep.subr.bf16.mxu0 0
        %3823 = vmatpush1.bf16.msra.mxu0 0
        %3824 = vmatprep.subr.bf16.mxu0 0
        %3825 = vmatpush1.bf16.msra.mxu0 0
        %3826 = vmatprep.subr.bf16.mxu0 0
        %3827 = vmatpush1.bf16.msra.mxu0 0
        %3828 = vmatprep.subr.bf16.mxu0 0
        %3829 = vmatpush1.bf16.msra.mxu0 0
        %3830 = vmatprep.subr.bf16.mxu0 0
        %3831 = vmatpush1.bf16.msra.mxu0 0
        %3832 = vmatprep.subr.bf16.mxu0 0
        %3833 = vmatpush1.bf16.msra.mxu0 0
        %3834 = vmatprep.subr.bf16.mxu0 0
        %3835 = vmatpush1.bf16.msra.mxu0 0
        %3836 = vmatprep.subr.bf16.mxu0 0
        %3837 = vmatpush1.bf16.msra.mxu0 0
        %3838 = vmatprep.subr.bf16.mxu0 0
        %3839 = vmatpush1.bf16.msra.mxu0 0
        %3840 = vmatprep.subr.bf16.mxu0 0
        %3841 = vmatpush1.bf16.msra.mxu0 0
        %3842 = vmatprep.mubr.bf16.mxu0 0
        %3843 = vmatmul.mubr.bf16.gmra.mrb[0].mxu0 %v3796
        %v3844 = vpop.f32.mrb[0].mxu0
        %v3845 = vadd.f32 0.0, %v3844
        %v3846 = vpop.f32.mrb[0].mxu0
        %v3847 = vpop.f32.mrb[0].mxu0
        %v3848 = vadd.f32 0.0, %v3847
        %v3849 = vpop.f32.mrb[0].mxu0
        %3850 = vmatprep.mubr.bf16.mxu0 0
        %3851 = vmatmul.mubr.bf16.gmra.mrb[0].mxu0 %v3799
        %v3852 = vpop.f32.mrb[0].mxu0
        %v3853 = vadd.f32 0.0, %v3852
        %v3854 = vpop.f32.mrb[0].mxu0
        %v3855 = vpop.f32.mrb[0].mxu0
        %v3856 = vadd.f32 0.0, %v3855
        %v3857 = vpop.f32.mrb[0].mxu0
        %3858 = vmatprep.mubr.bf16.mxu0 0
        %3859 = vmatmul.mubr.bf16.gmra.mrb[0].mxu0 %v3802
        %v3860 = vpop.f32.mrb[0].mxu0
        %v3861 = vadd.f32 0.0, %v3860
        %v3862 = vpop.f32.mrb[0].mxu0
        %v3863 = vpop.f32.mrb[0].mxu0
        %v3864 = vadd.f32 0.0, %v3863
        %v3865 = vpop.f32.mrb[0].mxu0
        %3866 = vmatprep.mubr.bf16.mxu0 0
        %3867 = vmatmul.mubr.bf16.gmra.mrb[0].mxu0 %v3805
        %v3868 = vpop.f32.mrb[0].mxu0
        %v3869 = vadd.f32 0.0, %v3868
        %v3870 = vpop.f32.mrb[0].mxu0
        %v3871 = vpop.f32.mrb[0].mxu0
        %v3872 = vadd.f32 0.0, %v3871
        %v3873 = vpop.f32.mrb[0].mxu0
        %3874 = vdwg.mxu0
        %v3875 = vadd.f32 %v3496, %v3845
        %v3876 = vadd.f32 %v3497, %v3848
        %v3877 = vadd.f32 %v3498, %v3853
        %v3878 = vadd.f32 %v3499, %v3856
        %v3879 = vadd.f32 %v3500, %v3861
        %v3880 = vadd.f32 %v3501, %v3864
        %v3881 = vadd.f32 %v3502, %v3869
        %v3882 = vadd.f32 %v3503, %v3872
        %v3883 = vld [vmem:[%s334 + $0xc] sm:$0xf]
        %v3884 = vld [vmem:[%s334 + $0x10] sm:$0xf]
        %v3885 = vld [vmem:[%s334 + $0x14] sm:$0xf]
        %v3886 = vld [vmem:[%s334 + $0x18] sm:$0xf]
        %v3887 = vld [vmem:[%s334 + $0x1c] sm:$0xf]
        %v3888 = vld [vmem:[%s334 + $0x20] sm:$0xf]
        %v3889 = vld [vmem:[%s334 + $0x24] sm:$0xf]
        %v3890 = vld [vmem:[%s334 + $0x28] sm:$0xf]
        %v3891 = vld [vmem:[%s334 + $0x2c] sm:$0x1]
        %s3892 = scalar_lea.vmem [#allocation8], 52
        %v3893 = vld [vmem:[%s3892] sm:$0x3]
        %v3903 = vunpack.c.l.b16 %v3883
        %v3904 = vunpack.c.l.b16 %v3884
        %v3905 = vunpack.c.l.b16 %v3885
        %v3906 = vunpack.c.l.b16 %v3886
        %v3907 = vunpack.c.l.b16 %v3887
        %v3908 = vunpack.c.l.b16 %v3888
        %v3909 = vunpack.c.l.b16 %v3889
        %v3910 = vunpack.c.l.b16 %v3890
        %v3911 = vunpack.c.l.b16 %v3891
        %v3912 = vpack.c.b16 %v3904, %v3903
        %v3913 = vpack.c.b16 %v3906, %v3905
        %v3914 = vpack.c.b16 %v3908, %v3907
        %v3915 = vpack.c.b16 %v3910, %v3909
        %v3916 = vpack.c.b16 %v3911, %v3911
        %v3918 = vshrl.u32 %v3912, 16
        %v3920 = vshll.u32 %v3912, 16
        %v3922 = vrot.slane %v3920, 1
        %v3923 = vor.u32 %v3918, %v3922
        %v3925 = vshll.u32 %v3913, 16
        %v3927 = vrot.slane %v3925, 1
        %v3928 = vsel %vm1086, %v3923, %v3927
        %v3929 = vshrl.u32 %v3913, 16
        %v3931 = vor.u32 %v3929, %v3927
        %v3933 = vshll.u32 %v3914, 16
        %v3935 = vrot.slane %v3933, 1
        %v3936 = vsel %vm1086, %v3931, %v3935
        %v3937 = vshrl.u32 %v3914, 16
        %v3939 = vor.u32 %v3937, %v3935
        %v3941 = vshll.u32 %v3915, 16
        %v3943 = vrot.slane %v3941, 1
        %v3944 = vsel %vm1086, %v3939, %v3943
        %v3945 = vshrl.u32 %v3915, 16
        %v3947 = vor.u32 %v3945, %v3943
        %v3949 = vshll.u32 %v3916, 16
        %v3951 = vrot.slane %v3949, 1
        %v3952 = vsel %vm1086, %v3947, %v3951
        %v3954 = vsel %vm574, %v3928, 0
        %v3957 = vsel %vm574, %v3936, 0
        %v3960 = vsel %vm574, %v3944, 0
        %v3963 = vsel %vm574, %v3952, 0
        %v3966 = vsel %vm587, %v3893, 0
        %3968 = vmatprep.subr.bf16.mxu0 0
        %3969 = vmatpush1.bf16.msra.mxu0 %v3966
        %3970 = vmatprep.subr.bf16.mxu0 0
        %3971 = vmatpush1.bf16.msra.mxu0 0
        %3972 = vmatprep.subr.bf16.mxu0 0
        %3973 = vmatpush1.bf16.msra.mxu0 0
        %3974 = vmatprep.subr.bf16.mxu0 0
        %3975 = vmatpush1.bf16.msra.mxu0 0
        %3976 = vmatprep.subr.bf16.mxu0 0
        %3977 = vmatpush1.bf16.msra.mxu0 0
        %3978 = vmatprep.subr.bf16.mxu0 0
        %3979 = vmatpush1.bf16.msra.mxu0 0
        %3980 = vmatprep.subr.bf16.mxu0 0
        %3981 = vmatpush1.bf16.msra.mxu0 0
        %3982 = vmatprep.subr.bf16.mxu0 0
        %3983 = vmatpush1.bf16.msra.mxu0 0
        %3984 = vmatprep.subr.bf16.mxu0 0
        %3985 = vmatpush1.bf16.msra.mxu0 0
        %3986 = vmatprep.subr.bf16.mxu0 0
        %3987 = vmatpush1.bf16.msra.mxu0 0
        %3988 = vmatprep.subr.bf16.mxu0 0
        %3989 = vmatpush1.bf16.msra.mxu0 0
        %3990 = vmatprep.subr.bf16.mxu0 0
        %3991 = vmatpush1.bf16.msra.mxu0 0
        %3992 = vmatprep.subr.bf16.mxu0 0
        %3993 = vmatpush1.bf16.msra.mxu0 0
        %3994 = vmatprep.subr.bf16.mxu0 0
        %3995 = vmatpush1.bf16.msra.mxu0 0
        %3996 = vmatprep.subr.bf16.mxu0 0
        %3997 = vmatpush1.bf16.msra.mxu0 0
        %3998 = vmatprep.subr.bf16.mxu0 0
        %3999 = vmatpush1.bf16.msra.mxu0 0
        %4000 = vmatprep.mubr.bf16.mxu0 0
        %4001 = vmatmul.mubr.bf16.gmra.mrb[0].mxu0 %v3954
        %v4002 = vpop.f32.mrb[0].mxu0
        %v4003 = vadd.f32 0.0, %v4002
        %v4004 = vpop.f32.mrb[0].mxu0
        %v4005 = vpop.f32.mrb[0].mxu0
        %v4006 = vadd.f32 0.0, %v4005
        %v4007 = vpop.f32.mrb[0].mxu0
        %4008 = vmatprep.mubr.bf16.mxu0 0
        %4009 = vmatmul.mubr.bf16.gmra.mrb[0].mxu0 %v3957
        %v4010 = vpop.f32.mrb[0].mxu0
        %v4011 = vadd.f32 0.0, %v4010
        %v4012 = vpop.f32.mrb[0].mxu0
        %v4013 = vpop.f32.mrb[0].mxu0
        %v4014 = vadd.f32 0.0, %v4013
        %v4015 = vpop.f32.mrb[0].mxu0
        %4016 = vmatprep.mubr.bf16.mxu0 0
        %4017 = vmatmul.mubr.bf16.gmra.mrb[0].mxu0 %v3960
        %v4018 = vpop.f32.mrb[0].mxu0
        %v4019 = vadd.f32 0.0, %v4018
        %v4020 = vpop.f32.mrb[0].mxu0
        %v4021 = vpop.f32.mrb[0].mxu0
        %v4022 = vadd.f32 0.0, %v4021
        %v4023 = vpop.f32.mrb[0].mxu0
        %4024 = vmatprep.mubr.bf16.mxu0 0
        %4025 = vmatmul.mubr.bf16.gmra.mrb[0].mxu0 %v3963
        %v4026 = vpop.f32.mrb[0].mxu0
        %v4027 = vadd.f32 0.0, %v4026
        %v4028 = vpop.f32.mrb[0].mxu0
        %v4029 = vpop.f32.mrb[0].mxu0
        %v4030 = vadd.f32 0.0, %v4029
        %v4031 = vpop.f32.mrb[0].mxu0
        %4032 = vdwg.mxu0
        %v4033 = vadd.f32 %v3654, %v4003
        %v4034 = vadd.f32 %v3655, %v4006
        %v4035 = vadd.f32 %v3656, %v4011
        %v4036 = vadd.f32 %v3657, %v4014
        %v4037 = vadd.f32 %v3658, %v4019
        %v4038 = vadd.f32 %v3659, %v4022
        %v4039 = vadd.f32 %v3660, %v4027
        %v4040 = vadd.f32 %v3661, %v4030
        %v4041 = vmul.f32 %v503, %v3781
        %v4042 = vmul.f32 %v504, %v3782
        %v4043 = vmul.f32 %v505, %v3783
        %v4044 = vmul.f32 %v506, %v3784
        %v4045 = vmul.f32 %v507, %v3785
        %v4046 = vmul.f32 %v508, %v3786
        %v4047 = vmul.f32 %v509, %v3787
        %v4048 = vmul.f32 %v510, %v3788
        %v4049 = vadd.f32 %v3875, %v4041
        %v4050 = vadd.f32 %v3876, %v4042
        %v4051 = vadd.f32 %v3877, %v4043
        %v4052 = vadd.f32 %v3878, %v4044
        %v4053 = vadd.f32 %v3879, %v4045
        %v4054 = vadd.f32 %v3880, %v4046
        %v4055 = vadd.f32 %v3881, %v4047
        %v4056 = vadd.f32 %v3882, %v4048
        %v4057 = vmul.f32 %v527, %v4033
        %v4058 = vmul.f32 %v528, %v4034
        %v4059 = vmul.f32 %v529, %v4035
        %v4060 = vmul.f32 %v530, %v4036
        %v4061 = vmul.f32 %v531, %v4037
        %v4062 = vmul.f32 %v532, %v4038
        %v4063 = vmul.f32 %v533, %v4039
        %v4064 = vmul.f32 %v534, %v4040
        %v4065 = vadd.f32 %v4049, %v4057
        %v4066 = vadd.f32 %v4050, %v4058
        %v4067 = vadd.f32 %v4051, %v4059
        %v4068 = vadd.f32 %v4052, %v4060
        %v4069 = vadd.f32 %v4053, %v4061
        %v4070 = vadd.f32 %v4054, %v4062
        %v4071 = vadd.f32 %v4055, %v4063
        %v4072 = vadd.f32 %v4056, %v4064
        %v4073 = vmin.f32 %v4065, 0.0
        %v4074 = vmin.f32 %v4066, 0.0
        %v4075 = vmin.f32 %v4067, 0.0
        %v4076 = vmin.f32 %v4068, 0.0
        %v4077 = vmin.f32 %v4069, 0.0
        %v4078 = vmin.f32 %v4070, 0.0
        %v4079 = vmin.f32 %v4071, 0.0
        %v4080 = vmin.f32 %v4072, 0.0
        %vm4081 = vcmp.gt.f32.partialorder %v4065, 0.0
        %vm4082 = vcmp.gt.f32.partialorder %v4066, 0.0
        %vm4083 = vcmp.gt.f32.partialorder %v4067, 0.0
        %vm4084 = vcmp.gt.f32.partialorder %v4068, 0.0
        %vm4085 = vcmp.gt.f32.partialorder %v4069, 0.0
        %vm4086 = vcmp.gt.f32.partialorder %v4070, 0.0
        %vm4087 = vcmp.gt.f32.partialorder %v4071, 0.0
        %vm4088 = vcmp.gt.f32.partialorder %v4072, 0.0
        %v4089 = vmul.f32 %v4073, 1.442695
        %v4090 = vpow.pop %v4089
        %v4091 = vmul.f32 %v4074, 1.442695
        %v4092 = vpow.pop %v4091
        %v4093 = vmul.f32 %v4075, 1.442695
        %v4094 = vpow.pop %v4093
        %v4095 = vmul.f32 %v4076, 1.442695
        %v4096 = vpow.pop %v4095
        %v4097 = vmul.f32 %v4077, 1.442695
        %v4098 = vpow.pop %v4097
        %v4099 = vmul.f32 %v4078, 1.442695
        %v4100 = vpow.pop %v4099
        %v4101 = vmul.f32 %v4079, 1.442695
        %v4102 = vpow.pop %v4101
        %v4103 = vmul.f32 %v4080, 1.442695
        %v4104 = vpow.pop %v4103
        %v4105 = vsub.f32 %v4090, 1.0
        %v4106 = vsub.f32 %v4092, 1.0
        %v4107 = vsub.f32 %v4094, 1.0
        %v4108 = vsub.f32 %v4096, 1.0
        %v4109 = vsub.f32 %v4098, 1.0
        %v4110 = vsub.f32 %v4100, 1.0
        %v4111 = vsub.f32 %v4102, 1.0
        %v4112 = vsub.f32 %v4104, 1.0
        %v4113 = vsel %vm4081, %v4065, %v4105
        %v4114 = vsel %vm4082, %v4066, %v4106
        %v4115 = vsel %vm4083, %v4067, %v4107
        %v4116 = vsel %vm4084, %v4068, %v4108
        %v4117 = vsel %vm4085, %v4069, %v4109
        %v4118 = vsel %vm4086, %v4070, %v4110
        %v4119 = vsel %vm4087, %v4071, %v4111
        %v4120 = vsel %vm4088, %v4072, %v4112
        %4121 = vst [vmem:[%s378] sm:$0xff] %v4113
        %4122 = vst [vmem:[%s378 + $0x8] sm:$0xff] %v4114
        %4123 = vst [vmem:[%s378 + $0x10] sm:$0xff] %v4115
        %4124 = vst [vmem:[%s378 + $0x18] sm:$0xff] %v4116
        %4125 = vst [vmem:[%s378 + $0x20] sm:$0xff] %v4117
        %4126 = vst [vmem:[%s378 + $0x28] sm:$0xff] %v4118
        %4127 = vst [vmem:[%s378 + $0x30] sm:$0xff] %v4119
        %4128 = vst [vmem:[%s378 + $0x38] sm:$0xff] %v4120
        %s4129 = sand.u32 %s178, 1
        %s4130 = scalar_lea.sflag [#allocation4], %s4129
        %s4131 = sand.u32 %s178, 1
        %s4132 = smul.addr %s4131, 64
        %s4133 = scalar_lea.vmem [#allocation11], %s4132
        // Predicated region
        $region61: #{tpu_custom_call.1} parent=39 // pred_check
          %p4134 = pneg %p188
        $region62: #{tpu_custom_call.1} parent=39 // pred_check_branch
          %4136 = sbr.rel (%p4134) target = $region64
        $region63: #{tpu_custom_call.1} parent=39 // pred_region
          %s4138 = ssub.s32 1024, 1024
          %4139 = vsyncadd %s4130, %s4138
          %s4140 = smul.addr %s31, 8
          %s4141 = smul.addr %s30, 64
          %s4142 = sadd.s32 %s4140, %s4141
          %s4143 = smul.addr %s4142, 128
          %s4144 = scalar_lea.hbm %s5, %s4143
          %s4145 = sshll.u32 %s4133, 4
          %s4146 = int_to_ptr.vmem [resolvable:$true] %s4145
          %4151 = dma.vmem_to_hbm [thread:$0]  %s4146, 1024, %s4144, %s4130, 128, 128, 8
        $region64: #{tpu_custom_call.1} parent=39 // pred_fallthru
          _
      $region40: #{tpu_custom_call.1} parent=5 // pred_fallthru
        _
      %p4152 = scmp.le.s32.totalorder 2, %s21
      // Predicated region
      $region65: #{tpu_custom_call.1} parent=5 // pred_check
        %p4153 = pneg %p4152
      $region66: #{tpu_custom_call.1} parent=5 // pred_check_branch
        %4155 = sbr.rel (%p4153) target = $region68
      $region67: #{tpu_custom_call.1} parent=5 // pred_region
        %s4156 = ssub.s32 %s21, 2
        // Predicated region
        $region69: #{tpu_custom_call.1} parent=67 // pred_check
          %p4157 = pneg %p194
        $region70: #{tpu_custom_call.1} parent=67 // pred_check_branch
          %4159 = sbr.rel (%p4157) target = $region72
        $region71: #{tpu_custom_call.1} parent=67 // pred_region
          %s4160 = sand.u32 %s179, 1
          %s4161 = scalar_lea.sflag [#allocation4], %s4160
          %s4162 = sand.u32 %s179, 1
          %s4163 = smul.addr %s4162, 64
          %s4164 = scalar_lea.vmem [#allocation11], %s4163
          %4165 = dma.done %s4161, 1024
        $region72: #{tpu_custom_call.1} parent=67 // pred_fallthru
          _
      $region68: #{tpu_custom_call.1} parent=5 // pred_fallthru
        _
    $region6: #{tpu_custom_call.1} parent=1 // loop_footer
      %s25 = sadd.s32 1, %s21
    $region7: #{tpu_custom_call.1} parent=1 // loop_footer_branch
      %20 = sbr.rel target = $region3
    $region8: #{tpu_custom_call.1} parent=1 // loop_exit
      _
    %4166 = vsyncpa [#allocation3], 1
    %s4167 = scalar_lea.sflag [#allocation3], 1
    %4168 = vsyncpa %s4167, 1
    %4169 = vsyncpa [#allocation6], 1
    %s4170 = scalar_lea.sflag [#allocation6], 1
    %4171 = vsyncpa %s4170, 1
    %4172 = vsyncpa [#allocation9], 1
    %4173 = vsyncpa [#allocation4], 1
    %s4174 = scalar_lea.sflag [#allocation4], 1
    %4175 = vsyncpa %s4174, 1

</llo_original>
